<compile_context>
chip_gen: v6e
topology: v6e:2x2x1
jax: 0.10.0
libtpu: 0.0.40
codegen_flags: <defaults>
</compile_context>

<pallas_src>
import functools

import jax
import jax.numpy as jnp
import numpy as np
from jax.experimental import pallas as pl
from jax.experimental.pallas import tpu as pltpu

_HIGHEST = jax.lax.Precision.HIGHEST


def _mmh(a, b):
    # f32-accurate matmul for wrapper / reference math (avoids XLA's default
    # bf16 operand demotion on TPU, which would perturb the routing argmax).
    return jnp.dot(a, b, precision=_HIGHEST)


def _gelu_tanh(z):
    # tanh-approximate GELU: tanh goes to the EUP slot (VALU relief); error vs
    # exact erf GELU is far below the bf16 matmul noise floor.
    c = 0.7978845608028654  # sqrt(2/pi)
    return 0.5 * z * (1.0 + jnp.tanh(c * (z + 0.044715 * z * z * z)))


def _sparse_moe_kernel(x_ref, wr_ref, tl_ref, w1_ref, b1_ref, w2_ref, b2_ref,
                       out_ref, probs_ref, acc_ref, *,
                       num_experts, training, expert_skip):
    # x_ref     : (1, C, T)      channel-major tile, T spatial positions on lanes
    # wr_ref    : (E, C)         folded router matrix (already / clamp(temp))
    # tl_ref    : (1, E, 1)      per-batch text contribution to the logits
    # w1_ref    : (E, hid, C)    experts' first Linear  (bf16)
    # b1_ref    : (hid, E)       f32
    # w2_ref    : (E, C, hid)    experts' second Linear (bf16)
    # b2_ref    : (C, E)         f32
    # out_ref   : (1, C, T)
    # probs_ref : (1, E, T)
    # acc_ref   : (C, T) f32 VMEM scratch accumulator
    x = x_ref[0]                                   # (C, T)
    xf = x.astype(jnp.float32)

    # ---- router logits (f32; decides the routing) ----
    logits = jnp.dot(wr_ref[...], xf, preferred_element_type=jnp.float32)  # (E, T)
    logits = logits + tl_ref[0]                                            # + (E, 1)

    if training:
        # dense softmax mixture over experts
        m = jnp.max(logits, axis=0, keepdims=True)
        e = jnp.exp(logits - m)
        gate = e / jnp.sum(e, axis=0, keepdims=True)                       # (E, T)
    else:
        # eval: top-1 one-hot, first max wins (matches torch.topk + scatter_)
        m = jnp.max(logits, axis=0, keepdims=True)
        row = jax.lax.broadcasted_iota(jnp.int32, logits.shape, 0)
        first = jnp.min(jnp.where(logits >= m, row, num_experts),
                        axis=0, keepdims=True)                             # (1, T)
        gate = (row == first).astype(jnp.float32)                          # (E, T)

    # ---- per-expert FFN, gate applied AFTER the second linear layer ----
    xc = x.astype(w1_ref.dtype)                                            # bf16
    acc_ref[...] = jnp.zeros_like(acc_ref)
    for i in range(num_experts):
        g_i = gate[i:i + 1, :]                                             # (1, T)

        def _expert(i=i, g_i=g_i):
            h = jnp.dot(w1_ref[i], xc,
                        preferred_element_type=jnp.float32)                # (hid, T)
            h = _gelu_tanh(h + b1_ref[:, i:i + 1])                         # f32
            yi = jnp.dot(w2_ref[i], h.astype(w2_ref.dtype),
                         preferred_element_type=jnp.float32)               # (C, T)
            acc_ref[...] += g_i * yi

        if training or not expert_skip:
            _expert()
        else:
            # hard top-1 routing: skip experts with no routed token in the tile
            pl.when(jnp.max(g_i) > 0.0)(_expert)

    # bias term: sum_i gate_i * b2_i  ==  b2^T (C,E) @ gate (E,T)
    y = acc_ref[...] + jnp.dot(b2_ref[...], gate,
                               preferred_element_type=jnp.float32)
    out_ref[0] = y.astype(out_ref.dtype)
    probs_ref[0] = gate.astype(probs_ref.dtype)


def _router_kl(params):
    """Analytic KL of the Bayesian router (matches BayesianRouter.kl_divergence)."""
    def term(mu, rho):
        sigma2 = jnp.square(jnp.logaddexp(0.0, rho))        # softplus(rho)^2
        return 0.5 * jnp.sum(jnp.log(1.0 / sigma2) + sigma2 + jnp.square(mu) - 1.0)
    kl = (term(params["feature_mu"], params["feature_rho"])
          + term(params["text_mu"], params["text_rho"])
          + term(params["combined_mu"], params["combined_rho"]))
    return kl * 1e-4


def sparse_moe_forward(x, w, params, *, training=False, hw_tile=None,
                       compute_dtype=jnp.bfloat16):
    """SparseMoE forward.

    x : (B, C, H, W) NCHW, w : (B, text_dim).
    Returns (output (B, C, H, W), kl_div scalar, routing_probs (B*H*W, E)).
    """
    B, C, H, W = x.shape
    HW = H * W
    E, hid, _ = params["w1"].shape
    f32 = jnp.float32

    # ---- explicit VMEM budget + tile selection ----
    try:
        vmem_cap = int(pltpu.get_tpu_info().vmem_capacity_bytes)
    except Exception:                               # pragma: no cover
        vmem_cap = 64 * 1024 * 1024                 # conservative (v7x-sized)
    vmem_limit = min(int(vmem_cap * 0.8), 100 * 1024 * 1024)

    if hw_tile is None:
        # resident weights (assume worst-case double buffering for the budget)
        weight_bytes = 2 * (2 * E * hid * C * 2)    # W1 + W2, bf16
        # per-lane-column bytes of the pipelined tiles + live per-expert temps
        per_lane = ((2 * C * x.dtype.itemsize) * 2   # x + out tiles, 2 buffers
                    + 2 * E * 4                      # probs tile, 2 buffers
                    + C * 4                          # f32 accumulator scratch
                    + 3 * hid * 4                    # live (hid, T) hidden temps
                    + 2 * C * 4)                     # per-expert (C, T) temp
        budget = max(vmem_limit - weight_bytes - (2 << 20), 1 << 20)
        hw_tile = None
        for t in (2048, 1024, 512, 256, 128):
            if HW % t == 0 and t * per_lane <= budget:
                hw_tile = t
                break
        if hw_tile is None:
            hw_tile = 128 if HW % 128 == 0 else HW
    assert HW % hw_tile == 0, "H*W must be divisible by hw_tile"
    n_t = HW // hw_tile

    # ---- fold the router algebra into (E, C) + per-batch (E,) (all f32) ----
    temp = jnp.asarray(params["temperature"], f32).reshape(())
    scale = 1.0 / jnp.maximum(temp, 0.1)                      # torch.clamp(min=0.1)
    comb_top = params["combined_mu"][:128].astype(f32)        # multiplies feature_proj
    comb_bot = params["combined_mu"][128:].astype(f32)        # multiplies text_proj
    wr = _mmh(params["feature_mu"].astype(f32), comb_top).T * scale          # (E, C)
    tl = _mmh(_mmh(w.astype(f32), params["text_mu"].astype(f32)), comb_bot) * scale
    tl = tl.reshape(B, E, 1)

    # ---- expert weights keep their natural layout (no reshape / transpose) ----
    w1f = params["w1"].astype(compute_dtype)                  # (E, hid, C)
    w2f = params["w2"].astype(compute_dtype)                  # (E, C, hid)
    b1f = params["b1"].T.astype(f32)                          # (hid, E) - lane-cheap
    b2t = params["b2"].T.astype(f32)                          # (C, E)

    x_cm = x.reshape(B, C, HW)                    # free reshape, no transpose

    def _run(single_buffer_weights, expert_skip):
        kernel = functools.partial(_sparse_moe_kernel, num_experts=E,
                                   training=training, expert_skip=expert_skip)
        wkw = dict(pipeline_mode=pl.Buffered(1)) if single_buffer_weights else {}

        def _weight_spec(shape, imap):
            try:
                return pl.BlockSpec(shape, imap, **wkw)
            except TypeError:                      # jax without pipeline_mode kwarg
                return pl.BlockSpec(shape, imap)

        grid_spec = pltpu.PrefetchScalarGridSpec(
            num_scalar_prefetch=0,
            grid=(B, n_t),
            in_specs=[
                pl.BlockSpec((1, C, hw_tile), lambda b, t: (b, 0, t)),   # x tile
                _weight_spec((E, C), lambda b, t: (0, 0)),               # folded router W
                pl.BlockSpec((1, E, 1), lambda b, t: (b, 0, 0)),         # per-batch text logit
                _weight_spec((E, hid, C), lambda b, t: (0, 0, 0)),       # W1 (all experts)
                _weight_spec((hid, E), lambda b, t: (0, 0)),             # b1^T
                _weight_spec((E, C, hid), lambda b, t: (0, 0, 0)),       # W2 (all experts)
                _weight_spec((C, E), lambda b, t: (0, 0)),               # b2^T
            ],
            out_specs=(
                pl.BlockSpec((1, C, hw_tile), lambda b, t: (b, 0, t)),
                pl.BlockSpec((1, E, hw_tile), lambda b, t: (b, 0, t)),
            ),
            scratch_shapes=[pltpu.VMEM((C, hw_tile), jnp.float32)],      # accumulator
        )
        return pl.pallas_call(
            kernel,
            out_shape=(jax.ShapeDtypeStruct((B, C, HW), x.dtype),
                       jax.ShapeDtypeStruct((B, E, HW), jnp.float32)),
            grid_spec=grid_spec,
            compiler_params=pltpu.CompilerParams(
                dimension_semantics=("parallel", "parallel"),
                vmem_limit_bytes=vmem_limit),
        )(x_cm, wr, tl, w1f, b1f, w2f, b2t)

    try:
        out_cm, probs_cm = _run(True, True)
        jax.block_until_ready((out_cm, probs_cm))
    except Exception:
        # conservative fallback: default double-buffering, no expert skipping
        out_cm, probs_cm = _run(False, False)

    output = out_cm.reshape(B, C, H, W)
    # TODO(synk): for eval, the argmax index alone (int32) would cut this
    # writeback/transpose by E; kept as full probs to match module semantics.
    routing_probs = jnp.transpose(probs_cm, (0, 2, 1)).reshape(B * HW, E)
    kl = _router_kl(params) if training else jnp.asarray(0.0, f32)
    return output, kl, routing_probs


def _reference_forward(x, w, params, *, training=False):
    """Pure-JAX reference mirroring the PyTorch module (posterior-mean weights)."""
    B, C, H, W = x.shape
    E = params["w1"].shape[0]
    x_tok = jnp.transpose(x, (0, 2, 3, 1)).reshape(-1, C)
    w_tok = jnp.repeat(w, H * W, axis=0)

    fp = _mmh(x_tok, params["feature_mu"])
    tp = _mmh(w_tok, params["text_mu"])
    logits = _mmh(jnp.concatenate([fp, tp], axis=1), params["combined_mu"])
    logits = logits / jnp.maximum(jnp.asarray(params["temperature"], jnp.float32), 0.1)
    probs = jax.nn.softmax(logits, axis=1)
    if not training:
        idx = jnp.argmax(probs, axis=1)
        probs = jax.nn.one_hot(idx, E, dtype=jnp.float32)

    out_tok = jnp.zeros_like(x_tok)
    for i in range(E):
        h = jax.nn.gelu(_mmh(x_tok, params["w1"][i].T) + params["b1"][i],
                        approximate=False)
        y = _mmh(h, params["w2"][i].T) + params["b2"][i]
        out_tok = out_tok + probs[:, i:i + 1] * y
    out = jnp.transpose(out_tok.reshape(B, H, W, C), (0, 3, 1, 2))
    kl = _router_kl(params) if training else jnp.asarray(0.0, jnp.float32)
    return out, kl, probs


if __name__ == "__main__":
    B, C, H, W = 2, 4, 16, 16
    TEXT_DIM = 32
    E = 8
    HID = 4 * C

    key = jax.random.PRNGKey(0)
    keys = jax.random.split(key, 12)

    x = jax.random.normal(keys[0], (B, C, H, W), jnp.float32)
    w = jax.random.normal(keys[1], (B, TEXT_DIM), jnp.float32)

    # Router params (mirrors BayesianRouter.__init__):
    feature_mu = jax.random.normal(keys[2], (C, 128), jnp.float32) * np.sqrt(2.0 / 128.0)
    feature_rho = jnp.full((C, 128), -3.0, jnp.float32)
    text_mu = 0.1 * jax.random.normal(keys[3], (TEXT_DIM, 128), jnp.float32)
    text_rho = -3.0 + 0.1 * jax.random.normal(keys[4], (TEXT_DIM, 128), jnp.float32)
    combined_mu = 0.1 * jax.random.normal(keys[5], (256, E), jnp.float32)
    combined_rho = -3.0 + 0.1 * jax.random.normal(keys[6], (256, E), jnp.float32)
    temperature = jnp.float32(1.0)

    # Expert params (nn.Linear default init: U(-1/sqrt(fan_in), 1/sqrt(fan_in))):
    lim1 = 1.0 / np.sqrt(C)
    lim2 = 1.0 / np.sqrt(HID)
    w1 = jax.random.uniform(keys[7], (E, HID, C), jnp.float32, -lim1, lim1)
    b1 = jax.random.uniform(keys[8], (E, HID), jnp.float32, -lim1, lim1)
    w2 = jax.random.uniform(keys[9], (E, C, HID), jnp.float32, -lim2, lim2)
    b2 = jax.random.uniform(keys[10], (E, C), jnp.float32, -lim2, lim2)

    params = dict(feature_mu=feature_mu, feature_rho=feature_rho,
                  text_mu=text_mu, text_rho=text_rho,
                  combined_mu=combined_mu, combined_rho=combined_rho,
                  temperature=temperature, w1=w1, b1=b1, w2=w2, b2=b2)

    # ---- eval mode (top-1 hard routing, kl = 0); hw_tile auto-derived ----
    out, kl, probs = sparse_moe_forward(x, w, params, training=False)
    out = jax.block_until_ready(out)
    ref_out, ref_kl, ref_probs = _reference_forward(x, w, params, training=False)
    ref_out = jax.block_until_ready(ref_out)

    assert out.shape == (B, C, H, W)
    assert probs.shape == (B * H * W, E)
    np.testing.assert_allclose(np.asarray(probs), np.asarray(ref_probs),
                               rtol=0, atol=1e-6)
    # bf16 expert matmuls + tanh-GELU vs f32 exact reference -> loose tolerance
    np.testing.assert_allclose(np.asarray(out), np.asarray(ref_out),
                               rtol=5e-2, atol=5e-2)

    # ---- training mode (dense softmax mixture over posterior means + KL) ----
    out_t, kl_t, probs_t = sparse_moe_forward(x, w, params, training=True, hw_tile=128)
    out_t = jax.block_until_ready(out_t)
    ref_out_t, ref_kl_t, ref_probs_t = _reference_forward(x, w, params, training=True)
    np.testing.assert_allclose(np.asarray(probs_t), np.asarray(ref_probs_t),
                               rtol=1e-3, atol=1e-4)
    np.testing.assert_allclose(np.asarray(out_t), np.asarray(ref_out_t),
                               rtol=5e-2, atol=5e-2)
    np.testing.assert_allclose(float(kl_t), float(ref_kl_t), rtol=1e-5, atol=1e-6)

    print("KERNEL_OK")
</pallas_src>

<mosaic_0001>
module attributes {stable_mosaic.version = 11 : i64} {
  func.func @_sparse_moe_kernel(%arg0: i32, %arg1: i32, %arg2: memref<1x4x256xf32, #tpu.memory_space<vmem>>, %arg3: memref<8x4xf32, #tpu.memory_space<vmem>>, %arg4: memref<1x8x1xf32, #tpu.memory_space<vmem>>, %arg5: memref<8x16x4xbf16, #tpu.memory_space<vmem>>, %arg6: memref<16x8xf32, #tpu.memory_space<vmem>>, %arg7: memref<8x4x16xbf16, #tpu.memory_space<vmem>>, %arg8: memref<4x8xf32, #tpu.memory_space<vmem>>, %arg9: memref<1x4x256xf32, #tpu.memory_space<vmem>>, %arg10: memref<1x8x256xf32, #tpu.memory_space<vmem>>, %arg11: memref<4x256xf32, #tpu.memory_space<vmem>>) attributes {dimension_semantics = [#tpu.dimension_semantics<parallel>, #tpu.dimension_semantics<parallel>], iteration_bounds = array<i64: 2, 1>, scalar_prefetch = 0 : i64, scratch_operands = 1 : i64, tpu.core_type = #tpu.core_type<tc>, window_params = [{transform_indices = @transform_0, window_bounds = array<i64: 1, 4, 256>}, {pipeline_mode = #tpu.pipeline_mode<synchronous>, transform_indices = @transform_1, window_bounds = array<i64: 8, 4>}, {transform_indices = @transform_2, window_bounds = array<i64: 1, 8, 1>}, {pipeline_mode = #tpu.pipeline_mode<synchronous>, transform_indices = @transform_3, window_bounds = array<i64: 8, 16, 4>}, {pipeline_mode = #tpu.pipeline_mode<synchronous>, transform_indices = @transform_4, window_bounds = array<i64: 16, 8>}, {pipeline_mode = #tpu.pipeline_mode<synchronous>, transform_indices = @transform_5, window_bounds = array<i64: 8, 4, 16>}, {pipeline_mode = #tpu.pipeline_mode<synchronous>, transform_indices = @transform_6, window_bounds = array<i64: 4, 8>}, {transform_indices = @transform_7, window_bounds = array<i64: 1, 4, 256>}, {transform_indices = @transform_8, window_bounds = array<i64: 1, 8, 256>}]} {
    %c0 = arith.constant 0 : index
    %c0_0 = arith.constant 0 : index
    %c0_1 = arith.constant 0 : index
    %0 = vector.load %arg2[%c0, %c0_0, %c0_1] : memref<1x4x256xf32, #tpu.memory_space<vmem>>, vector<1x4x256xf32>
    %1 = vector.shape_cast %0 : vector<1x4x256xf32> to vector<4x256xf32>
    %c0_2 = arith.constant 0 : index
    %c0_3 = arith.constant 0 : index
    %2 = vector.load %arg3[%c0_2, %c0_3] : memref<8x4xf32, #tpu.memory_space<vmem>>, vector<8x4xf32>
    %cst = arith.constant dense<0.000000e+00> : vector<8x256xf32>
    %3 = tpu.matmul %2, %1, %cst {dimension_numbers = #tpu.dot_dimension_numbers<[1], [0], [0], [1], [0, 0, 1, 1], [], []>} : vector<8x4xf32>, vector<4x256xf32>, vector<8x256xf32> -> vector<8x256xf32>
    %c0_4 = arith.constant 0 : index
    %c0_5 = arith.constant 0 : index
    %c0_6 = arith.constant 0 : index
    %4 = vector.load %arg4[%c0_4, %c0_5, %c0_6] : memref<1x8x1xf32, #tpu.memory_space<vmem>>, vector<1x8x1xf32>
    %5 = vector.shape_cast %4 : vector<1x8x1xf32> to vector<8x1xf32>
    %6 = vector.broadcast %5 : vector<8x1xf32> to vector<8x256xf32>
    %7 = arith.addf %3, %6 : vector<8x256xf32>
    %cst_7 = arith.constant dense<0xFF800000> : vector<256xf32>
    %8 = vector.multi_reduction <maximumf>, %7, %cst_7 [0] : vector<8x256xf32> to vector<256xf32>
    %9 = vector.shape_cast %8 : vector<256xf32> to vector<1x256xf32>
    %10 = tpu.iota {dimensions = array<i32: 0>} : vector<8x256xi32>
    %11 = vector.broadcast %9 : vector<1x256xf32> to vector<8x256xf32>
    %12 = arith.cmpf oge, %7, %11 : vector<8x256xf32>
    %c8_i32 = arith.constant 8 : i32
    %13 = vector.broadcast %c8_i32 : i32 to vector<8x256xi32>
    %14 = arith.select %12, %10, %13 : vector<8x256xi1>, vector<8x256xi32>
    %cst_8 = arith.constant dense<2147483647> : vector<256xi32>
    %15 = vector.multi_reduction <minsi>, %14, %cst_8 [0] : vector<8x256xi32> to vector<256xi32>
    %16 = vector.shape_cast %15 : vector<256xi32> to vector<1x256xi32>
    %17 = vector.broadcast %16 : vector<1x256xi32> to vector<8x256xi32>
    %18 = arith.cmpi eq, %10, %17 : vector<8x256xi32>
    %19 = arith.extui %18 : vector<8x256xi1> to vector<8x256xi32>
    %20 = arith.sitofp %19 : vector<8x256xi32> to vector<8x256xf32>
    %21 = arith.truncf %1 : vector<4x256xf32> to vector<4x256xbf16>
    %cst_9 = arith.constant 0.000000e+00 : f32
    %22 = vector.broadcast %cst_9 : f32 to vector<4x256xf32>
    %c0_10 = arith.constant 0 : index
    %c0_11 = arith.constant 0 : index
    %23 = vector.load %arg11[%c0_10, %c0_11] : memref<4x256xf32, #tpu.memory_space<vmem>>, vector<4x256xf32>
    tpu.vector_store %arg11[%c0_10, %c0_11], %22 {strides = array<i32>} : memref<4x256xf32, #tpu.memory_space<vmem>>, vector<4x256xf32>,
    %24 = vector.extract_strided_slice %20 {offsets = [0, 0], sizes = [1, 256], strides = [1, 1]} : vector<8x256xf32> to vector<1x256xf32>
    %25 = vector.shape_cast %24 : vector<1x256xf32> to vector<1x1x256xf32>
    %cst_12 = arith.constant dense<0xFF800000> : vector<1xf32>
    %26 = vector.multi_reduction <maximumf>, %25, %cst_12 [1, 2] : vector<1x1x256xf32> to vector<1xf32>
    %27 = vector.shape_cast %26 : vector<1xf32> to vector<1x1x1xf32>
    %28 = vector.extract %27[0, 0, 0] : f32 from vector<1x1x1xf32>
    %cst_13 = arith.constant 0.000000e+00 : f32
    %29 = arith.cmpf ogt, %28, %cst_13 : f32
    %30 = arith.extui %29 : i1 to i32
    %c0_i32 = arith.constant 0 : i32
    %31 = arith.cmpi ne, %30, %c0_i32 : i32
    scf.if %31 {
      %c0_46 = arith.constant 0 : index
      %c0_47 = arith.constant 0 : index
      %c0_48 = arith.constant 0 : index
      %98 = vector.load %arg5[%c0_46, %c0_47, %c0_48] : memref<8x16x4xbf16, #tpu.memory_space<vmem>>, vector<1x16x4xbf16>
      %99 = vector.shape_cast %98 : vector<1x16x4xbf16> to vector<16x4xbf16>
      %cst_49 = arith.constant dense<0.000000e+00> : vector<16x256xf32>
      %100 = tpu.matmul %99, %21, %cst_49 {dimension_numbers = #tpu.dot_dimension_numbers<[1], [0], [0], [1], [0, 0, 1, 1], [], []>} : vector<16x4xbf16>, vector<4x256xbf16>, vector<16x256xf32> -> vector<16x256xf32>
      %c0_50 = arith.constant 0 : index
      %c0_51 = arith.constant 0 : index
      %101 = vector.load %arg6[%c0_50, %c0_51] : memref<16x8xf32, #tpu.memory_space<vmem>>, vector<16x1xf32>
      %102 = vector.broadcast %101 : vector<16x1xf32> to vector<16x256xf32>
      %103 = arith.addf %100, %102 : vector<16x256xf32>
      %cst_52 = arith.constant 5.000000e-01 : f32
      %104 = vector.broadcast %cst_52 : f32 to vector<16x256xf32>
      %105 = arith.mulf %104, %103 : vector<16x256xf32>
      %cst_53 = arith.constant 4.471500e-02 : f32
      %106 = vector.broadcast %cst_53 : f32 to vector<16x256xf32>
      %107 = arith.mulf %106, %103 : vector<16x256xf32>
      %108 = arith.mulf %107, %103 : vector<16x256xf32>
      %109 = arith.mulf %108, %103 : vector<16x256xf32>
      %110 = arith.addf %103, %109 : vector<16x256xf32>
      %cst_54 = arith.constant 0.797884583 : f32
      %111 = vector.broadcast %cst_54 : f32 to vector<16x256xf32>
      %112 = arith.mulf %111, %110 : vector<16x256xf32>
      %113 = math.tanh %112 : vector<16x256xf32>
      %cst_55 = arith.constant 1.000000e+00 : f32
      %114 = vector.broadcast %cst_55 : f32 to vector<16x256xf32>
      %115 = arith.addf %114, %113 : vector<16x256xf32>
      %116 = arith.mulf %105, %115 : vector<16x256xf32>
      %c0_56 = arith.constant 0 : index
      %c0_57 = arith.constant 0 : index
      %c0_58 = arith.constant 0 : index
      %117 = vector.load %arg7[%c0_56, %c0_57, %c0_58] : memref<8x4x16xbf16, #tpu.memory_space<vmem>>, vector<1x4x16xbf16>
      %118 = vector.shape_cast %117 : vector<1x4x16xbf16> to vector<4x16xbf16>
      %119 = arith.truncf %116 : vector<16x256xf32> to vector<16x256xbf16>
      %cst_59 = arith.constant dense<0.000000e+00> : vector<4x256xf32>
      %120 = tpu.matmul %118, %119, %cst_59 {dimension_numbers = #tpu.dot_dimension_numbers<[1], [0], [0], [1], [0, 0, 1, 1], [], []>} : vector<4x16xbf16>, vector<16x256xbf16>, vector<4x256xf32> -> vector<4x256xf32>
      %c0_60 = arith.constant 0 : index
      %c0_61 = arith.constant 0 : index
      %121 = vector.load %arg11[%c0_60, %c0_61] : memref<4x256xf32, #tpu.memory_space<vmem>>, vector<4x256xf32>
      %122 = vector.broadcast %24 : vector<1x256xf32> to vector<4x256xf32>
      %123 = arith.mulf %122, %120 : vector<4x256xf32>
      %124 = arith.addf %121, %123 : vector<4x256xf32>
      %c0_62 = arith.constant 0 : index
      %c0_63 = arith.constant 0 : index
      %125 = vector.load %arg11[%c0_62, %c0_63] : memref<4x256xf32, #tpu.memory_space<vmem>>, vector<4x256xf32>
      tpu.vector_store %arg11[%c0_62, %c0_63], %124 {strides = array<i32>} : memref<4x256xf32, #tpu.memory_space<vmem>>, vector<4x256xf32>,
    } else {
    }
    %32 = vector.extract_strided_slice %20 {offsets = [1, 0], sizes = [1, 256], strides = [1, 1]} : vector<8x256xf32> to vector<1x256xf32>
    %33 = vector.shape_cast %32 : vector<1x256xf32> to vector<1x1x256xf32>
    %cst_14 = arith.constant dense<0xFF800000> : vector<1xf32>
    %34 = vector.multi_reduction <maximumf>, %33, %cst_14 [1, 2] : vector<1x1x256xf32> to vector<1xf32>
    %35 = vector.shape_cast %34 : vector<1xf32> to vector<1x1x1xf32>
    %36 = vector.extract %35[0, 0, 0] : f32 from vector<1x1x1xf32>
    %cst_15 = arith.constant 0.000000e+00 : f32
    %37 = arith.cmpf ogt, %36, %cst_15 : f32
    %38 = arith.extui %37 : i1 to i32
    %c0_i32_16 = arith.constant 0 : i32
    %39 = arith.cmpi ne, %38, %c0_i32_16 : i32
    scf.if %39 {
      %c1 = arith.constant 1 : index
      %c0_46 = arith.constant 0 : index
      %c0_47 = arith.constant 0 : index
      %98 = vector.load %arg5[%c1, %c0_46, %c0_47] : memref<8x16x4xbf16, #tpu.memory_space<vmem>>, vector<1x16x4xbf16>
      %99 = vector.shape_cast %98 : vector<1x16x4xbf16> to vector<16x4xbf16>
      %cst_48 = arith.constant dense<0.000000e+00> : vector<16x256xf32>
      %100 = tpu.matmul %99, %21, %cst_48 {dimension_numbers = #tpu.dot_dimension_numbers<[1], [0], [0], [1], [0, 0, 1, 1], [], []>} : vector<16x4xbf16>, vector<4x256xbf16>, vector<16x256xf32> -> vector<16x256xf32>
      %c0_49 = arith.constant 0 : index
      %c1_50 = arith.constant 1 : index
      %101 = vector.load %arg6[%c0_49, %c1_50] : memref<16x8xf32, #tpu.memory_space<vmem>>, vector<16x1xf32>
      %102 = vector.broadcast %101 : vector<16x1xf32> to vector<16x256xf32>
      %103 = arith.addf %100, %102 : vector<16x256xf32>
      %cst_51 = arith.constant 5.000000e-01 : f32
      %104 = vector.broadcast %cst_51 : f32 to vector<16x256xf32>
      %105 = arith.mulf %104, %103 : vector<16x256xf32>
      %cst_52 = arith.constant 4.471500e-02 : f32
      %106 = vector.broadcast %cst_52 : f32 to vector<16x256xf32>
      %107 = arith.mulf %106, %103 : vector<16x256xf32>
      %108 = arith.mulf %107, %103 : vector<16x256xf32>
      %109 = arith.mulf %108, %103 : vector<16x256xf32>
      %110 = arith.addf %103, %109 : vector<16x256xf32>
      %cst_53 = arith.constant 0.797884583 : f32
      %111 = vector.broadcast %cst_53 : f32 to vector<16x256xf32>
      %112 = arith.mulf %111, %110 : vector<16x256xf32>
      %113 = math.tanh %112 : vector<16x256xf32>
      %cst_54 = arith.constant 1.000000e+00 : f32
      %114 = vector.broadcast %cst_54 : f32 to vector<16x256xf32>
      %115 = arith.addf %114, %113 : vector<16x256xf32>
      %116 = arith.mulf %105, %115 : vector<16x256xf32>
      %c1_55 = arith.constant 1 : index
      %c0_56 = arith.constant 0 : index
      %c0_57 = arith.constant 0 : index
      %117 = vector.load %arg7[%c1_55, %c0_56, %c0_57] : memref<8x4x16xbf16, #tpu.memory_space<vmem>>, vector<1x4x16xbf16>
      %118 = vector.shape_cast %117 : vector<1x4x16xbf16> to vector<4x16xbf16>
      %119 = arith.truncf %116 : vector<16x256xf32> to vector<16x256xbf16>
      %cst_58 = arith.constant dense<0.000000e+00> : vector<4x256xf32>
      %120 = tpu.matmul %118, %119, %cst_58 {dimension_numbers = #tpu.dot_dimension_numbers<[1], [0], [0], [1], [0, 0, 1, 1], [], []>} : vector<4x16xbf16>, vector<16x256xbf16>, vector<4x256xf32> -> vector<4x256xf32>
      %c0_59 = arith.constant 0 : index
      %c0_60 = arith.constant 0 : index
      %121 = vector.load %arg11[%c0_59, %c0_60] : memref<4x256xf32, #tpu.memory_space<vmem>>, vector<4x256xf32>
      %122 = vector.broadcast %32 : vector<1x256xf32> to vector<4x256xf32>
      %123 = arith.mulf %122, %120 : vector<4x256xf32>
      %124 = arith.addf %121, %123 : vector<4x256xf32>
      %c0_61 = arith.constant 0 : index
      %c0_62 = arith.constant 0 : index
      %125 = vector.load %arg11[%c0_61, %c0_62] : memref<4x256xf32, #tpu.memory_space<vmem>>, vector<4x256xf32>
      tpu.vector_store %arg11[%c0_61, %c0_62], %124 {strides = array<i32>} : memref<4x256xf32, #tpu.memory_space<vmem>>, vector<4x256xf32>,
    } else {
    }
    %40 = vector.extract_strided_slice %20 {offsets = [2, 0], sizes = [1, 256], strides = [1, 1]} : vector<8x256xf32> to vector<1x256xf32>
    %41 = vector.shape_cast %40 : vector<1x256xf32> to vector<1x1x256xf32>
    %cst_17 = arith.constant dense<0xFF800000> : vector<1xf32>
    %42 = vector.multi_reduction <maximumf>, %41, %cst_17 [1, 2] : vector<1x1x256xf32> to vector<1xf32>
    %43 = vector.shape_cast %42 : vector<1xf32> to vector<1x1x1xf32>
    %44 = vector.extract %43[0, 0, 0] : f32 from vector<1x1x1xf32>
    %cst_18 = arith.constant 0.000000e+00 : f32
    %45 = arith.cmpf ogt, %44, %cst_18 : f32
    %46 = arith.extui %45 : i1 to i32
    %c0_i32_19 = arith.constant 0 : i32
    %47 = arith.cmpi ne, %46, %c0_i32_19 : i32
    scf.if %47 {
      %c2 = arith.constant 2 : index
      %c0_46 = arith.constant 0 : index
      %c0_47 = arith.constant 0 : index
      %98 = vector.load %arg5[%c2, %c0_46, %c0_47] : memref<8x16x4xbf16, #tpu.memory_space<vmem>>, vector<1x16x4xbf16>
      %99 = vector.shape_cast %98 : vector<1x16x4xbf16> to vector<16x4xbf16>
      %cst_48 = arith.constant dense<0.000000e+00> : vector<16x256xf32>
      %100 = tpu.matmul %99, %21, %cst_48 {dimension_numbers = #tpu.dot_dimension_numbers<[1], [0], [0], [1], [0, 0, 1, 1], [], []>} : vector<16x4xbf16>, vector<4x256xbf16>, vector<16x256xf32> -> vector<16x256xf32>
      %c0_49 = arith.constant 0 : index
      %c2_50 = arith.constant 2 : index
      %101 = vector.load %arg6[%c0_49, %c2_50] : memref<16x8xf32, #tpu.memory_space<vmem>>, vector<16x1xf32>
      %102 = vector.broadcast %101 : vector<16x1xf32> to vector<16x256xf32>
      %103 = arith.addf %100, %102 : vector<16x256xf32>
      %cst_51 = arith.constant 5.000000e-01 : f32
      %104 = vector.broadcast %cst_51 : f32 to vector<16x256xf32>
      %105 = arith.mulf %104, %103 : vector<16x256xf32>
      %cst_52 = arith.constant 4.471500e-02 : f32
      %106 = vector.broadcast %cst_52 : f32 to vector<16x256xf32>
      %107 = arith.mulf %106, %103 : vector<16x256xf32>
      %108 = arith.mulf %107, %103 : vector<16x256xf32>
      %109 = arith.mulf %108, %103 : vector<16x256xf32>
      %110 = arith.addf %103, %109 : vector<16x256xf32>
      %cst_53 = arith.constant 0.797884583 : f32
      %111 = vector.broadcast %cst_53 : f32 to vector<16x256xf32>
      %112 = arith.mulf %111, %110 : vector<16x256xf32>
      %113 = math.tanh %112 : vector<16x256xf32>
      %cst_54 = arith.constant 1.000000e+00 : f32
      %114 = vector.broadcast %cst_54 : f32 to vector<16x256xf32>
      %115 = arith.addf %114, %113 : vector<16x256xf32>
      %116 = arith.mulf %105, %115 : vector<16x256xf32>
      %c2_55 = arith.constant 2 : index
      %c0_56 = arith.constant 0 : index
      %c0_57 = arith.constant 0 : index
      %117 = vector.load %arg7[%c2_55, %c0_56, %c0_57] : memref<8x4x16xbf16, #tpu.memory_space<vmem>>, vector<1x4x16xbf16>
      %118 = vector.shape_cast %117 : vector<1x4x16xbf16> to vector<4x16xbf16>
      %119 = arith.truncf %116 : vector<16x256xf32> to vector<16x256xbf16>
      %cst_58 = arith.constant dense<0.000000e+00> : vector<4x256xf32>
      %120 = tpu.matmul %118, %119, %cst_58 {dimension_numbers = #tpu.dot_dimension_numbers<[1], [0], [0], [1], [0, 0, 1, 1], [], []>} : vector<4x16xbf16>, vector<16x256xbf16>, vector<4x256xf32> -> vector<4x256xf32>
      %c0_59 = arith.constant 0 : index
      %c0_60 = arith.constant 0 : index
      %121 = vector.load %arg11[%c0_59, %c0_60] : memref<4x256xf32, #tpu.memory_space<vmem>>, vector<4x256xf32>
      %122 = vector.broadcast %40 : vector<1x256xf32> to vector<4x256xf32>
      %123 = arith.mulf %122, %120 : vector<4x256xf32>
      %124 = arith.addf %121, %123 : vector<4x256xf32>
      %c0_61 = arith.constant 0 : index
      %c0_62 = arith.constant 0 : index
      %125 = vector.load %arg11[%c0_61, %c0_62] : memref<4x256xf32, #tpu.memory_space<vmem>>, vector<4x256xf32>
      tpu.vector_store %arg11[%c0_61, %c0_62], %124 {strides = array<i32>} : memref<4x256xf32, #tpu.memory_space<vmem>>, vector<4x256xf32>,
    } else {
    }
    %48 = vector.extract_strided_slice %20 {offsets = [3, 0], sizes = [1, 256], strides = [1, 1]} : vector<8x256xf32> to vector<1x256xf32>
    %49 = vector.shape_cast %48 : vector<1x256xf32> to vector<1x1x256xf32>
    %cst_20 = arith.constant dense<0xFF800000> : vector<1xf32>
    %50 = vector.multi_reduction <maximumf>, %49, %cst_20 [1, 2] : vector<1x1x256xf32> to vector<1xf32>
    %51 = vector.shape_cast %50 : vector<1xf32> to vector<1x1x1xf32>
    %52 = vector.extract %51[0, 0, 0] : f32 from vector<1x1x1xf32>
    %cst_21 = arith.constant 0.000000e+00 : f32
    %53 = arith.cmpf ogt, %52, %cst_21 : f32
    %54 = arith.extui %53 : i1 to i32
    %c0_i32_22 = arith.constant 0 : i32
    %55 = arith.cmpi ne, %54, %c0_i32_22 : i32
    scf.if %55 {
      %c3 = arith.constant 3 : index
      %c0_46 = arith.constant 0 : index
      %c0_47 = arith.constant 0 : index
      %98 = vector.load %arg5[%c3, %c0_46, %c0_47] : memref<8x16x4xbf16, #tpu.memory_space<vmem>>, vector<1x16x4xbf16>
      %99 = vector.shape_cast %98 : vector<1x16x4xbf16> to vector<16x4xbf16>
      %cst_48 = arith.constant dense<0.000000e+00> : vector<16x256xf32>
      %100 = tpu.matmul %99, %21, %cst_48 {dimension_numbers = #tpu.dot_dimension_numbers<[1], [0], [0], [1], [0, 0, 1, 1], [], []>} : vector<16x4xbf16>, vector<4x256xbf16>, vector<16x256xf32> -> vector<16x256xf32>
      %c0_49 = arith.constant 0 : index
      %c3_50 = arith.constant 3 : index
      %101 = vector.load %arg6[%c0_49, %c3_50] : memref<16x8xf32, #tpu.memory_space<vmem>>, vector<16x1xf32>
      %102 = vector.broadcast %101 : vector<16x1xf32> to vector<16x256xf32>
      %103 = arith.addf %100, %102 : vector<16x256xf32>
      %cst_51 = arith.constant 5.000000e-01 : f32
      %104 = vector.broadcast %cst_51 : f32 to vector<16x256xf32>
      %105 = arith.mulf %104, %103 : vector<16x256xf32>
      %cst_52 = arith.constant 4.471500e-02 : f32
      %106 = vector.broadcast %cst_52 : f32 to vector<16x256xf32>
      %107 = arith.mulf %106, %103 : vector<16x256xf32>
      %108 = arith.mulf %107, %103 : vector<16x256xf32>
      %109 = arith.mulf %108, %103 : vector<16x256xf32>
      %110 = arith.addf %103, %109 : vector<16x256xf32>
      %cst_53 = arith.constant 0.797884583 : f32
      %111 = vector.broadcast %cst_53 : f32 to vector<16x256xf32>
      %112 = arith.mulf %111, %110 : vector<16x256xf32>
      %113 = math.tanh %112 : vector<16x256xf32>
      %cst_54 = arith.constant 1.000000e+00 : f32
      %114 = vector.broadcast %cst_54 : f32 to vector<16x256xf32>
      %115 = arith.addf %114, %113 : vector<16x256xf32>
      %116 = arith.mulf %105, %115 : vector<16x256xf32>
      %c3_55 = arith.constant 3 : index
      %c0_56 = arith.constant 0 : index
      %c0_57 = arith.constant 0 : index
      %117 = vector.load %arg7[%c3_55, %c0_56, %c0_57] : memref<8x4x16xbf16, #tpu.memory_space<vmem>>, vector<1x4x16xbf16>
      %118 = vector.shape_cast %117 : vector<1x4x16xbf16> to vector<4x16xbf16>
      %119 = arith.truncf %116 : vector<16x256xf32> to vector<16x256xbf16>
      %cst_58 = arith.constant dense<0.000000e+00> : vector<4x256xf32>
      %120 = tpu.matmul %118, %119, %cst_58 {dimension_numbers = #tpu.dot_dimension_numbers<[1], [0], [0], [1], [0, 0, 1, 1], [], []>} : vector<4x16xbf16>, vector<16x256xbf16>, vector<4x256xf32> -> vector<4x256xf32>
      %c0_59 = arith.constant 0 : index
      %c0_60 = arith.constant 0 : index
      %121 = vector.load %arg11[%c0_59, %c0_60] : memref<4x256xf32, #tpu.memory_space<vmem>>, vector<4x256xf32>
      %122 = vector.broadcast %48 : vector<1x256xf32> to vector<4x256xf32>
      %123 = arith.mulf %122, %120 : vector<4x256xf32>
      %124 = arith.addf %121, %123 : vector<4x256xf32>
      %c0_61 = arith.constant 0 : index
      %c0_62 = arith.constant 0 : index
      %125 = vector.load %arg11[%c0_61, %c0_62] : memref<4x256xf32, #tpu.memory_space<vmem>>, vector<4x256xf32>
      tpu.vector_store %arg11[%c0_61, %c0_62], %124 {strides = array<i32>} : memref<4x256xf32, #tpu.memory_space<vmem>>, vector<4x256xf32>,
    } else {
    }
    %56 = vector.extract_strided_slice %20 {offsets = [4, 0], sizes = [1, 256], strides = [1, 1]} : vector<8x256xf32> to vector<1x256xf32>
    %57 = vector.shape_cast %56 : vector<1x256xf32> to vector<1x1x256xf32>
    %cst_23 = arith.constant dense<0xFF800000> : vector<1xf32>
    %58 = vector.multi_reduction <maximumf>, %57, %cst_23 [1, 2] : vector<1x1x256xf32> to vector<1xf32>
    %59 = vector.shape_cast %58 : vector<1xf32> to vector<1x1x1xf32>
    %60 = vector.extract %59[0, 0, 0] : f32 from vector<1x1x1xf32>
    %cst_24 = arith.constant 0.000000e+00 : f32
    %61 = arith.cmpf ogt, %60, %cst_24 : f32
    %62 = arith.extui %61 : i1 to i32
    %c0_i32_25 = arith.constant 0 : i32
    %63 = arith.cmpi ne, %62, %c0_i32_25 : i32
    scf.if %63 {
      %c4 = arith.constant 4 : index
      %c0_46 = arith.constant 0 : index
      %c0_47 = arith.constant 0 : index
      %98 = vector.load %arg5[%c4, %c0_46, %c0_47] : memref<8x16x4xbf16, #tpu.memory_space<vmem>>, vector<1x16x4xbf16>
      %99 = vector.shape_cast %98 : vector<1x16x4xbf16> to vector<16x4xbf16>
      %cst_48 = arith.constant dense<0.000000e+00> : vector<16x256xf32>
      %100 = tpu.matmul %99, %21, %cst_48 {dimension_numbers = #tpu.dot_dimension_numbers<[1], [0], [0], [1], [0, 0, 1, 1], [], []>} : vector<16x4xbf16>, vector<4x256xbf16>, vector<16x256xf32> -> vector<16x256xf32>
      %c0_49 = arith.constant 0 : index
      %c4_50 = arith.constant 4 : index
      %101 = vector.load %arg6[%c0_49, %c4_50] : memref<16x8xf32, #tpu.memory_space<vmem>>, vector<16x1xf32>
      %102 = vector.broadcast %101 : vector<16x1xf32> to vector<16x256xf32>
      %103 = arith.addf %100, %102 : vector<16x256xf32>
      %cst_51 = arith.constant 5.000000e-01 : f32
      %104 = vector.broadcast %cst_51 : f32 to vector<16x256xf32>
      %105 = arith.mulf %104, %103 : vector<16x256xf32>
      %cst_52 = arith.constant 4.471500e-02 : f32
      %106 = vector.broadcast %cst_52 : f32 to vector<16x256xf32>
      %107 = arith.mulf %106, %103 : vector<16x256xf32>
      %108 = arith.mulf %107, %103 : vector<16x256xf32>
      %109 = arith.mulf %108, %103 : vector<16x256xf32>
      %110 = arith.addf %103, %109 : vector<16x256xf32>
      %cst_53 = arith.constant 0.797884583 : f32
      %111 = vector.broadcast %cst_53 : f32 to vector<16x256xf32>
      %112 = arith.mulf %111, %110 : vector<16x256xf32>
      %113 = math.tanh %112 : vector<16x256xf32>
      %cst_54 = arith.constant 1.000000e+00 : f32
      %114 = vector.broadcast %cst_54 : f32 to vector<16x256xf32>
      %115 = arith.addf %114, %113 : vector<16x256xf32>
      %116 = arith.mulf %105, %115 : vector<16x256xf32>
      %c4_55 = arith.constant 4 : index
      %c0_56 = arith.constant 0 : index
      %c0_57 = arith.constant 0 : index
      %117 = vector.load %arg7[%c4_55, %c0_56, %c0_57] : memref<8x4x16xbf16, #tpu.memory_space<vmem>>, vector<1x4x16xbf16>
      %118 = vector.shape_cast %117 : vector<1x4x16xbf16> to vector<4x16xbf16>
      %119 = arith.truncf %116 : vector<16x256xf32> to vector<16x256xbf16>
      %cst_58 = arith.constant dense<0.000000e+00> : vector<4x256xf32>
      %120 = tpu.matmul %118, %119, %cst_58 {dimension_numbers = #tpu.dot_dimension_numbers<[1], [0], [0], [1], [0, 0, 1, 1], [], []>} : vector<4x16xbf16>, vector<16x256xbf16>, vector<4x256xf32> -> vector<4x256xf32>
      %c0_59 = arith.constant 0 : index
      %c0_60 = arith.constant 0 : index
      %121 = vector.load %arg11[%c0_59, %c0_60] : memref<4x256xf32, #tpu.memory_space<vmem>>, vector<4x256xf32>
      %122 = vector.broadcast %56 : vector<1x256xf32> to vector<4x256xf32>
      %123 = arith.mulf %122, %120 : vector<4x256xf32>
      %124 = arith.addf %121, %123 : vector<4x256xf32>
      %c0_61 = arith.constant 0 : index
      %c0_62 = arith.constant 0 : index
      %125 = vector.load %arg11[%c0_61, %c0_62] : memref<4x256xf32, #tpu.memory_space<vmem>>, vector<4x256xf32>
      tpu.vector_store %arg11[%c0_61, %c0_62], %124 {strides = array<i32>} : memref<4x256xf32, #tpu.memory_space<vmem>>, vector<4x256xf32>,
    } else {
    }
    %64 = vector.extract_strided_slice %20 {offsets = [5, 0], sizes = [1, 256], strides = [1, 1]} : vector<8x256xf32> to vector<1x256xf32>
    %65 = vector.shape_cast %64 : vector<1x256xf32> to vector<1x1x256xf32>
    %cst_26 = arith.constant dense<0xFF800000> : vector<1xf32>
    %66 = vector.multi_reduction <maximumf>, %65, %cst_26 [1, 2] : vector<1x1x256xf32> to vector<1xf32>
    %67 = vector.shape_cast %66 : vector<1xf32> to vector<1x1x1xf32>
    %68 = vector.extract %67[0, 0, 0] : f32 from vector<1x1x1xf32>
    %cst_27 = arith.constant 0.000000e+00 : f32
    %69 = arith.cmpf ogt, %68, %cst_27 : f32
    %70 = arith.extui %69 : i1 to i32
    %c0_i32_28 = arith.constant 0 : i32
    %71 = arith.cmpi ne, %70, %c0_i32_28 : i32
    scf.if %71 {
      %c5 = arith.constant 5 : index
      %c0_46 = arith.constant 0 : index
      %c0_47 = arith.constant 0 : index
      %98 = vector.load %arg5[%c5, %c0_46, %c0_47] : memref<8x16x4xbf16, #tpu.memory_space<vmem>>, vector<1x16x4xbf16>
      %99 = vector.shape_cast %98 : vector<1x16x4xbf16> to vector<16x4xbf16>
      %cst_48 = arith.constant dense<0.000000e+00> : vector<16x256xf32>
      %100 = tpu.matmul %99, %21, %cst_48 {dimension_numbers = #tpu.dot_dimension_numbers<[1], [0], [0], [1], [0, 0, 1, 1], [], []>} : vector<16x4xbf16>, vector<4x256xbf16>, vector<16x256xf32> -> vector<16x256xf32>
      %c0_49 = arith.constant 0 : index
      %c5_50 = arith.constant 5 : index
      %101 = vector.load %arg6[%c0_49, %c5_50] : memref<16x8xf32, #tpu.memory_space<vmem>>, vector<16x1xf32>
      %102 = vector.broadcast %101 : vector<16x1xf32> to vector<16x256xf32>
      %103 = arith.addf %100, %102 : vector<16x256xf32>
      %cst_51 = arith.constant 5.000000e-01 : f32
      %104 = vector.broadcast %cst_51 : f32 to vector<16x256xf32>
      %105 = arith.mulf %104, %103 : vector<16x256xf32>
      %cst_52 = arith.constant 4.471500e-02 : f32
      %106 = vector.broadcast %cst_52 : f32 to vector<16x256xf32>
      %107 = arith.mulf %106, %103 : vector<16x256xf32>
      %108 = arith.mulf %107, %103 : vector<16x256xf32>
      %109 = arith.mulf %108, %103 : vector<16x256xf32>
      %110 = arith.addf %103, %109 : vector<16x256xf32>
      %cst_53 = arith.constant 0.797884583 : f32
      %111 = vector.broadcast %cst_53 : f32 to vector<16x256xf32>
      %112 = arith.mulf %111, %110 : vector<16x256xf32>
      %113 = math.tanh %112 : vector<16x256xf32>
      %cst_54 = arith.constant 1.000000e+00 : f32
      %114 = vector.broadcast %cst_54 : f32 to vector<16x256xf32>
      %115 = arith.addf %114, %113 : vector<16x256xf32>
      %116 = arith.mulf %105, %115 : vector<16x256xf32>
      %c5_55 = arith.constant 5 : index
      %c0_56 = arith.constant 0 : index
      %c0_57 = arith.constant 0 : index
      %117 = vector.load %arg7[%c5_55, %c0_56, %c0_57] : memref<8x4x16xbf16, #tpu.memory_space<vmem>>, vector<1x4x16xbf16>
      %118 = vector.shape_cast %117 : vector<1x4x16xbf16> to vector<4x16xbf16>
      %119 = arith.truncf %116 : vector<16x256xf32> to vector<16x256xbf16>
      %cst_58 = arith.constant dense<0.000000e+00> : vector<4x256xf32>
      %120 = tpu.matmul %118, %119, %cst_58 {dimension_numbers = #tpu.dot_dimension_numbers<[1], [0], [0], [1], [0, 0, 1, 1], [], []>} : vector<4x16xbf16>, vector<16x256xbf16>, vector<4x256xf32> -> vector<4x256xf32>
      %c0_59 = arith.constant 0 : index
      %c0_60 = arith.constant 0 : index
      %121 = vector.load %arg11[%c0_59, %c0_60] : memref<4x256xf32, #tpu.memory_space<vmem>>, vector<4x256xf32>
      %122 = vector.broadcast %64 : vector<1x256xf32> to vector<4x256xf32>
      %123 = arith.mulf %122, %120 : vector<4x256xf32>
      %124 = arith.addf %121, %123 : vector<4x256xf32>
      %c0_61 = arith.constant 0 : index
      %c0_62 = arith.constant 0 : index
      %125 = vector.load %arg11[%c0_61, %c0_62] : memref<4x256xf32, #tpu.memory_space<vmem>>, vector<4x256xf32>
      tpu.vector_store %arg11[%c0_61, %c0_62], %124 {strides = array<i32>} : memref<4x256xf32, #tpu.memory_space<vmem>>, vector<4x256xf32>,
    } else {
    }
    %72 = vector.extract_strided_slice %20 {offsets = [6, 0], sizes = [1, 256], strides = [1, 1]} : vector<8x256xf32> to vector<1x256xf32>
    %73 = vector.shape_cast %72 : vector<1x256xf32> to vector<1x1x256xf32>
    %cst_29 = arith.constant dense<0xFF800000> : vector<1xf32>
    %74 = vector.multi_reduction <maximumf>, %73, %cst_29 [1, 2] : vector<1x1x256xf32> to vector<1xf32>
    %75 = vector.shape_cast %74 : vector<1xf32> to vector<1x1x1xf32>
    %76 = vector.extract %75[0, 0, 0] : f32 from vector<1x1x1xf32>
    %cst_30 = arith.constant 0.000000e+00 : f32
    %77 = arith.cmpf ogt, %76, %cst_30 : f32
    %78 = arith.extui %77 : i1 to i32
    %c0_i32_31 = arith.constant 0 : i32
    %79 = arith.cmpi ne, %78, %c0_i32_31 : i32
    scf.if %79 {
      %c6 = arith.constant 6 : index
      %c0_46 = arith.constant 0 : index
      %c0_47 = arith.constant 0 : index
      %98 = vector.load %arg5[%c6, %c0_46, %c0_47] : memref<8x16x4xbf16, #tpu.memory_space<vmem>>, vector<1x16x4xbf16>
      %99 = vector.shape_cast %98 : vector<1x16x4xbf16> to vector<16x4xbf16>
      %cst_48 = arith.constant dense<0.000000e+00> : vector<16x256xf32>
      %100 = tpu.matmul %99, %21, %cst_48 {dimension_numbers = #tpu.dot_dimension_numbers<[1], [0], [0], [1], [0, 0, 1, 1], [], []>} : vector<16x4xbf16>, vector<4x256xbf16>, vector<16x256xf32> -> vector<16x256xf32>
      %c0_49 = arith.constant 0 : index
      %c6_50 = arith.constant 6 : index
      %101 = vector.load %arg6[%c0_49, %c6_50] : memref<16x8xf32, #tpu.memory_space<vmem>>, vector<16x1xf32>
      %102 = vector.broadcast %101 : vector<16x1xf32> to vector<16x256xf32>
      %103 = arith.addf %100, %102 : vector<16x256xf32>
      %cst_51 = arith.constant 5.000000e-01 : f32
      %104 = vector.broadcast %cst_51 : f32 to vector<16x256xf32>
      %105 = arith.mulf %104, %103 : vector<16x256xf32>
      %cst_52 = arith.constant 4.471500e-02 : f32
      %106 = vector.broadcast %cst_52 : f32 to vector<16x256xf32>
      %107 = arith.mulf %106, %103 : vector<16x256xf32>
      %108 = arith.mulf %107, %103 : vector<16x256xf32>
      %109 = arith.mulf %108, %103 : vector<16x256xf32>
      %110 = arith.addf %103, %109 : vector<16x256xf32>
      %cst_53 = arith.constant 0.797884583 : f32
      %111 = vector.broadcast %cst_53 : f32 to vector<16x256xf32>
      %112 = arith.mulf %111, %110 : vector<16x256xf32>
      %113 = math.tanh %112 : vector<16x256xf32>
      %cst_54 = arith.constant 1.000000e+00 : f32
      %114 = vector.broadcast %cst_54 : f32 to vector<16x256xf32>
      %115 = arith.addf %114, %113 : vector<16x256xf32>
      %116 = arith.mulf %105, %115 : vector<16x256xf32>
      %c6_55 = arith.constant 6 : index
      %c0_56 = arith.constant 0 : index
      %c0_57 = arith.constant 0 : index
      %117 = vector.load %arg7[%c6_55, %c0_56, %c0_57] : memref<8x4x16xbf16, #tpu.memory_space<vmem>>, vector<1x4x16xbf16>
      %118 = vector.shape_cast %117 : vector<1x4x16xbf16> to vector<4x16xbf16>
      %119 = arith.truncf %116 : vector<16x256xf32> to vector<16x256xbf16>
      %cst_58 = arith.constant dense<0.000000e+00> : vector<4x256xf32>
      %120 = tpu.matmul %118, %119, %cst_58 {dimension_numbers = #tpu.dot_dimension_numbers<[1], [0], [0], [1], [0, 0, 1, 1], [], []>} : vector<4x16xbf16>, vector<16x256xbf16>, vector<4x256xf32> -> vector<4x256xf32>
      %c0_59 = arith.constant 0 : index
      %c0_60 = arith.constant 0 : index
      %121 = vector.load %arg11[%c0_59, %c0_60] : memref<4x256xf32, #tpu.memory_space<vmem>>, vector<4x256xf32>
      %122 = vector.broadcast %72 : vector<1x256xf32> to vector<4x256xf32>
      %123 = arith.mulf %122, %120 : vector<4x256xf32>
      %124 = arith.addf %121, %123 : vector<4x256xf32>
      %c0_61 = arith.constant 0 : index
      %c0_62 = arith.constant 0 : index
      %125 = vector.load %arg11[%c0_61, %c0_62] : memref<4x256xf32, #tpu.memory_space<vmem>>, vector<4x256xf32>
      tpu.vector_store %arg11[%c0_61, %c0_62], %124 {strides = array<i32>} : memref<4x256xf32, #tpu.memory_space<vmem>>, vector<4x256xf32>,
    } else {
    }
    %80 = vector.extract_strided_slice %20 {offsets = [7, 0], sizes = [1, 256], strides = [1, 1]} : vector<8x256xf32> to vector<1x256xf32>
    %81 = vector.shape_cast %80 : vector<1x256xf32> to vector<1x1x256xf32>
    %cst_32 = arith.constant dense<0xFF800000> : vector<1xf32>
    %82 = vector.multi_reduction <maximumf>, %81, %cst_32 [1, 2] : vector<1x1x256xf32> to vector<1xf32>
    %83 = vector.shape_cast %82 : vector<1xf32> to vector<1x1x1xf32>
    %84 = vector.extract %83[0, 0, 0] : f32 from vector<1x1x1xf32>
    %cst_33 = arith.constant 0.000000e+00 : f32
    %85 = arith.cmpf ogt, %84, %cst_33 : f32
    %86 = arith.extui %85 : i1 to i32
    %c0_i32_34 = arith.constant 0 : i32
    %87 = arith.cmpi ne, %86, %c0_i32_34 : i32
    scf.if %87 {
      %c7 = arith.constant 7 : index
      %c0_46 = arith.constant 0 : index
      %c0_47 = arith.constant 0 : index
      %98 = vector.load %arg5[%c7, %c0_46, %c0_47] : memref<8x16x4xbf16, #tpu.memory_space<vmem>>, vector<1x16x4xbf16>
      %99 = vector.shape_cast %98 : vector<1x16x4xbf16> to vector<16x4xbf16>
      %cst_48 = arith.constant dense<0.000000e+00> : vector<16x256xf32>
      %100 = tpu.matmul %99, %21, %cst_48 {dimension_numbers = #tpu.dot_dimension_numbers<[1], [0], [0], [1], [0, 0, 1, 1], [], []>} : vector<16x4xbf16>, vector<4x256xbf16>, vector<16x256xf32> -> vector<16x256xf32>
      %c0_49 = arith.constant 0 : index
      %c7_50 = arith.constant 7 : index
      %101 = vector.load %arg6[%c0_49, %c7_50] : memref<16x8xf32, #tpu.memory_space<vmem>>, vector<16x1xf32>
      %102 = vector.broadcast %101 : vector<16x1xf32> to vector<16x256xf32>
      %103 = arith.addf %100, %102 : vector<16x256xf32>
      %cst_51 = arith.constant 5.000000e-01 : f32
      %104 = vector.broadcast %cst_51 : f32 to vector<16x256xf32>
      %105 = arith.mulf %104, %103 : vector<16x256xf32>
      %cst_52 = arith.constant 4.471500e-02 : f32
      %106 = vector.broadcast %cst_52 : f32 to vector<16x256xf32>
      %107 = arith.mulf %106, %103 : vector<16x256xf32>
      %108 = arith.mulf %107, %103 : vector<16x256xf32>
      %109 = arith.mulf %108, %103 : vector<16x256xf32>
      %110 = arith.addf %103, %109 : vector<16x256xf32>
      %cst_53 = arith.constant 0.797884583 : f32
      %111 = vector.broadcast %cst_53 : f32 to vector<16x256xf32>
      %112 = arith.mulf %111, %110 : vector<16x256xf32>
      %113 = math.tanh %112 : vector<16x256xf32>
      %cst_54 = arith.constant 1.000000e+00 : f32
      %114 = vector.broadcast %cst_54 : f32 to vector<16x256xf32>
      %115 = arith.addf %114, %113 : vector<16x256xf32>
      %116 = arith.mulf %105, %115 : vector<16x256xf32>
      %c7_55 = arith.constant 7 : index
      %c0_56 = arith.constant 0 : index
      %c0_57 = arith.constant 0 : index
      %117 = vector.load %arg7[%c7_55, %c0_56, %c0_57] : memref<8x4x16xbf16, #tpu.memory_space<vmem>>, vector<1x4x16xbf16>
      %118 = vector.shape_cast %117 : vector<1x4x16xbf16> to vector<4x16xbf16>
      %119 = arith.truncf %116 : vector<16x256xf32> to vector<16x256xbf16>
      %cst_58 = arith.constant dense<0.000000e+00> : vector<4x256xf32>
      %120 = tpu.matmul %118, %119, %cst_58 {dimension_numbers = #tpu.dot_dimension_numbers<[1], [0], [0], [1], [0, 0, 1, 1], [], []>} : vector<4x16xbf16>, vector<16x256xbf16>, vector<4x256xf32> -> vector<4x256xf32>
      %c0_59 = arith.constant 0 : index
      %c0_60 = arith.constant 0 : index
      %121 = vector.load %arg11[%c0_59, %c0_60] : memref<4x256xf32, #tpu.memory_space<vmem>>, vector<4x256xf32>
      %122 = vector.broadcast %80 : vector<1x256xf32> to vector<4x256xf32>
      %123 = arith.mulf %122, %120 : vector<4x256xf32>
      %124 = arith.addf %121, %123 : vector<4x256xf32>
      %c0_61 = arith.constant 0 : index
      %c0_62 = arith.constant 0 : index
      %125 = vector.load %arg11[%c0_61, %c0_62] : memref<4x256xf32, #tpu.memory_space<vmem>>, vector<4x256xf32>
      tpu.vector_store %arg11[%c0_61, %c0_62], %124 {strides = array<i32>} : memref<4x256xf32, #tpu.memory_space<vmem>>, vector<4x256xf32>,
    } else {
    }
    %c0_35 = arith.constant 0 : index
    %c0_36 = arith.constant 0 : index
    %88 = vector.load %arg11[%c0_35, %c0_36] : memref<4x256xf32, #tpu.memory_space<vmem>>, vector<4x256xf32>
    %c0_37 = arith.constant 0 : index
    %c0_38 = arith.constant 0 : index
    %89 = vector.load %arg8[%c0_37, %c0_38] : memref<4x8xf32, #tpu.memory_space<vmem>>, vector<4x8xf32>
    %cst_39 = arith.constant dense<0.000000e+00> : vector<4x256xf32>
    %90 = tpu.matmul %89, %20, %cst_39 {dimension_numbers = #tpu.dot_dimension_numbers<[1], [0], [0], [1], [0, 0, 1, 1], [], []>} : vector<4x8xf32>, vector<8x256xf32>, vector<4x256xf32> -> vector<4x256xf32>
    %91 = arith.addf %88, %90 : vector<4x256xf32>
    %c0_40 = arith.constant 0 : index
    %c0_41 = arith.constant 0 : index
    %c0_42 = arith.constant 0 : index
    %92 = vector.load %arg9[%c0_40, %c0_41, %c0_42] : memref<1x4x256xf32, #tpu.memory_space<vmem>>, vector<1x4x256xf32>
    %93 = vector.shape_cast %92 : vector<1x4x256xf32> to vector<4x256xf32>
    %94 = vector.shape_cast %91 : vector<4x256xf32> to vector<1x4x256xf32>
    tpu.vector_store %arg9[%c0_40, %c0_41, %c0_42], %94 {strides = array<i32>} : memref<1x4x256xf32, #tpu.memory_space<vmem>>, vector<1x4x256xf32>,
    %c0_43 = arith.constant 0 : index
    %c0_44 = arith.constant 0 : index
    %c0_45 = arith.constant 0 : index
    %95 = vector.load %arg10[%c0_43, %c0_44, %c0_45] : memref<1x8x256xf32, #tpu.memory_space<vmem>>, vector<1x8x256xf32>
    %96 = vector.shape_cast %95 : vector<1x8x256xf32> to vector<8x256xf32>
    %97 = vector.shape_cast %20 : vector<8x256xf32> to vector<1x8x256xf32>
    tpu.vector_store %arg10[%c0_43, %c0_44, %c0_45], %97 {strides = array<i32>} : memref<1x8x256xf32, #tpu.memory_space<vmem>>, vector<1x8x256xf32>,
    return
  }
  func.func @transform_0(%arg0: i32, %arg1: i32) -> (i32, i32, i32) {
    %c0_i32 = arith.constant 0 : i32
    %c0_i32_0 = arith.constant 0 : i32
    return %arg0, %c0_i32, %arg1 : i32, i32, i32
  }
  func.func @transform_1(%arg0: i32, %arg1: i32) -> (i32, i32) {
    %c0_i32 = arith.constant 0 : i32
    %c0_i32_0 = arith.constant 0 : i32
    %c0_i32_1 = arith.constant 0 : i32
    return %c0_i32, %c0_i32_0 : i32, i32
  }
  func.func @transform_2(%arg0: i32, %arg1: i32) -> (i32, i32, i32) {
    %c0_i32 = arith.constant 0 : i32
    %c0_i32_0 = arith.constant 0 : i32
    %c0_i32_1 = arith.constant 0 : i32
    return %arg0, %c0_i32, %c0_i32_0 : i32, i32, i32
  }
  func.func @transform_3(%arg0: i32, %arg1: i32) -> (i32, i32, i32) {
    %c0_i32 = arith.constant 0 : i32
    %c0_i32_0 = arith.constant 0 : i32
    %c0_i32_1 = arith.constant 0 : i32
    %c0_i32_2 = arith.constant 0 : i32
    return %c0_i32, %c0_i32_0, %c0_i32_1 : i32, i32, i32
  }
  func.func @transform_4(%arg0: i32, %arg1: i32) -> (i32, i32) {
    %c0_i32 = arith.constant 0 : i32
    %c0_i32_0 = arith.constant 0 : i32
    %c0_i32_1 = arith.constant 0 : i32
    return %c0_i32, %c0_i32_0 : i32, i32
  }
  func.func @transform_5(%arg0: i32, %arg1: i32) -> (i32, i32, i32) {
    %c0_i32 = arith.constant 0 : i32
    %c0_i32_0 = arith.constant 0 : i32
    %c0_i32_1 = arith.constant 0 : i32
    %c0_i32_2 = arith.constant 0 : i32
    return %c0_i32, %c0_i32_0, %c0_i32_1 : i32, i32, i32
  }
  func.func @transform_6(%arg0: i32, %arg1: i32) -> (i32, i32) {
    %c0_i32 = arith.constant 0 : i32
    %c0_i32_0 = arith.constant 0 : i32
    %c0_i32_1 = arith.constant 0 : i32
    return %c0_i32, %c0_i32_0 : i32, i32
  }
  func.func @transform_7(%arg0: i32, %arg1: i32) -> (i32, i32, i32) {
    %c0_i32 = arith.constant 0 : i32
    %c0_i32_0 = arith.constant 0 : i32
    return %arg0, %c0_i32, %arg1 : i32, i32, i32
  }
  func.func @transform_8(%arg0: i32, %arg1: i32) -> (i32, i32, i32) {
    %c0_i32 = arith.constant 0 : i32
    %c0_i32_0 = arith.constant 0 : i32
    return %arg0, %c0_i32, %arg1 : i32, i32, i32
  }
}

module attributes {stable_mosaic.version = 11 : i64} {
  func.func @_sparse_moe_kernel(%arg0: i32, %arg1: i32, %arg2: memref<1x4x256xf32, #tpu.memory_space<vmem>>, %arg3: memref<8x4xf32, #tpu.memory_space<vmem>>, %arg4: memref<1x8x1xf32, #tpu.memory_space<vmem>>, %arg5: memref<8x16x4xbf16, #tpu.memory_space<vmem>>, %arg6: memref<16x8xf32, #tpu.memory_space<vmem>>, %arg7: memref<8x4x16xbf16, #tpu.memory_space<vmem>>, %arg8: memref<4x8xf32, #tpu.memory_space<vmem>>, %arg9: memref<1x4x256xf32, #tpu.memory_space<vmem>>, %arg10: memref<1x8x256xf32, #tpu.memory_space<vmem>>, %arg11: memref<4x256xf32, #tpu.memory_space<vmem>>) attributes {dimension_semantics = [#tpu.dimension_semantics<parallel>, #tpu.dimension_semantics<parallel>], iteration_bounds = array<i64: 2, 1>, scalar_prefetch = 0 : i64, scratch_operands = 1 : i64, tpu.core_type = #tpu.core_type<tc>, window_params = [{transform_indices = @transform_0, window_bounds = array<i64: 1, 4, 256>}, {pipeline_mode = #tpu.pipeline_mode<synchronous>, transform_indices = @transform_1, window_bounds = array<i64: 8, 4>}, {transform_indices = @transform_2, window_bounds = array<i64: 1, 8, 1>}, {pipeline_mode = #tpu.pipeline_mode<synchronous>, transform_indices = @transform_3, window_bounds = array<i64: 8, 16, 4>}, {pipeline_mode = #tpu.pipeline_mode<synchronous>, transform_indices = @transform_4, window_bounds = array<i64: 16, 8>}, {pipeline_mode = #tpu.pipeline_mode<synchronous>, transform_indices = @transform_5, window_bounds = array<i64: 8, 4, 16>}, {pipeline_mode = #tpu.pipeline_mode<synchronous>, transform_indices = @transform_6, window_bounds = array<i64: 4, 8>}, {transform_indices = @transform_7, window_bounds = array<i64: 1, 4, 256>}, {transform_indices = @transform_8, window_bounds = array<i64: 1, 8, 256>}]} {
    %c0 = arith.constant 0 : index
    %c0_0 = arith.constant 0 : index
    %c0_1 = arith.constant 0 : index
    %0 = vector.load %arg2[%c0, %c0_0, %c0_1] : memref<1x4x256xf32, #tpu.memory_space<vmem>>, vector<1x4x256xf32>
    %1 = vector.shape_cast %0 : vector<1x4x256xf32> to vector<4x256xf32>
    %c0_2 = arith.constant 0 : index
    %c0_3 = arith.constant 0 : index
    %2 = vector.load %arg3[%c0_2, %c0_3] : memref<8x4xf32, #tpu.memory_space<vmem>>, vector<8x4xf32>
    %cst = arith.constant dense<0.000000e+00> : vector<8x256xf32>
    %3 = tpu.matmul %2, %1, %cst {dimension_numbers = #tpu.dot_dimension_numbers<[1], [0], [0], [1], [0, 0, 1, 1], [], []>} : vector<8x4xf32>, vector<4x256xf32>, vector<8x256xf32> -> vector<8x256xf32>
    %c0_4 = arith.constant 0 : index
    %c0_5 = arith.constant 0 : index
    %c0_6 = arith.constant 0 : index
    %4 = vector.load %arg4[%c0_4, %c0_5, %c0_6] : memref<1x8x1xf32, #tpu.memory_space<vmem>>, vector<1x8x1xf32>
    %5 = vector.shape_cast %4 : vector<1x8x1xf32> to vector<8x1xf32>
    %6 = vector.broadcast %5 : vector<8x1xf32> to vector<8x256xf32>
    %7 = arith.addf %3, %6 : vector<8x256xf32>
    %cst_7 = arith.constant dense<0xFF800000> : vector<256xf32>
    %8 = vector.multi_reduction <maximumf>, %7, %cst_7 [0] : vector<8x256xf32> to vector<256xf32>
    %9 = vector.shape_cast %8 : vector<256xf32> to vector<1x256xf32>
    %10 = tpu.iota {dimensions = array<i32: 0>} : vector<8x256xi32>
    %11 = vector.broadcast %9 : vector<1x256xf32> to vector<8x256xf32>
    %12 = arith.cmpf oge, %7, %11 : vector<8x256xf32>
    %c8_i32 = arith.constant 8 : i32
    %13 = vector.broadcast %c8_i32 : i32 to vector<8x256xi32>
    %14 = arith.select %12, %10, %13 : vector<8x256xi1>, vector<8x256xi32>
    %cst_8 = arith.constant dense<2147483647> : vector<256xi32>
    %15 = vector.multi_reduction <minsi>, %14, %cst_8 [0] : vector<8x256xi32> to vector<256xi32>
    %16 = vector.shape_cast %15 : vector<256xi32> to vector<1x256xi32>
    %17 = vector.broadcast %16 : vector<1x256xi32> to vector<8x256xi32>
    %18 = arith.cmpi eq, %10, %17 : vector<8x256xi32>
    %19 = arith.extui %18 : vector<8x256xi1> to vector<8x256xi32>
    %20 = arith.sitofp %19 : vector<8x256xi32> to vector<8x256xf32>
    %21 = arith.truncf %1 : vector<4x256xf32> to vector<4x256xbf16>
    %cst_9 = arith.constant 0.000000e+00 : f32
    %22 = vector.broadcast %cst_9 : f32 to vector<4x256xf32>
    %c0_10 = arith.constant 0 : index
    %c0_11 = arith.constant 0 : index
    %23 = vector.load %arg11[%c0_10, %c0_11] : memref<4x256xf32, #tpu.memory_space<vmem>>, vector<4x256xf32>
    tpu.vector_store %arg11[%c0_10, %c0_11], %22 {strides = array<i32>} : memref<4x256xf32, #tpu.memory_space<vmem>>, vector<4x256xf32>,
    %24 = vector.extract_strided_slice %20 {offsets = [0, 0], sizes = [1, 256], strides = [1, 1]} : vector<8x256xf32> to vector<1x256xf32>
    %c0_12 = arith.constant 0 : index
    %c0_13 = arith.constant 0 : index
    %c0_14 = arith.constant 0 : index
    %25 = vector.load %arg5[%c0_12, %c0_13, %c0_14] : memref<8x16x4xbf16, #tpu.memory_space<vmem>>, vector<1x16x4xbf16>
    %26 = vector.shape_cast %25 : vector<1x16x4xbf16> to vector<16x4xbf16>
    %cst_15 = arith.constant dense<0.000000e+00> : vector<16x256xf32>
    %27 = tpu.matmul %26, %21, %cst_15 {dimension_numbers = #tpu.dot_dimension_numbers<[1], [0], [0], [1], [0, 0, 1, 1], [], []>} : vector<16x4xbf16>, vector<4x256xbf16>, vector<16x256xf32> -> vector<16x256xf32>
    %c0_16 = arith.constant 0 : index
    %c0_17 = arith.constant 0 : index
    %28 = vector.load %arg6[%c0_16, %c0_17] : memref<16x8xf32, #tpu.memory_space<vmem>>, vector<16x1xf32>
    %29 = vector.broadcast %28 : vector<16x1xf32> to vector<16x256xf32>
    %30 = arith.addf %27, %29 : vector<16x256xf32>
    %cst_18 = arith.constant 5.000000e-01 : f32
    %31 = vector.broadcast %cst_18 : f32 to vector<16x256xf32>
    %32 = arith.mulf %31, %30 : vector<16x256xf32>
    %cst_19 = arith.constant 4.471500e-02 : f32
    %33 = vector.broadcast %cst_19 : f32 to vector<16x256xf32>
    %34 = arith.mulf %33, %30 : vector<16x256xf32>
    %35 = arith.mulf %34, %30 : vector<16x256xf32>
    %36 = arith.mulf %35, %30 : vector<16x256xf32>
    %37 = arith.addf %30, %36 : vector<16x256xf32>
    %cst_20 = arith.constant 0.797884583 : f32
    %38 = vector.broadcast %cst_20 : f32 to vector<16x256xf32>
    %39 = arith.mulf %38, %37 : vector<16x256xf32>
    %40 = math.tanh %39 : vector<16x256xf32>
    %cst_21 = arith.constant 1.000000e+00 : f32
    %41 = vector.broadcast %cst_21 : f32 to vector<16x256xf32>
    %42 = arith.addf %41, %40 : vector<16x256xf32>
    %43 = arith.mulf %32, %42 : vector<16x256xf32>
    %c0_22 = arith.constant 0 : index
    %c0_23 = arith.constant 0 : index
    %c0_24 = arith.constant 0 : index
    %44 = vector.load %arg7[%c0_22, %c0_23, %c0_24] : memref<8x4x16xbf16, #tpu.memory_space<vmem>>, vector<1x4x16xbf16>
    %45 = vector.shape_cast %44 : vector<1x4x16xbf16> to vector<4x16xbf16>
    %46 = arith.truncf %43 : vector<16x256xf32> to vector<16x256xbf16>
    %cst_25 = arith.constant dense<0.000000e+00> : vector<4x256xf32>
    %47 = tpu.matmul %45, %46, %cst_25 {dimension_numbers = #tpu.dot_dimension_numbers<[1], [0], [0], [1], [0, 0, 1, 1], [], []>} : vector<4x16xbf16>, vector<16x256xbf16>, vector<4x256xf32> -> vector<4x256xf32>
    %c0_26 = arith.constant 0 : index
    %c0_27 = arith.constant 0 : index
    %48 = vector.load %arg11[%c0_26, %c0_27] : memref<4x256xf32, #tpu.memory_space<vmem>>, vector<4x256xf32>
    %49 = vector.broadcast %24 : vector<1x256xf32> to vector<4x256xf32>
    %50 = arith.mulf %49, %47 : vector<4x256xf32>
    %51 = arith.addf %48, %50 : vector<4x256xf32>
    %c0_28 = arith.constant 0 : index
    %c0_29 = arith.constant 0 : index
    %52 = vector.load %arg11[%c0_28, %c0_29] : memref<4x256xf32, #tpu.memory_space<vmem>>, vector<4x256xf32>
    tpu.vector_store %arg11[%c0_28, %c0_29], %51 {strides = array<i32>} : memref<4x256xf32, #tpu.memory_space<vmem>>, vector<4x256xf32>,
    %53 = vector.extract_strided_slice %20 {offsets = [1, 0], sizes = [1, 256], strides = [1, 1]} : vector<8x256xf32> to vector<1x256xf32>
    %c1 = arith.constant 1 : index
    %c0_30 = arith.constant 0 : index
    %c0_31 = arith.constant 0 : index
    %54 = vector.load %arg5[%c1, %c0_30, %c0_31] : memref<8x16x4xbf16, #tpu.memory_space<vmem>>, vector<1x16x4xbf16>
    %55 = vector.shape_cast %54 : vector<1x16x4xbf16> to vector<16x4xbf16>
    %cst_32 = arith.constant dense<0.000000e+00> : vector<16x256xf32>
    %56 = tpu.matmul %55, %21, %cst_32 {dimension_numbers = #tpu.dot_dimension_numbers<[1], [0], [0], [1], [0, 0, 1, 1], [], []>} : vector<16x4xbf16>, vector<4x256xbf16>, vector<16x256xf32> -> vector<16x256xf32>
    %c0_33 = arith.constant 0 : index
    %c1_34 = arith.constant 1 : index
    %57 = vector.load %arg6[%c0_33, %c1_34] : memref<16x8xf32, #tpu.memory_space<vmem>>, vector<16x1xf32>
    %58 = vector.broadcast %57 : vector<16x1xf32> to vector<16x256xf32>
    %59 = arith.addf %56, %58 : vector<16x256xf32>
    %cst_35 = arith.constant 5.000000e-01 : f32
    %60 = vector.broadcast %cst_35 : f32 to vector<16x256xf32>
    %61 = arith.mulf %60, %59 : vector<16x256xf32>
    %cst_36 = arith.constant 4.471500e-02 : f32
    %62 = vector.broadcast %cst_36 : f32 to vector<16x256xf32>
    %63 = arith.mulf %62, %59 : vector<16x256xf32>
    %64 = arith.mulf %63, %59 : vector<16x256xf32>
    %65 = arith.mulf %64, %59 : vector<16x256xf32>
    %66 = arith.addf %59, %65 : vector<16x256xf32>
    %cst_37 = arith.constant 0.797884583 : f32
    %67 = vector.broadcast %cst_37 : f32 to vector<16x256xf32>
    %68 = arith.mulf %67, %66 : vector<16x256xf32>
    %69 = math.tanh %68 : vector<16x256xf32>
    %cst_38 = arith.constant 1.000000e+00 : f32
    %70 = vector.broadcast %cst_38 : f32 to vector<16x256xf32>
    %71 = arith.addf %70, %69 : vector<16x256xf32>
    %72 = arith.mulf %61, %71 : vector<16x256xf32>
    %c1_39 = arith.constant 1 : index
    %c0_40 = arith.constant 0 : index
    %c0_41 = arith.constant 0 : index
    %73 = vector.load %arg7[%c1_39, %c0_40, %c0_41] : memref<8x4x16xbf16, #tpu.memory_space<vmem>>, vector<1x4x16xbf16>
    %74 = vector.shape_cast %73 : vector<1x4x16xbf16> to vector<4x16xbf16>
    %75 = arith.truncf %72 : vector<16x256xf32> to vector<16x256xbf16>
    %cst_42 = arith.constant dense<0.000000e+00> : vector<4x256xf32>
    %76 = tpu.matmul %74, %75, %cst_42 {dimension_numbers = #tpu.dot_dimension_numbers<[1], [0], [0], [1], [0, 0, 1, 1], [], []>} : vector<4x16xbf16>, vector<16x256xbf16>, vector<4x256xf32> -> vector<4x256xf32>
    %c0_43 = arith.constant 0 : index
    %c0_44 = arith.constant 0 : index
    %77 = vector.load %arg11[%c0_43, %c0_44] : memref<4x256xf32, #tpu.memory_space<vmem>>, vector<4x256xf32>
    %78 = vector.broadcast %53 : vector<1x256xf32> to vector<4x256xf32>
    %79 = arith.mulf %78, %76 : vector<4x256xf32>
    %80 = arith.addf %77, %79 : vector<4x256xf32>
    %c0_45 = arith.constant 0 : index
    %c0_46 = arith.constant 0 : index
    %81 = vector.load %arg11[%c0_45, %c0_46] : memref<4x256xf32, #tpu.memory_space<vmem>>, vector<4x256xf32>
    tpu.vector_store %arg11[%c0_45, %c0_46], %80 {strides = array<i32>} : memref<4x256xf32, #tpu.memory_space<vmem>>, vector<4x256xf32>,
    %82 = vector.extract_strided_slice %20 {offsets = [2, 0], sizes = [1, 256], strides = [1, 1]} : vector<8x256xf32> to vector<1x256xf32>
    %c2 = arith.constant 2 : index
    %c0_47 = arith.constant 0 : index
    %c0_48 = arith.constant 0 : index
    %83 = vector.load %arg5[%c2, %c0_47, %c0_48] : memref<8x16x4xbf16, #tpu.memory_space<vmem>>, vector<1x16x4xbf16>
    %84 = vector.shape_cast %83 : vector<1x16x4xbf16> to vector<16x4xbf16>
    %cst_49 = arith.constant dense<0.000000e+00> : vector<16x256xf32>
    %85 = tpu.matmul %84, %21, %cst_49 {dimension_numbers = #tpu.dot_dimension_numbers<[1], [0], [0], [1], [0, 0, 1, 1], [], []>} : vector<16x4xbf16>, vector<4x256xbf16>, vector<16x256xf32> -> vector<16x256xf32>
    %c0_50 = arith.constant 0 : index
    %c2_51 = arith.constant 2 : index
    %86 = vector.load %arg6[%c0_50, %c2_51] : memref<16x8xf32, #tpu.memory_space<vmem>>, vector<16x1xf32>
    %87 = vector.broadcast %86 : vector<16x1xf32> to vector<16x256xf32>
    %88 = arith.addf %85, %87 : vector<16x256xf32>
    %cst_52 = arith.constant 5.000000e-01 : f32
    %89 = vector.broadcast %cst_52 : f32 to vector<16x256xf32>
    %90 = arith.mulf %89, %88 : vector<16x256xf32>
    %cst_53 = arith.constant 4.471500e-02 : f32
    %91 = vector.broadcast %cst_53 : f32 to vector<16x256xf32>
    %92 = arith.mulf %91, %88 : vector<16x256xf32>
    %93 = arith.mulf %92, %88 : vector<16x256xf32>
    %94 = arith.mulf %93, %88 : vector<16x256xf32>
    %95 = arith.addf %88, %94 : vector<16x256xf32>
    %cst_54 = arith.constant 0.797884583 : f32
    %96 = vector.broadcast %cst_54 : f32 to vector<16x256xf32>
    %97 = arith.mulf %96, %95 : vector<16x256xf32>
    %98 = math.tanh %97 : vector<16x256xf32>
    %cst_55 = arith.constant 1.000000e+00 : f32
    %99 = vector.broadcast %cst_55 : f32 to vector<16x256xf32>
    %100 = arith.addf %99, %98 : vector<16x256xf32>
    %101 = arith.mulf %90, %100 : vector<16x256xf32>
    %c2_56 = arith.constant 2 : index
    %c0_57 = arith.constant 0 : index
    %c0_58 = arith.constant 0 : index
    %102 = vector.load %arg7[%c2_56, %c0_57, %c0_58] : memref<8x4x16xbf16, #tpu.memory_space<vmem>>, vector<1x4x16xbf16>
    %103 = vector.shape_cast %102 : vector<1x4x16xbf16> to vector<4x16xbf16>
    %104 = arith.truncf %101 : vector<16x256xf32> to vector<16x256xbf16>
    %cst_59 = arith.constant dense<0.000000e+00> : vector<4x256xf32>
    %105 = tpu.matmul %103, %104, %cst_59 {dimension_numbers = #tpu.dot_dimension_numbers<[1], [0], [0], [1], [0, 0, 1, 1], [], []>} : vector<4x16xbf16>, vector<16x256xbf16>, vector<4x256xf32> -> vector<4x256xf32>
    %c0_60 = arith.constant 0 : index
    %c0_61 = arith.constant 0 : index
    %106 = vector.load %arg11[%c0_60, %c0_61] : memref<4x256xf32, #tpu.memory_space<vmem>>, vector<4x256xf32>
    %107 = vector.broadcast %82 : vector<1x256xf32> to vector<4x256xf32>
    %108 = arith.mulf %107, %105 : vector<4x256xf32>
    %109 = arith.addf %106, %108 : vector<4x256xf32>
    %c0_62 = arith.constant 0 : index
    %c0_63 = arith.constant 0 : index
    %110 = vector.load %arg11[%c0_62, %c0_63] : memref<4x256xf32, #tpu.memory_space<vmem>>, vector<4x256xf32>
    tpu.vector_store %arg11[%c0_62, %c0_63], %109 {strides = array<i32>} : memref<4x256xf32, #tpu.memory_space<vmem>>, vector<4x256xf32>,
    %111 = vector.extract_strided_slice %20 {offsets = [3, 0], sizes = [1, 256], strides = [1, 1]} : vector<8x256xf32> to vector<1x256xf32>
    %c3 = arith.constant 3 : index
    %c0_64 = arith.constant 0 : index
    %c0_65 = arith.constant 0 : index
    %112 = vector.load %arg5[%c3, %c0_64, %c0_65] : memref<8x16x4xbf16, #tpu.memory_space<vmem>>, vector<1x16x4xbf16>
    %113 = vector.shape_cast %112 : vector<1x16x4xbf16> to vector<16x4xbf16>
    %cst_66 = arith.constant dense<0.000000e+00> : vector<16x256xf32>
    %114 = tpu.matmul %113, %21, %cst_66 {dimension_numbers = #tpu.dot_dimension_numbers<[1], [0], [0], [1], [0, 0, 1, 1], [], []>} : vector<16x4xbf16>, vector<4x256xbf16>, vector<16x256xf32> -> vector<16x256xf32>
    %c0_67 = arith.constant 0 : index
    %c3_68 = arith.constant 3 : index
    %115 = vector.load %arg6[%c0_67, %c3_68] : memref<16x8xf32, #tpu.memory_space<vmem>>, vector<16x1xf32>
    %116 = vector.broadcast %115 : vector<16x1xf32> to vector<16x256xf32>
    %117 = arith.addf %114, %116 : vector<16x256xf32>
    %cst_69 = arith.constant 5.000000e-01 : f32
    %118 = vector.broadcast %cst_69 : f32 to vector<16x256xf32>
    %119 = arith.mulf %118, %117 : vector<16x256xf32>
    %cst_70 = arith.constant 4.471500e-02 : f32
    %120 = vector.broadcast %cst_70 : f32 to vector<16x256xf32>
    %121 = arith.mulf %120, %117 : vector<16x256xf32>
    %122 = arith.mulf %121, %117 : vector<16x256xf32>
    %123 = arith.mulf %122, %117 : vector<16x256xf32>
    %124 = arith.addf %117, %123 : vector<16x256xf32>
    %cst_71 = arith.constant 0.797884583 : f32
    %125 = vector.broadcast %cst_71 : f32 to vector<16x256xf32>
    %126 = arith.mulf %125, %124 : vector<16x256xf32>
    %127 = math.tanh %126 : vector<16x256xf32>
    %cst_72 = arith.constant 1.000000e+00 : f32
    %128 = vector.broadcast %cst_72 : f32 to vector<16x256xf32>
    %129 = arith.addf %128, %127 : vector<16x256xf32>
    %130 = arith.mulf %119, %129 : vector<16x256xf32>
    %c3_73 = arith.constant 3 : index
    %c0_74 = arith.constant 0 : index
    %c0_75 = arith.constant 0 : index
    %131 = vector.load %arg7[%c3_73, %c0_74, %c0_75] : memref<8x4x16xbf16, #tpu.memory_space<vmem>>, vector<1x4x16xbf16>
    %132 = vector.shape_cast %131 : vector<1x4x16xbf16> to vector<4x16xbf16>
    %133 = arith.truncf %130 : vector<16x256xf32> to vector<16x256xbf16>
    %cst_76 = arith.constant dense<0.000000e+00> : vector<4x256xf32>
    %134 = tpu.matmul %132, %133, %cst_76 {dimension_numbers = #tpu.dot_dimension_numbers<[1], [0], [0], [1], [0, 0, 1, 1], [], []>} : vector<4x16xbf16>, vector<16x256xbf16>, vector<4x256xf32> -> vector<4x256xf32>
    %c0_77 = arith.constant 0 : index
    %c0_78 = arith.constant 0 : index
    %135 = vector.load %arg11[%c0_77, %c0_78] : memref<4x256xf32, #tpu.memory_space<vmem>>, vector<4x256xf32>
    %136 = vector.broadcast %111 : vector<1x256xf32> to vector<4x256xf32>
    %137 = arith.mulf %136, %134 : vector<4x256xf32>
    %138 = arith.addf %135, %137 : vector<4x256xf32>
    %c0_79 = arith.constant 0 : index
    %c0_80 = arith.constant 0 : index
    %139 = vector.load %arg11[%c0_79, %c0_80] : memref<4x256xf32, #tpu.memory_space<vmem>>, vector<4x256xf32>
    tpu.vector_store %arg11[%c0_79, %c0_80], %138 {strides = array<i32>} : memref<4x256xf32, #tpu.memory_space<vmem>>, vector<4x256xf32>,
    %140 = vector.extract_strided_slice %20 {offsets = [4, 0], sizes = [1, 256], strides = [1, 1]} : vector<8x256xf32> to vector<1x256xf32>
    %c4 = arith.constant 4 : index
    %c0_81 = arith.constant 0 : index
    %c0_82 = arith.constant 0 : index
    %141 = vector.load %arg5[%c4, %c0_81, %c0_82] : memref<8x16x4xbf16, #tpu.memory_space<vmem>>, vector<1x16x4xbf16>
    %142 = vector.shape_cast %141 : vector<1x16x4xbf16> to vector<16x4xbf16>
    %cst_83 = arith.constant dense<0.000000e+00> : vector<16x256xf32>
    %143 = tpu.matmul %142, %21, %cst_83 {dimension_numbers = #tpu.dot_dimension_numbers<[1], [0], [0], [1], [0, 0, 1, 1], [], []>} : vector<16x4xbf16>, vector<4x256xbf16>, vector<16x256xf32> -> vector<16x256xf32>
    %c0_84 = arith.constant 0 : index
    %c4_85 = arith.constant 4 : index
    %144 = vector.load %arg6[%c0_84, %c4_85] : memref<16x8xf32, #tpu.memory_space<vmem>>, vector<16x1xf32>
    %145 = vector.broadcast %144 : vector<16x1xf32> to vector<16x256xf32>
    %146 = arith.addf %143, %145 : vector<16x256xf32>
    %cst_86 = arith.constant 5.000000e-01 : f32
    %147 = vector.broadcast %cst_86 : f32 to vector<16x256xf32>
    %148 = arith.mulf %147, %146 : vector<16x256xf32>
    %cst_87 = arith.constant 4.471500e-02 : f32
    %149 = vector.broadcast %cst_87 : f32 to vector<16x256xf32>
    %150 = arith.mulf %149, %146 : vector<16x256xf32>
    %151 = arith.mulf %150, %146 : vector<16x256xf32>
    %152 = arith.mulf %151, %146 : vector<16x256xf32>
    %153 = arith.addf %146, %152 : vector<16x256xf32>
    %cst_88 = arith.constant 0.797884583 : f32
    %154 = vector.broadcast %cst_88 : f32 to vector<16x256xf32>
    %155 = arith.mulf %154, %153 : vector<16x256xf32>
    %156 = math.tanh %155 : vector<16x256xf32>
    %cst_89 = arith.constant 1.000000e+00 : f32
    %157 = vector.broadcast %cst_89 : f32 to vector<16x256xf32>
    %158 = arith.addf %157, %156 : vector<16x256xf32>
    %159 = arith.mulf %148, %158 : vector<16x256xf32>
    %c4_90 = arith.constant 4 : index
    %c0_91 = arith.constant 0 : index
    %c0_92 = arith.constant 0 : index
    %160 = vector.load %arg7[%c4_90, %c0_91, %c0_92] : memref<8x4x16xbf16, #tpu.memory_space<vmem>>, vector<1x4x16xbf16>
    %161 = vector.shape_cast %160 : vector<1x4x16xbf16> to vector<4x16xbf16>
    %162 = arith.truncf %159 : vector<16x256xf32> to vector<16x256xbf16>
    %cst_93 = arith.constant dense<0.000000e+00> : vector<4x256xf32>
    %163 = tpu.matmul %161, %162, %cst_93 {dimension_numbers = #tpu.dot_dimension_numbers<[1], [0], [0], [1], [0, 0, 1, 1], [], []>} : vector<4x16xbf16>, vector<16x256xbf16>, vector<4x256xf32> -> vector<4x256xf32>
    %c0_94 = arith.constant 0 : index
    %c0_95 = arith.constant 0 : index
    %164 = vector.load %arg11[%c0_94, %c0_95] : memref<4x256xf32, #tpu.memory_space<vmem>>, vector<4x256xf32>
    %165 = vector.broadcast %140 : vector<1x256xf32> to vector<4x256xf32>
    %166 = arith.mulf %165, %163 : vector<4x256xf32>
    %167 = arith.addf %164, %166 : vector<4x256xf32>
    %c0_96 = arith.constant 0 : index
    %c0_97 = arith.constant 0 : index
    %168 = vector.load %arg11[%c0_96, %c0_97] : memref<4x256xf32, #tpu.memory_space<vmem>>, vector<4x256xf32>
    tpu.vector_store %arg11[%c0_96, %c0_97], %167 {strides = array<i32>} : memref<4x256xf32, #tpu.memory_space<vmem>>, vector<4x256xf32>,
    %169 = vector.extract_strided_slice %20 {offsets = [5, 0], sizes = [1, 256], strides = [1, 1]} : vector<8x256xf32> to vector<1x256xf32>
    %c5 = arith.constant 5 : index
    %c0_98 = arith.constant 0 : index
    %c0_99 = arith.constant 0 : index
    %170 = vector.load %arg5[%c5, %c0_98, %c0_99] : memref<8x16x4xbf16, #tpu.memory_space<vmem>>, vector<1x16x4xbf16>
    %171 = vector.shape_cast %170 : vector<1x16x4xbf16> to vector<16x4xbf16>
    %cst_100 = arith.constant dense<0.000000e+00> : vector<16x256xf32>
    %172 = tpu.matmul %171, %21, %cst_100 {dimension_numbers = #tpu.dot_dimension_numbers<[1], [0], [0], [1], [0, 0, 1, 1], [], []>} : vector<16x4xbf16>, vector<4x256xbf16>, vector<16x256xf32> -> vector<16x256xf32>
    %c0_101 = arith.constant 0 : index
    %c5_102 = arith.constant 5 : index
    %173 = vector.load %arg6[%c0_101, %c5_102] : memref<16x8xf32, #tpu.memory_space<vmem>>, vector<16x1xf32>
    %174 = vector.broadcast %173 : vector<16x1xf32> to vector<16x256xf32>
    %175 = arith.addf %172, %174 : vector<16x256xf32>
    %cst_103 = arith.constant 5.000000e-01 : f32
    %176 = vector.broadcast %cst_103 : f32 to vector<16x256xf32>
    %177 = arith.mulf %176, %175 : vector<16x256xf32>
    %cst_104 = arith.constant 4.471500e-02 : f32
    %178 = vector.broadcast %cst_104 : f32 to vector<16x256xf32>
    %179 = arith.mulf %178, %175 : vector<16x256xf32>
    %180 = arith.mulf %179, %175 : vector<16x256xf32>
    %181 = arith.mulf %180, %175 : vector<16x256xf32>
    %182 = arith.addf %175, %181 : vector<16x256xf32>
    %cst_105 = arith.constant 0.797884583 : f32
    %183 = vector.broadcast %cst_105 : f32 to vector<16x256xf32>
    %184 = arith.mulf %183, %182 : vector<16x256xf32>
    %185 = math.tanh %184 : vector<16x256xf32>
    %cst_106 = arith.constant 1.000000e+00 : f32
    %186 = vector.broadcast %cst_106 : f32 to vector<16x256xf32>
    %187 = arith.addf %186, %185 : vector<16x256xf32>
    %188 = arith.mulf %177, %187 : vector<16x256xf32>
    %c5_107 = arith.constant 5 : index
    %c0_108 = arith.constant 0 : index
    %c0_109 = arith.constant 0 : index
    %189 = vector.load %arg7[%c5_107, %c0_108, %c0_109] : memref<8x4x16xbf16, #tpu.memory_space<vmem>>, vector<1x4x16xbf16>
    %190 = vector.shape_cast %189 : vector<1x4x16xbf16> to vector<4x16xbf16>
    %191 = arith.truncf %188 : vector<16x256xf32> to vector<16x256xbf16>
    %cst_110 = arith.constant dense<0.000000e+00> : vector<4x256xf32>
    %192 = tpu.matmul %190, %191, %cst_110 {dimension_numbers = #tpu.dot_dimension_numbers<[1], [0], [0], [1], [0, 0, 1, 1], [], []>} : vector<4x16xbf16>, vector<16x256xbf16>, vector<4x256xf32> -> vector<4x256xf32>
    %c0_111 = arith.constant 0 : index
    %c0_112 = arith.constant 0 : index
    %193 = vector.load %arg11[%c0_111, %c0_112] : memref<4x256xf32, #tpu.memory_space<vmem>>, vector<4x256xf32>
    %194 = vector.broadcast %169 : vector<1x256xf32> to vector<4x256xf32>
    %195 = arith.mulf %194, %192 : vector<4x256xf32>
    %196 = arith.addf %193, %195 : vector<4x256xf32>
    %c0_113 = arith.constant 0 : index
    %c0_114 = arith.constant 0 : index
    %197 = vector.load %arg11[%c0_113, %c0_114] : memref<4x256xf32, #tpu.memory_space<vmem>>, vector<4x256xf32>
    tpu.vector_store %arg11[%c0_113, %c0_114], %196 {strides = array<i32>} : memref<4x256xf32, #tpu.memory_space<vmem>>, vector<4x256xf32>,
    %198 = vector.extract_strided_slice %20 {offsets = [6, 0], sizes = [1, 256], strides = [1, 1]} : vector<8x256xf32> to vector<1x256xf32>
    %c6 = arith.constant 6 : index
    %c0_115 = arith.constant 0 : index
    %c0_116 = arith.constant 0 : index
    %199 = vector.load %arg5[%c6, %c0_115, %c0_116] : memref<8x16x4xbf16, #tpu.memory_space<vmem>>, vector<1x16x4xbf16>
    %200 = vector.shape_cast %199 : vector<1x16x4xbf16> to vector<16x4xbf16>
    %cst_117 = arith.constant dense<0.000000e+00> : vector<16x256xf32>
    %201 = tpu.matmul %200, %21, %cst_117 {dimension_numbers = #tpu.dot_dimension_numbers<[1], [0], [0], [1], [0, 0, 1, 1], [], []>} : vector<16x4xbf16>, vector<4x256xbf16>, vector<16x256xf32> -> vector<16x256xf32>
    %c0_118 = arith.constant 0 : index
    %c6_119 = arith.constant 6 : index
    %202 = vector.load %arg6[%c0_118, %c6_119] : memref<16x8xf32, #tpu.memory_space<vmem>>, vector<16x1xf32>
    %203 = vector.broadcast %202 : vector<16x1xf32> to vector<16x256xf32>
    %204 = arith.addf %201, %203 : vector<16x256xf32>
    %cst_120 = arith.constant 5.000000e-01 : f32
    %205 = vector.broadcast %cst_120 : f32 to vector<16x256xf32>
    %206 = arith.mulf %205, %204 : vector<16x256xf32>
    %cst_121 = arith.constant 4.471500e-02 : f32
    %207 = vector.broadcast %cst_121 : f32 to vector<16x256xf32>
    %208 = arith.mulf %207, %204 : vector<16x256xf32>
    %209 = arith.mulf %208, %204 : vector<16x256xf32>
    %210 = arith.mulf %209, %204 : vector<16x256xf32>
    %211 = arith.addf %204, %210 : vector<16x256xf32>
    %cst_122 = arith.constant 0.797884583 : f32
    %212 = vector.broadcast %cst_122 : f32 to vector<16x256xf32>
    %213 = arith.mulf %212, %211 : vector<16x256xf32>
    %214 = math.tanh %213 : vector<16x256xf32>
    %cst_123 = arith.constant 1.000000e+00 : f32
    %215 = vector.broadcast %cst_123 : f32 to vector<16x256xf32>
    %216 = arith.addf %215, %214 : vector<16x256xf32>
    %217 = arith.mulf %206, %216 : vector<16x256xf32>
    %c6_124 = arith.constant 6 : index
    %c0_125 = arith.constant 0 : index
    %c0_126 = arith.constant 0 : index
    %218 = vector.load %arg7[%c6_124, %c0_125, %c0_126] : memref<8x4x16xbf16, #tpu.memory_space<vmem>>, vector<1x4x16xbf16>
    %219 = vector.shape_cast %218 : vector<1x4x16xbf16> to vector<4x16xbf16>
    %220 = arith.truncf %217 : vector<16x256xf32> to vector<16x256xbf16>
    %cst_127 = arith.constant dense<0.000000e+00> : vector<4x256xf32>
    %221 = tpu.matmul %219, %220, %cst_127 {dimension_numbers = #tpu.dot_dimension_numbers<[1], [0], [0], [1], [0, 0, 1, 1], [], []>} : vector<4x16xbf16>, vector<16x256xbf16>, vector<4x256xf32> -> vector<4x256xf32>
    %c0_128 = arith.constant 0 : index
    %c0_129 = arith.constant 0 : index
    %222 = vector.load %arg11[%c0_128, %c0_129] : memref<4x256xf32, #tpu.memory_space<vmem>>, vector<4x256xf32>
    %223 = vector.broadcast %198 : vector<1x256xf32> to vector<4x256xf32>
    %224 = arith.mulf %223, %221 : vector<4x256xf32>
    %225 = arith.addf %222, %224 : vector<4x256xf32>
    %c0_130 = arith.constant 0 : index
    %c0_131 = arith.constant 0 : index
    %226 = vector.load %arg11[%c0_130, %c0_131] : memref<4x256xf32, #tpu.memory_space<vmem>>, vector<4x256xf32>
    tpu.vector_store %arg11[%c0_130, %c0_131], %225 {strides = array<i32>} : memref<4x256xf32, #tpu.memory_space<vmem>>, vector<4x256xf32>,
    %227 = vector.extract_strided_slice %20 {offsets = [7, 0], sizes = [1, 256], strides = [1, 1]} : vector<8x256xf32> to vector<1x256xf32>
    %c7 = arith.constant 7 : index
    %c0_132 = arith.constant 0 : index
    %c0_133 = arith.constant 0 : index
    %228 = vector.load %arg5[%c7, %c0_132, %c0_133] : memref<8x16x4xbf16, #tpu.memory_space<vmem>>, vector<1x16x4xbf16>
    %229 = vector.shape_cast %228 : vector<1x16x4xbf16> to vector<16x4xbf16>
    %cst_134 = arith.constant dense<0.000000e+00> : vector<16x256xf32>
    %230 = tpu.matmul %229, %21, %cst_134 {dimension_numbers = #tpu.dot_dimension_numbers<[1], [0], [0], [1], [0, 0, 1, 1], [], []>} : vector<16x4xbf16>, vector<4x256xbf16>, vector<16x256xf32> -> vector<16x256xf32>
    %c0_135 = arith.constant 0 : index
    %c7_136 = arith.constant 7 : index
    %231 = vector.load %arg6[%c0_135, %c7_136] : memref<16x8xf32, #tpu.memory_space<vmem>>, vector<16x1xf32>
    %232 = vector.broadcast %231 : vector<16x1xf32> to vector<16x256xf32>
    %233 = arith.addf %230, %232 : vector<16x256xf32>
    %cst_137 = arith.constant 5.000000e-01 : f32
    %234 = vector.broadcast %cst_137 : f32 to vector<16x256xf32>
    %235 = arith.mulf %234, %233 : vector<16x256xf32>
    %cst_138 = arith.constant 4.471500e-02 : f32
    %236 = vector.broadcast %cst_138 : f32 to vector<16x256xf32>
    %237 = arith.mulf %236, %233 : vector<16x256xf32>
    %238 = arith.mulf %237, %233 : vector<16x256xf32>
    %239 = arith.mulf %238, %233 : vector<16x256xf32>
    %240 = arith.addf %233, %239 : vector<16x256xf32>
    %cst_139 = arith.constant 0.797884583 : f32
    %241 = vector.broadcast %cst_139 : f32 to vector<16x256xf32>
    %242 = arith.mulf %241, %240 : vector<16x256xf32>
    %243 = math.tanh %242 : vector<16x256xf32>
    %cst_140 = arith.constant 1.000000e+00 : f32
    %244 = vector.broadcast %cst_140 : f32 to vector<16x256xf32>
    %245 = arith.addf %244, %243 : vector<16x256xf32>
    %246 = arith.mulf %235, %245 : vector<16x256xf32>
    %c7_141 = arith.constant 7 : index
    %c0_142 = arith.constant 0 : index
    %c0_143 = arith.constant 0 : index
    %247 = vector.load %arg7[%c7_141, %c0_142, %c0_143] : memref<8x4x16xbf16, #tpu.memory_space<vmem>>, vector<1x4x16xbf16>
    %248 = vector.shape_cast %247 : vector<1x4x16xbf16> to vector<4x16xbf16>
    %249 = arith.truncf %246 : vector<16x256xf32> to vector<16x256xbf16>
    %cst_144 = arith.constant dense<0.000000e+00> : vector<4x256xf32>
    %250 = tpu.matmul %248, %249, %cst_144 {dimension_numbers = #tpu.dot_dimension_numbers<[1], [0], [0], [1], [0, 0, 1, 1], [], []>} : vector<4x16xbf16>, vector<16x256xbf16>, vector<4x256xf32> -> vector<4x256xf32>
    %c0_145 = arith.constant 0 : index
    %c0_146 = arith.constant 0 : index
    %251 = vector.load %arg11[%c0_145, %c0_146] : memref<4x256xf32, #tpu.memory_space<vmem>>, vector<4x256xf32>
    %252 = vector.broadcast %227 : vector<1x256xf32> to vector<4x256xf32>
    %253 = arith.mulf %252, %250 : vector<4x256xf32>
    %254 = arith.addf %251, %253 : vector<4x256xf32>
    %c0_147 = arith.constant 0 : index
    %c0_148 = arith.constant 0 : index
    %255 = vector.load %arg11[%c0_147, %c0_148] : memref<4x256xf32, #tpu.memory_space<vmem>>, vector<4x256xf32>
    tpu.vector_store %arg11[%c0_147, %c0_148], %254 {strides = array<i32>} : memref<4x256xf32, #tpu.memory_space<vmem>>, vector<4x256xf32>,
    %c0_149 = arith.constant 0 : index
    %c0_150 = arith.constant 0 : index
    %256 = vector.load %arg11[%c0_149, %c0_150] : memref<4x256xf32, #tpu.memory_space<vmem>>, vector<4x256xf32>
    %c0_151 = arith.constant 0 : index
    %c0_152 = arith.constant 0 : index
    %257 = vector.load %arg8[%c0_151, %c0_152] : memref<4x8xf32, #tpu.memory_space<vmem>>, vector<4x8xf32>
    %cst_153 = arith.constant dense<0.000000e+00> : vector<4x256xf32>
    %258 = tpu.matmul %257, %20, %cst_153 {dimension_numbers = #tpu.dot_dimension_numbers<[1], [0], [0], [1], [0, 0, 1, 1], [], []>} : vector<4x8xf32>, vector<8x256xf32>, vector<4x256xf32> -> vector<4x256xf32>
    %259 = arith.addf %256, %258 : vector<4x256xf32>
    %c0_154 = arith.constant 0 : index
    %c0_155 = arith.constant 0 : index
    %c0_156 = arith.constant 0 : index
    %260 = vector.load %arg9[%c0_154, %c0_155, %c0_156] : memref<1x4x256xf32, #tpu.memory_space<vmem>>, vector<1x4x256xf32>
    %261 = vector.shape_cast %260 : vector<1x4x256xf32> to vector<4x256xf32>
    %262 = vector.shape_cast %259 : vector<4x256xf32> to vector<1x4x256xf32>
    tpu.vector_store %arg9[%c0_154, %c0_155, %c0_156], %262 {strides = array<i32>} : memref<1x4x256xf32, #tpu.memory_space<vmem>>, vector<1x4x256xf32>,
    %c0_157 = arith.constant 0 : index
    %c0_158 = arith.constant 0 : index
    %c0_159 = arith.constant 0 : index
    %263 = vector.load %arg10[%c0_157, %c0_158, %c0_159] : memref<1x8x256xf32, #tpu.memory_space<vmem>>, vector<1x8x256xf32>
    %264 = vector.shape_cast %263 : vector<1x8x256xf32> to vector<8x256xf32>
    %265 = vector.shape_cast %20 : vector<8x256xf32> to vector<1x8x256xf32>
    tpu.vector_store %arg10[%c0_157, %c0_158, %c0_159], %265 {strides = array<i32>} : memref<1x8x256xf32, #tpu.memory_space<vmem>>, vector<1x8x256xf32>,
    return
  }
  func.func @transform_0(%arg0: i32, %arg1: i32) -> (i32, i32, i32) {
    %c0_i32 = arith.constant 0 : i32
    %c0_i32_0 = arith.constant 0 : i32
    return %arg0, %c0_i32, %arg1 : i32, i32, i32
  }
  func.func @transform_1(%arg0: i32, %arg1: i32) -> (i32, i32) {
    %c0_i32 = arith.constant 0 : i32
    %c0_i32_0 = arith.constant 0 : i32
    %c0_i32_1 = arith.constant 0 : i32
    return %c0_i32, %c0_i32_0 : i32, i32
  }
  func.func @transform_2(%arg0: i32, %arg1: i32) -> (i32, i32, i32) {
    %c0_i32 = arith.constant 0 : i32
    %c0_i32_0 = arith.constant 0 : i32
    %c0_i32_1 = arith.constant 0 : i32
    return %arg0, %c0_i32, %c0_i32_0 : i32, i32, i32
  }
  func.func @transform_3(%arg0: i32, %arg1: i32) -> (i32, i32, i32) {
    %c0_i32 = arith.constant 0 : i32
    %c0_i32_0 = arith.constant 0 : i32
    %c0_i32_1 = arith.constant 0 : i32
    %c0_i32_2 = arith.constant 0 : i32
    return %c0_i32, %c0_i32_0, %c0_i32_1 : i32, i32, i32
  }
  func.func @transform_4(%arg0: i32, %arg1: i32) -> (i32, i32) {
    %c0_i32 = arith.constant 0 : i32
    %c0_i32_0 = arith.constant 0 : i32
    %c0_i32_1 = arith.constant 0 : i32
    return %c0_i32, %c0_i32_0 : i32, i32
  }
  func.func @transform_5(%arg0: i32, %arg1: i32) -> (i32, i32, i32) {
    %c0_i32 = arith.constant 0 : i32
    %c0_i32_0 = arith.constant 0 : i32
    %c0_i32_1 = arith.constant 0 : i32
    %c0_i32_2 = arith.constant 0 : i32
    return %c0_i32, %c0_i32_0, %c0_i32_1 : i32, i32, i32
  }
  func.func @transform_6(%arg0: i32, %arg1: i32) -> (i32, i32) {
    %c0_i32 = arith.constant 0 : i32
    %c0_i32_0 = arith.constant 0 : i32
    %c0_i32_1 = arith.constant 0 : i32
    return %c0_i32, %c0_i32_0 : i32, i32
  }
  func.func @transform_7(%arg0: i32, %arg1: i32) -> (i32, i32, i32) {
    %c0_i32 = arith.constant 0 : i32
    %c0_i32_0 = arith.constant 0 : i32
    return %arg0, %c0_i32, %arg1 : i32, i32, i32
  }
  func.func @transform_8(%arg0: i32, %arg1: i32) -> (i32, i32, i32) {
    %c0_i32 = arith.constant 0 : i32
    %c0_i32_0 = arith.constant 0 : i32
    return %arg0, %c0_i32, %arg1 : i32, i32, i32
  }
}

</mosaic_0001>

<llo_original>
// kernel: tpu_custom_call.1
$region0: #{tpu_custom_call.1}
  #allocation0 [shape = 'u32[]', space=smem, size = 0x4, offset = 0x4, fixed_abs, tag = 'smem constant byte address 0x4 - core index']
  #allocation1 [shape = 'u32[144,128]{1,0:T(1,128)}', space=vmem, size = 0x12000, scoped, tag = 'internal scratch']
  #allocation2 [shape = 'f32[4,256]{1,0:T(4,128)}', space=vmem, size = 0x1000, scoped, tag = 'scratch operand']
  %s0 = inlined_call_operand.vmem [shape: f32[2,4,256], index: 0, kind: input, shape index: {}]
  %s1 = inlined_call_operand.vmem [shape: f32[8,4], index: 1, kind: input, shape index: {}]
  %s2 = inlined_call_operand.vmem [shape: f32[2,8,1], index: 2, kind: input, shape index: {}]
  %s3 = inlined_call_operand.vmem [shape: bf16[8,16,4], index: 3, kind: input, shape index: {}]
  %s4 = inlined_call_operand.vmem [shape: f32[16,8], index: 4, kind: input, shape index: {}]
  %s5 = inlined_call_operand.vmem [shape: bf16[8,4,16], index: 5, kind: input, shape index: {}]
  %s6 = inlined_call_operand.vmem [shape: f32[4,8], index: 6, kind: input, shape index: {}]
  %s7 = inlined_call_operand.hbm [shape: f32[2,4,256], index: 7, kind: output, shape index: {0}]
  %s8 = inlined_call_operand.hbm [shape: f32[2,8,256], index: 8, kind: output, shape index: {1}]
  %9 = xla_tuple %s7, %s8
  %s10 = sld [smem:[#allocation0]]
  $region101: #{tpu_custom_call.1} parent=0
    _
  %s12 = ssub.s32 1, %s10
  %s13 = scalar_select 0, %s12, %s10
  $region1: #{tpu_custom_call.1} parent=0
    #allocation3 [shape = 'u8[8192]{0}', space=vmem, size = 0x2000, scoped, tag = 'output window, operand 0']
    #allocation4 [shape = 's32[2]{0}', space=sflag, size = 0x8, scoped, tag = 'scoped memory for tpu_custom_call.1']
    #allocation5 [shape = 'u8[16384]{0}', space=vmem, size = 0x4000, scoped, tag = 'output window, operand 1']
    #allocation6 [shape = 's32[2]{0}', space=sflag, size = 0x8, scoped, tag = 'scoped memory for tpu_custom_call.1']
    %14 = vsyncpa [#allocation4], 0
    %s15 = scalar_lea.sflag [#allocation4], 1
    %16 = vsyncpa %s15, 0
    %17 = vsyncpa [#allocation6], 0
    %s18 = scalar_lea.sflag [#allocation6], 1
    %19 = vsyncpa %s18, 0
    loop: start=0, step=1, limit=4
    $region2: #{tpu_custom_call.1} parent=1 // loop_pre_header
      _
    $region3: #{tpu_custom_call.1} parent=1 // loop_header
      %s21 = sphi 0, %s25
      %p22 = scmp.ge.s32.totalorder %s21, 4
      %s28 = sphi 0, %s40
      %s29 = sphi 0, %s36
      %s30 = sphi 0, %s28
      %s31 = sphi 0, %s29
      %s32 = sphi 0, %s30
      %s33 = sphi 0, %s31
      %s45 = sphi 0, %s47
      %s48 = sphi 0, %s45
      %s49 = sphi 0, %s48
      %s65 = sphi 0, %s49
      %s69 = sphi 0, %s69
      %s71 = sphi 0, %s69
      %s72 = sphi 0, %s71
      %s86 = sphi 0, %s72
      %s92 = sphi 0, %s94
      %s95 = sphi 0, %s92
      %s96 = sphi 0, %s95
      %s112 = sphi 0, %s96
      %s116 = sphi 0, %s116
      %s118 = sphi 0, %s116
      %s119 = sphi 0, %s118
      %s133 = sphi 0, %s119
      %s137 = sphi 0, %s137
      %s139 = sphi 0, %s137
      %s140 = sphi 0, %s139
      %s154 = sphi 0, %s140
      %s158 = sphi 0, %s158
      %s160 = sphi 0, %s158
      %s161 = sphi 0, %s160
      %s175 = sphi 0, %s161
      %s179 = sphi 0, %s179
      %s181 = sphi 0, %s179
      %s182 = sphi 0, %s181
      %s196 = sphi 0, %s182
      %s204 = sphi 0, %s206
      %s207 = sphi 0, %s204
      %s208 = sphi 0, %s207
      %s224 = sphi 0, %s208
      %s232 = sphi 0, %s234
      %s235 = sphi 0, %s232
      %s236 = sphi 0, %s235
      %s252 = sphi 0, %s236
    $region4: #{tpu_custom_call.1} parent=1 // loop_header_branch
      %24 = sbr.rel (%p22) target = $region8
    $region5: #{tpu_custom_call.1} parent=1 // loop_body
      %s26 = ssub.s32 %s21, 1
      %s27 = ssub.s32 %s21, 2
      %s34 = sadd.s32 1, %s29
      %p35 = scmp.ge.s32.totalorder %s34, 1
      %s36 = scalar_select %p35, 0, %s34
      %s37 = sadd.s32 1, %s28
      %s38 = scalar_select %p35, %s37, %s28
      %p39 = scmp.ge.s32.totalorder %s38, 2
      %s40 = scalar_select %p39, 0, %s38
      %s41 = ssub.s32 %s28, %s40
      %s42 = ssub.s32 %s29, %s36
      %s43 = sor.u32 %s41, %s42
      %p44 = scmp.eq.s32.totalorder %s43, 0
      %s46 = sadd.s32 %s45, 1
      %s47 = scalar_select %p44, %s45, %s46
      %p50 = pneg %p44
      %p51 = scmp.eq.s32.totalorder %s21, 1
      %p52 = por %p50, %p51
      %p53 = scmp.ne.s32.totalorder %s45, %s48
      %p54 = scmp.eq.s32.totalorder %s21, 0
      %p55 = por %p53, %p54
      %p56 = scmp.ne.s32.totalorder %s45, %s48
      %p57 = scmp.eq.s32.totalorder %s26, 1
      %p58 = por %p56, %p57
      %p59 = scmp.ne.s32.totalorder %s48, %s49
      %p60 = scmp.eq.s32.totalorder %s26, 0
      %p61 = por %p59, %p60
      %p62 = scmp.ne.s32.totalorder %s48, %s49
      %p63 = scmp.eq.s32.totalorder %s27, 1
      %p64 = por %p62, %p63
      %p66 = scmp.ne.s32.totalorder %s49, %s65
      %p67 = scmp.eq.s32.totalorder %s27, 0
      %p68 = por %p66, %p67
      %s70 = sadd.s32 %s69, 1
      %p73 = scmp.eq.s32.totalorder %s21, 1
      %p74 = scmp.ne.s32.totalorder %s69, %s71
      %p75 = scmp.eq.s32.totalorder %s21, 0
      %p76 = por %p74, %p75
      %p77 = scmp.ne.s32.totalorder %s69, %s71
      %p78 = scmp.eq.s32.totalorder %s26, 1
      %p79 = por %p77, %p78
      %p80 = scmp.ne.s32.totalorder %s71, %s72
      %p81 = scmp.eq.s32.totalorder %s26, 0
      %p82 = por %p80, %p81
      %p83 = scmp.ne.s32.totalorder %s71, %s72
      %p84 = scmp.eq.s32.totalorder %s27, 1
      %p85 = por %p83, %p84
      %p87 = scmp.ne.s32.totalorder %s72, %s86
      %p88 = scmp.eq.s32.totalorder %s27, 0
      %p89 = por %p87, %p88
      %s90 = ssub.s32 %s28, %s40
      %p91 = scmp.eq.s32.totalorder %s90, 0
      %s93 = sadd.s32 %s92, 1
      %s94 = scalar_select %p91, %s92, %s93
      %p97 = pneg %p91
      %p98 = scmp.eq.s32.totalorder %s21, 1
      %p99 = por %p97, %p98
      %p100 = scmp.ne.s32.totalorder %s92, %s95
      %p101 = scmp.eq.s32.totalorder %s21, 0
      %p102 = por %p100, %p101
      %p103 = scmp.ne.s32.totalorder %s92, %s95
      %p104 = scmp.eq.s32.totalorder %s26, 1
      %p105 = por %p103, %p104
      %p106 = scmp.ne.s32.totalorder %s95, %s96
      %p107 = scmp.eq.s32.totalorder %s26, 0
      %p108 = por %p106, %p107
      %p109 = scmp.ne.s32.totalorder %s95, %s96
      %p110 = scmp.eq.s32.totalorder %s27, 1
      %p111 = por %p109, %p110
      %p113 = scmp.ne.s32.totalorder %s96, %s112
      %p114 = scmp.eq.s32.totalorder %s27, 0
      %p115 = por %p113, %p114
      %s117 = sadd.s32 %s116, 1
      %p120 = scmp.eq.s32.totalorder %s21, 1
      %p121 = scmp.ne.s32.totalorder %s116, %s118
      %p122 = scmp.eq.s32.totalorder %s21, 0
      %p123 = por %p121, %p122
      %p124 = scmp.ne.s32.totalorder %s116, %s118
      %p125 = scmp.eq.s32.totalorder %s26, 1
      %p126 = por %p124, %p125
      %p127 = scmp.ne.s32.totalorder %s118, %s119
      %p128 = scmp.eq.s32.totalorder %s26, 0
      %p129 = por %p127, %p128
      %p130 = scmp.ne.s32.totalorder %s118, %s119
      %p131 = scmp.eq.s32.totalorder %s27, 1
      %p132 = por %p130, %p131
      %p134 = scmp.ne.s32.totalorder %s119, %s133
      %p135 = scmp.eq.s32.totalorder %s27, 0
      %p136 = por %p134, %p135
      %s138 = sadd.s32 %s137, 1
      %p141 = scmp.eq.s32.totalorder %s21, 1
      %p142 = scmp.ne.s32.totalorder %s137, %s139
      %p143 = scmp.eq.s32.totalorder %s21, 0
      %p144 = por %p142, %p143
      %p145 = scmp.ne.s32.totalorder %s137, %s139
      %p146 = scmp.eq.s32.totalorder %s26, 1
      %p147 = por %p145, %p146
      %p148 = scmp.ne.s32.totalorder %s139, %s140
      %p149 = scmp.eq.s32.totalorder %s26, 0
      %p150 = por %p148, %p149
      %p151 = scmp.ne.s32.totalorder %s139, %s140
      %p152 = scmp.eq.s32.totalorder %s27, 1
      %p153 = por %p151, %p152
      %p155 = scmp.ne.s32.totalorder %s140, %s154
      %p156 = scmp.eq.s32.totalorder %s27, 0
      %p157 = por %p155, %p156
      %s159 = sadd.s32 %s158, 1
      %p162 = scmp.eq.s32.totalorder %s21, 1
      %p163 = scmp.ne.s32.totalorder %s158, %s160
      %p164 = scmp.eq.s32.totalorder %s21, 0
      %p165 = por %p163, %p164
      %p166 = scmp.ne.s32.totalorder %s158, %s160
      %p167 = scmp.eq.s32.totalorder %s26, 1
      %p168 = por %p166, %p167
      %p169 = scmp.ne.s32.totalorder %s160, %s161
      %p170 = scmp.eq.s32.totalorder %s26, 0
      %p171 = por %p169, %p170
      %p172 = scmp.ne.s32.totalorder %s160, %s161
      %p173 = scmp.eq.s32.totalorder %s27, 1
      %p174 = por %p172, %p173
      %p176 = scmp.ne.s32.totalorder %s161, %s175
      %p177 = scmp.eq.s32.totalorder %s27, 0
      %p178 = por %p176, %p177
      %s180 = sadd.s32 %s179, 1
      %p183 = scmp.eq.s32.totalorder %s21, 1
      %p184 = scmp.ne.s32.totalorder %s179, %s181
      %p185 = scmp.eq.s32.totalorder %s21, 0
      %p186 = por %p184, %p185
      %p187 = scmp.ne.s32.totalorder %s179, %s181
      %p188 = scmp.eq.s32.totalorder %s26, 1
      %p189 = por %p187, %p188
      %p190 = scmp.ne.s32.totalorder %s181, %s182
      %p191 = scmp.eq.s32.totalorder %s26, 0
      %p192 = por %p190, %p191
      %p193 = scmp.ne.s32.totalorder %s181, %s182
      %p194 = scmp.eq.s32.totalorder %s27, 1
      %p195 = por %p193, %p194
      %p197 = scmp.ne.s32.totalorder %s182, %s196
      %p198 = scmp.eq.s32.totalorder %s27, 0
      %p199 = por %p197, %p198
      %s200 = ssub.s32 %s28, %s40
      %s201 = ssub.s32 %s29, %s36
      %s202 = sor.u32 %s200, %s201
      %p203 = scmp.eq.s32.totalorder %s202, 0
      %s205 = sadd.s32 %s204, 1
      %s206 = scalar_select %p203, %s204, %s205
      %p209 = pneg %p203
      %p210 = scmp.eq.s32.totalorder %s21, 1
      %p211 = por %p209, %p210
      %p212 = scmp.ne.s32.totalorder %s204, %s207
      %p213 = scmp.eq.s32.totalorder %s21, 0
      %p214 = por %p212, %p213
      %p215 = scmp.ne.s32.totalorder %s204, %s207
      %p216 = scmp.eq.s32.totalorder %s26, 1
      %p217 = por %p215, %p216
      %p218 = scmp.ne.s32.totalorder %s207, %s208
      %p219 = scmp.eq.s32.totalorder %s26, 0
      %p220 = por %p218, %p219
      %p221 = scmp.ne.s32.totalorder %s207, %s208
      %p222 = scmp.eq.s32.totalorder %s27, 1
      %p223 = por %p221, %p222
      %p225 = scmp.ne.s32.totalorder %s208, %s224
      %p226 = scmp.eq.s32.totalorder %s27, 0
      %p227 = por %p225, %p226
      %s228 = ssub.s32 %s28, %s40
      %s229 = ssub.s32 %s29, %s36
      %s230 = sor.u32 %s228, %s229
      %p231 = scmp.eq.s32.totalorder %s230, 0
      %s233 = sadd.s32 %s232, 1
      %s234 = scalar_select %p231, %s232, %s233
      %p237 = pneg %p231
      %p238 = scmp.eq.s32.totalorder %s21, 1
      %p239 = por %p237, %p238
      %p240 = scmp.ne.s32.totalorder %s232, %s235
      %p241 = scmp.eq.s32.totalorder %s21, 0
      %p242 = por %p240, %p241
      %p243 = scmp.ne.s32.totalorder %s232, %s235
      %p244 = scmp.eq.s32.totalorder %s26, 1
      %p245 = por %p243, %p244
      %p246 = scmp.ne.s32.totalorder %s235, %s236
      %p247 = scmp.eq.s32.totalorder %s26, 0
      %p248 = por %p246, %p247
      %p249 = scmp.ne.s32.totalorder %s235, %s236
      %p250 = scmp.eq.s32.totalorder %s27, 1
      %p251 = por %p249, %p250
      %p253 = scmp.ne.s32.totalorder %s236, %s252
      %p254 = scmp.eq.s32.totalorder %s27, 0
      %p255 = por %p253, %p254
      %p256 = scmp.le.s32.totalorder 1, %s21
      %p257 = scmp.lt.s32.totalorder %s21, 3
      %p258 = pnand %p256, %p257
      %p259 = pneg %p258
      // Predicated region
      $region9: #{tpu_custom_call.1} parent=5 // pred_check
        _
      $region10: #{tpu_custom_call.1} parent=5 // pred_check_branch
        %261 = sbr.rel (%p258) target = $region12
      $region11: #{tpu_custom_call.1} parent=5 // pred_region
        %s262 = ssub.s32 %s21, 1
        // Predicated region
        $region13: #{tpu_custom_call.1} parent=11 // pred_check
          %p263 = pneg %p82
        $region14: #{tpu_custom_call.1} parent=11 // pred_check_branch
          %265 = sbr.rel (%p263) target = $region16
        $region15: #{tpu_custom_call.1} parent=11 // pred_region
          _
        $region16: #{tpu_custom_call.1} parent=11 // pred_fallthru
          _
        // Predicated region
        $region17: #{tpu_custom_call.1} parent=11 // pred_check
          %p266 = pneg %p129
        $region18: #{tpu_custom_call.1} parent=11 // pred_check_branch
          %268 = sbr.rel (%p266) target = $region20
        $region19: #{tpu_custom_call.1} parent=11 // pred_region
          _
        $region20: #{tpu_custom_call.1} parent=11 // pred_fallthru
          _
        // Predicated region
        $region21: #{tpu_custom_call.1} parent=11 // pred_check
          %p269 = pneg %p150
        $region22: #{tpu_custom_call.1} parent=11 // pred_check_branch
          %271 = sbr.rel (%p269) target = $region24
        $region23: #{tpu_custom_call.1} parent=11 // pred_region
          _
        $region24: #{tpu_custom_call.1} parent=11 // pred_fallthru
          _
        // Predicated region
        $region25: #{tpu_custom_call.1} parent=11 // pred_check
          %p272 = pneg %p171
        $region26: #{tpu_custom_call.1} parent=11 // pred_check_branch
          %274 = sbr.rel (%p272) target = $region28
        $region27: #{tpu_custom_call.1} parent=11 // pred_region
          _
        $region28: #{tpu_custom_call.1} parent=11 // pred_fallthru
          _
        // Predicated region
        $region29: #{tpu_custom_call.1} parent=11 // pred_check
          %p275 = pneg %p192
        $region30: #{tpu_custom_call.1} parent=11 // pred_check_branch
          %277 = sbr.rel (%p275) target = $region32
        $region31: #{tpu_custom_call.1} parent=11 // pred_region
          _
        $region32: #{tpu_custom_call.1} parent=11 // pred_fallthru
          _
      $region12: #{tpu_custom_call.1} parent=5 // pred_fallthru
        _
      %p278 = scmp.lt.s32.totalorder %s21, 2
      // Predicated region
      $region33: #{tpu_custom_call.1} parent=5 // pred_check
        %p279 = pneg %p278
      $region34: #{tpu_custom_call.1} parent=5 // pred_check_branch
        %281 = sbr.rel (%p279) target = $region36
      $region35: #{tpu_custom_call.1} parent=5 // pred_region
        // Predicated region
        $region37: #{tpu_custom_call.1} parent=35 // pred_check
          %p282 = pneg %p55
        $region38: #{tpu_custom_call.1} parent=35 // pred_check_branch
          %284 = sbr.rel (%p282) target = $region40
        $region39: #{tpu_custom_call.1} parent=35 // pred_region
          %s285 = smul.u32 2, %s29
          %p286 = scmp.lt.s32.totalorder %s28, 1
          %s287 = scalar_select %p286, %s28, 1
          %p288 = scmp.lt.s32.totalorder %s285, 1
          %s289 = scalar_select %p288, %s285, 1
          %s290 = smul.addr %s287, 2
          %s291 = sadd.s32 %s289, %s290
          %s292 = smul.addr %s291, 4
          %s293 = scalar_lea.vmem %s0, %s292
          %s294 = smul.u32 2, %s29
        $region40: #{tpu_custom_call.1} parent=35 // pred_fallthru
          _
        // Predicated region
        $region41: #{tpu_custom_call.1} parent=35 // pred_check
          %p295 = pneg %p102
        $region42: #{tpu_custom_call.1} parent=35 // pred_check_branch
          %297 = sbr.rel (%p295) target = $region44
        $region43: #{tpu_custom_call.1} parent=35 // pred_region
          %p298 = scmp.lt.s32.totalorder %s28, 1
          %s299 = scalar_select %p298, %s28, 1
          %s300 = smul.addr %s299, 8
          %s301 = scalar_lea.vmem %s2, %s300
        $region44: #{tpu_custom_call.1} parent=35 // pred_fallthru
          _
      $region36: #{tpu_custom_call.1} parent=5 // pred_fallthru
        _
      %p302 = scmp.le.s32.totalorder 1, %s21
      %p303 = scmp.lt.s32.totalorder %s21, 3
      %p304 = pnand %p302, %p303
      %p305 = pneg %p304
      // Predicated region
      $region45: #{tpu_custom_call.1} parent=5 // pred_check
        _
      $region46: #{tpu_custom_call.1} parent=5 // pred_check_branch
        %307 = sbr.rel (%p304) target = $region48
      $region47: #{tpu_custom_call.1} parent=5 // pred_region
        %s308 = ssub.s32 %s21, 1
        %s309 = smul.u32 2, %s31
        %p310 = scmp.lt.s32.totalorder %s30, 1
        %s311 = scalar_select %p310, %s30, 1
        %p312 = scmp.lt.s32.totalorder %s309, 1
        %s313 = scalar_select %p312, %s309, 1
        %s314 = smul.addr %s311, 2
        %s315 = sadd.s32 %s313, %s314
        %s316 = smul.addr %s315, 4
        %s317 = scalar_lea.vmem %s0, %s316
        %p318 = pneg %p61
        %p319 = pneg %p58
        %p320 = pneg %p82
        %p321 = pneg %p79
        %p322 = scmp.lt.s32.totalorder %s30, 1
        %s323 = scalar_select %p322, %s30, 1
        %s324 = smul.addr %s323, 8
        %s325 = scalar_lea.vmem %s2, %s324
        %p326 = pneg %p108
        %p327 = pneg %p105
        %p328 = pneg %p129
        %p329 = pneg %p126
        %p330 = pneg %p150
        %p331 = pneg %p147
        %p332 = pneg %p171
        %p333 = pneg %p168
        %p334 = pneg %p192
        %p335 = pneg %p189
        %p336 = pneg %p220
        %p337 = pneg %p217
        %s338 = sand.u32 %s207, 1
        %s339 = scalar_lea.sflag [#allocation4], %s338
        %s340 = sand.u32 %s207, 1
        %s341 = smul.addr %s340, 8
        %s342 = scalar_lea.vmem [#allocation3], %s341
        %p343 = pneg %p248
        %p344 = pneg %p245
        %s345 = sand.u32 %s235, 1
        %s346 = scalar_lea.sflag [#allocation6], %s345
        %s347 = sand.u32 %s235, 1
        %s348 = smul.addr %s347, 16
        %s349 = scalar_lea.vmem [#allocation5], %s348
        %s350 = smul.u32 2, %s31
        %p351 = scmp.lt.s32.totalorder %s30, 1
        %s352 = scalar_select %p351, %s30, 1
        %p353 = scmp.lt.s32.totalorder %s350, 1
        %s354 = scalar_select %p353, %s350, 1
        %s355 = smul.addr %s352, 2
        %s356 = sadd.s32 %s354, %s355
        %s357 = smul.addr %s356, 4
        %s358 = scalar_lea.vmem %s0, %s357
        %s359 = smul.u32 2, %s31
        %p360 = scmp.lt.s32.totalorder %s30, 1
        %s361 = scalar_select %p360, %s30, 1
        %s362 = smul.addr %s361, 8
        %s363 = scalar_lea.vmem %s2, %s362
        %s364 = smul.u32 2, %s31
        %s365 = smul.u32 2, %s31
        %v367 = vld [vmem:[%s358] sm:$0xff]
        %v368 = vld [vmem:[%s1] sm:$0xff]
        %v369 = vld [vmem:[%s363] sm:$0xff]
        %371 = vset.pattern.permute.xlu0 0
        %372 = vperm.xlu0 %371, %v369
        %v373 = vpop.permute.xlu0 %372
        %v376 = vcombine.high %v367, %v367
        %vm377 = vcmask 31744
        %v379 = vsel %vm377, %v368, 0
        %vm381 = vcmask 1043456
        %v382 = vsel %vm381, %v367, 0
        %v384 = vsel %vm381, %v376, 0
        %386 = vmatprep.subr.mxu0 0.0
        %387 = vmatpush1.msra.mxu0 0.0
        %388 = vmatprep.subr.mxu0 0.0
        %389 = vmatpush1.msra.mxu0 0.0
        %390 = vmatprep.subr.mxu0 0.0
        %391 = vmatpush1.msra.mxu0 0.0
        %392 = vmatprep.subr.mxu0 0.0
        %393 = vmatpush1.msra.mxu0 0.0
        %394 = vmatprep.subr.mxu0 0.0
        %395 = vmatpush1.msra.mxu0 0.0
        %396 = vmatprep.subr.mxu0 0.0
        %397 = vmatpush1.msra.mxu0 0.0
        %398 = vmatprep.subr.mxu0 0.0
        %399 = vmatpush1.msra.mxu0 0.0
        %400 = vmatprep.subr.mxu0 0.0
        %401 = vmatpush1.msra.mxu0 0.0
        %402 = vmatprep.subr.mxu0 0.0
        %403 = vmatpush1.msra.mxu0 0.0
        %404 = vmatprep.subr.mxu0 0.0
        %405 = vmatpush1.msra.mxu0 0.0
        %406 = vmatprep.subr.mxu0 0.0
        %407 = vmatpush1.msra.mxu0 0.0
        %408 = vmatprep.subr.mxu0 0.0
        %409 = vmatpush1.msra.mxu0 0.0
        %410 = vmatprep.subr.mxu0 0.0
        %411 = vmatpush1.msra.mxu0 0.0
        %412 = vmatprep.subr.mxu0 0.0
        %413 = vmatpush1.msra.mxu0 0.0
        %414 = vmatprep.subr.mxu0 0.0
        %415 = vmatpush1.msra.mxu0 0.0
        %416 = vmatprep.subr.mxu0 %v384
        %417 = vmatpush1.msra.mxu0 %v382
        %418 = vmatprep.subr.mxu0 0.0
        %419 = vmatpush2.msra.mxu0 0.0
        %420 = vmatprep.subr.mxu0 0.0
        %421 = vmatpush2.msra.mxu0 0.0
        %422 = vmatprep.subr.mxu0 0.0
        %423 = vmatpush2.msra.mxu0 0.0
        %424 = vmatprep.subr.mxu0 0.0
        %425 = vmatpush2.msra.mxu0 0.0
        %426 = vmatprep.subr.mxu0 0.0
        %427 = vmatpush2.msra.mxu0 0.0
        %428 = vmatprep.subr.mxu0 0.0
        %429 = vmatpush2.msra.mxu0 0.0
        %430 = vmatprep.subr.mxu0 0.0
        %431 = vmatpush2.msra.mxu0 0.0
        %432 = vmatprep.subr.mxu0 0.0
        %433 = vmatpush2.msra.mxu0 0.0
        %434 = vmatprep.subr.mxu0 0.0
        %435 = vmatpush2.msra.mxu0 0.0
        %436 = vmatprep.subr.mxu0 0.0
        %437 = vmatpush2.msra.mxu0 0.0
        %438 = vmatprep.subr.mxu0 0.0
        %439 = vmatpush2.msra.mxu0 0.0
        %440 = vmatprep.subr.mxu0 0.0
        %441 = vmatpush2.msra.mxu0 0.0
        %442 = vmatprep.subr.mxu0 0.0
        %443 = vmatpush2.msra.mxu0 0.0
        %444 = vmatprep.subr.mxu0 0.0
        %445 = vmatpush2.msra.mxu0 0.0
        %446 = vmatprep.subr.mxu0 0.0
        %447 = vmatpush2.msra.mxu0 0.0
        %448 = vmatprep.subr.mxu0 0.0
        %449 = vmatpush2.msra.mxu0 0.0
        %450 = vmatprep.mubr.f32.mxu0 0.0
        %451 = vmatmul.mubr.f32.gmra.mxu0 %v379
        %v452 = vpop.f32.mrf.mxu0
        %v453 = vadd.f32 %v373, %v452
        %v454 = vpop.f32.mrf.mxu0
        %v455 = vadd.f32 %v373, %v454
        %456 = vdwg.mxu0
        %v457 = vrot.slane %v453, 4
        %v458 = vmax.f32 %v453, %v457
        %v459 = vrot.slane %v458, 2
        %v460 = vmax.f32 %v458, %v459
        %v461 = vrot.slane %v460, 1
        %v462 = vmax.f32 %v460, %v461
        %v463 = vrot.slane %v455, 4
        %v464 = vmax.f32 %v455, %v463
        %v465 = vrot.slane %v464, 2
        %v466 = vmax.f32 %v464, %v465
        %v467 = vrot.slane %v466, 1
        %v468 = vmax.f32 %v466, %v467
        %v469 = vlaneseq
        %v470 = vshrl.u32 %v469, 7
        %vm471 = vcmp.ge.f32.partialorder %v453, %v462
        %vm472 = vcmp.ge.f32.partialorder %v455, %v468
        %v473 = vsel %vm471, %v470, 8
        %v474 = vsel %vm472, %v470, 8
        %v475 = vrot.slane %v473, 4
        %vm476 = vcmp.lt.s32.totalorder %v473, %v475
        %v477 = vsel %vm476, %v473, %v475
        %v478 = vrot.slane %v477, 2
        %vm479 = vcmp.lt.s32.totalorder %v477, %v478
        %v480 = vsel %vm479, %v477, %v478
        %v481 = vrot.slane %v480, 1
        %vm482 = vcmp.lt.s32.totalorder %v480, %v481
        %v483 = vsel %vm482, %v480, %v481
        %v484 = vrot.slane %v474, 4
        %vm485 = vcmp.lt.s32.totalorder %v474, %v484
        %v486 = vsel %vm485, %v474, %v484
        %v487 = vrot.slane %v486, 2
        %vm488 = vcmp.lt.s32.totalorder %v486, %v487
        %v489 = vsel %vm488, %v486, %v487
        %v490 = vrot.slane %v489, 1
        %vm491 = vcmp.lt.s32.totalorder %v489, %v490
        %v492 = vsel %vm491, %v489, %v490
        %vm493 = vcmp.eq.s32.totalorder %v470, %v483
        %vm494 = vcmp.eq.s32.totalorder %v470, %v492
        %v495 = vsel %vm493, 1, 0
        %v496 = vsel %vm494, 1, 0
        %v497 = vcvt.s32.f32 %v495
        %v498 = vcvt.s32.f32 %v496
        %v500 = vpack.c.bf16 %v367, %v367
        %v501 = vpack.c.bf16 %v376, %v376
        %502 = vst [vmem:[#allocation2] sm:$0xff] 0.0
        %vm503 = vcmask 1040384
        %v504 = vsel %vm503, %v497, -inf
        %v505 = vsel %vm503, %v498, -inf
        %v506 = vmax.f32 %v504, %v505
        %507 = vmax.xlane.f32.xlu0 %v506
        %v508 = vpop.xlane.xlu0 %507
        %v509 = vrot.slane %v508, 4
        %v510 = vmax.f32 %v508, %v509
        %v511 = vrot.slane %v510, 2
        %v512 = vmax.f32 %v510, %v511
        %v513 = vrot.slane %v512, 1
        %v514 = vmax.f32 %v512, %v513
        %s515 = vtos %v514
        %p516 = scmp.gt.f32.partialorder %s515, 0.0
        // Predicated region
        $region49: #{tpu_custom_call.1} parent=47 // pred_check
          %p517 = pneg %p516
        $region50: #{tpu_custom_call.1} parent=47 // pred_check_branch
          %519 = sbr.rel (%p517) target = $region52
        $region51: #{tpu_custom_call.1} parent=47 // pred_region
          %v520 = vld [vmem:[%s3] sm:$0xf]
          %v521 = vld [vmem:[%s3 + $0x4] sm:$0xf]
          %v522 = vld [vmem:[%s4] sm:$0xff]
          %v523 = vld [vmem:[%s4 + $0x8] sm:$0xff]
          %525 = vset.pattern.permute.xlu0 0
          %526 = vperm.xlu0 %525, %v522
          %v527 = vpop.permute.xlu0 %526
          %530 = vset.pattern.permute.xlu0 0
          %531 = vperm.xlu0 %530, %v523
          %v532 = vpop.permute.xlu0 %531
          %v536 = vunpack.c.l.b16 %v520
          %v537 = vunpack.c.l.b16 %v521
          %v538 = vpack.c.b16 %v537, %v536
          %v540 = vsel %vm377, %v538, 0
          %vm542 = vcmask 1041408
          %v544 = vsel %vm542, %v500, 0
          %v547 = vsel %vm542, %v501, 0
          %549 = vmatprep.subr.bf16.mxu0 0
          %550 = vmatpush1.bf16.msra.mxu0 0
          %551 = vmatprep.subr.bf16.mxu0 0
          %552 = vmatpush1.bf16.msra.mxu0 0
          %553 = vmatprep.subr.bf16.mxu0 0
          %554 = vmatpush1.bf16.msra.mxu0 0
          %555 = vmatprep.subr.bf16.mxu0 0
          %556 = vmatpush1.bf16.msra.mxu0 0
          %557 = vmatprep.subr.bf16.mxu0 0
          %558 = vmatpush1.bf16.msra.mxu0 0
          %559 = vmatprep.subr.bf16.mxu0 0
          %560 = vmatpush1.bf16.msra.mxu0 0
          %561 = vmatprep.subr.bf16.mxu0 0
          %562 = vmatpush1.bf16.msra.mxu0 0
          %563 = vmatprep.subr.bf16.mxu0 %v547
          %564 = vmatpush1.bf16.msra.mxu0 %v544
          %565 = vmatprep.subr.bf16.mxu0 0
          %566 = vmatpush2.bf16.msra.mxu0 0
          %567 = vmatprep.subr.bf16.mxu0 0
          %568 = vmatpush2.bf16.msra.mxu0 0
          %569 = vmatprep.subr.bf16.mxu0 0
          %570 = vmatpush2.bf16.msra.mxu0 0
          %571 = vmatprep.subr.bf16.mxu0 0
          %572 = vmatpush2.bf16.msra.mxu0 0
          %573 = vmatprep.subr.bf16.mxu0 0
          %574 = vmatpush2.bf16.msra.mxu0 0
          %575 = vmatprep.subr.bf16.mxu0 0
          %576 = vmatpush2.bf16.msra.mxu0 0
          %577 = vmatprep.subr.bf16.mxu0 0
          %578 = vmatpush2.bf16.msra.mxu0 0
          %579 = vmatprep.subr.bf16.mxu0 0
          %580 = vmatpush2.bf16.msra.mxu0 0
          %581 = vmatprep.mubr.bf16.mxu0 0
          %582 = vmatmul.mubr.bf16.gmra.mxu0 %v540
          %v583 = vpop.f32.mrf.mxu0
          %v584 = vadd.f32 %v527, %v583
          %v585 = vpop.f32.mrf.mxu0
          %v586 = vadd.f32 %v527, %v585
          %v587 = vpop.f32.mrf.mxu0
          %v588 = vadd.f32 %v532, %v587
          %v589 = vpop.f32.mrf.mxu0
          %v590 = vadd.f32 %v532, %v589
          %591 = vdwg.mxu0
          %v592 = vmul.f32 %v584, 0.5
          %v593 = vmul.f32 %v586, 0.5
          %v594 = vmul.f32 %v588, 0.5
          %v595 = vmul.f32 %v590, 0.5
          %v596 = vmul.f32 %v584, 0.044715
          %v597 = vmul.f32 %v586, 0.044715
          %v598 = vmul.f32 %v588, 0.044715
          %v599 = vmul.f32 %v590, 0.044715
          %v600 = vmul.f32 %v596, %v584
          %v601 = vmul.f32 %v597, %v586
          %v602 = vmul.f32 %v598, %v588
          %v603 = vmul.f32 %v599, %v590
          %v604 = vmul.f32 %v600, %v584
          %v605 = vmul.f32 %v601, %v586
          %v606 = vmul.f32 %v602, %v588
          %v607 = vmul.f32 %v603, %v590
          %v608 = vadd.f32 %v584, %v604
          %v609 = vadd.f32 %v586, %v605
          %v610 = vadd.f32 %v588, %v606
          %v611 = vadd.f32 %v590, %v607
          %v612 = vmul.f32 %v608, 0.7978846
          %v613 = vmul.f32 %v609, 0.7978846
          %v614 = vmul.f32 %v610, 0.7978846
          %v615 = vmul.f32 %v611, 0.7978846
          %v616 = vtanh.pop %v612
          %v617 = vtanh.pop %v613
          %v618 = vtanh.pop %v614
          %v619 = vtanh.pop %v615
          %v620 = vadd.f32 %v616, 1.0
          %v621 = vadd.f32 %v617, 1.0
          %v622 = vadd.f32 %v618, 1.0
          %v623 = vadd.f32 %v619, 1.0
          %v624 = vmul.f32 %v592, %v620
          %v625 = vmul.f32 %v593, %v621
          %v626 = vmul.f32 %v594, %v622
          %v627 = vmul.f32 %v595, %v623
          %v628 = vld [vmem:[%s5] sm:$0x3]
          %v629 = vpack.c.bf16 %v626, %v624
          %v630 = vpack.c.bf16 %v627, %v625
          %vm631 = vcmask 130048
          %v633 = vsel %vm631, %v628, 0
          %635 = vmatprep.subr.bf16.mxu0 0
          %636 = vmatpush1.bf16.msra.mxu0 0
          %637 = vmatprep.subr.bf16.mxu0 0
          %638 = vmatpush1.bf16.msra.mxu0 0
          %639 = vmatprep.subr.bf16.mxu0 0
          %640 = vmatpush1.bf16.msra.mxu0 0
          %641 = vmatprep.subr.bf16.mxu0 0
          %642 = vmatpush1.bf16.msra.mxu0 0
          %643 = vmatprep.subr.bf16.mxu0 0
          %644 = vmatpush1.bf16.msra.mxu0 0
          %645 = vmatprep.subr.bf16.mxu0 0
          %646 = vmatpush1.bf16.msra.mxu0 0
          %647 = vmatprep.subr.bf16.mxu0 0
          %648 = vmatpush1.bf16.msra.mxu0 0
          %649 = vmatprep.subr.bf16.mxu0 %v630
          %650 = vmatpush1.bf16.msra.mxu0 %v629
          %651 = vmatprep.subr.bf16.mxu0 0
          %652 = vmatpush2.bf16.msra.mxu0 0
          %653 = vmatprep.subr.bf16.mxu0 0
          %654 = vmatpush2.bf16.msra.mxu0 0
          %655 = vmatprep.subr.bf16.mxu0 0
          %656 = vmatpush2.bf16.msra.mxu0 0
          %657 = vmatprep.subr.bf16.mxu0 0
          %658 = vmatpush2.bf16.msra.mxu0 0
          %659 = vmatprep.subr.bf16.mxu0 0
          %660 = vmatpush2.bf16.msra.mxu0 0
          %661 = vmatprep.subr.bf16.mxu0 0
          %662 = vmatpush2.bf16.msra.mxu0 0
          %663 = vmatprep.subr.bf16.mxu0 0
          %664 = vmatpush2.bf16.msra.mxu0 0
          %665 = vmatprep.subr.bf16.mxu0 0
          %666 = vmatpush2.bf16.msra.mxu0 0
          %667 = vmatprep.mubr.bf16.mxu0 0
          %668 = vmatmul.mubr.bf16.gmra.mxu0 %v633
          %v669 = vpop.f32.mrf.mxu0
          %v670 = vadd.f32 0.0, %v669
          %v671 = vpop.f32.mrf.mxu0
          %v672 = vadd.f32 0.0, %v671
          %v673 = vpop.f32.mrf.mxu0
          %v674 = vpop.f32.mrf.mxu0
          %675 = vdwg.mxu0
          %v676 = vld [vmem:[#allocation2] sm:$0xff]
          %v677 = vlaneseq
          %v678 = vshrl.u32 %v677, 7
          %v679 = vsub.s32 0, %v678
          %v680 = vrot.slane %v497, %v679
          %v681 = vlaneseq
          %v682 = vshrl.u32 %v681, 7
          %v683 = vsub.s32 0, %v682
          %v684 = vrot.slane %v498, %v683
          %v685 = vmul.f32 %v680, %v670
          %v686 = vmul.f32 %v684, %v672
          %v689 = vcombine.low %v685, %v686
          %v691 = vadd.f32 %v676, %v689
          %692 = vst [vmem:[#allocation2] sm:$0xff] %v691
        $region52: #{tpu_custom_call.1} parent=47 // pred_fallthru
          _
        %vm693 = vcmask 1041409
        %v694 = vsel %vm693, %v497, -inf
        %v695 = vsel %vm693, %v498, -inf
        %v696 = vmax.f32 %v694, %v695
        %697 = vmax.xlane.f32.xlu0 %v696
        %v698 = vpop.xlane.xlu0 %697
        %v699 = vrot.slane %v698, 4
        %v700 = vmax.f32 %v698, %v699
        %v701 = vrot.slane %v700, 2
        %v702 = vmax.f32 %v700, %v701
        %v703 = vrot.slane %v702, 1
        %v704 = vmax.f32 %v702, %v703
        %s705 = vtos %v704
        %p706 = scmp.gt.f32.partialorder %s705, 0.0
        // Predicated region
        $region53: #{tpu_custom_call.1} parent=47 // pred_check
          %p707 = pneg %p706
        $region54: #{tpu_custom_call.1} parent=47 // pred_check_branch
          %709 = sbr.rel (%p707) target = $region56
        $region55: #{tpu_custom_call.1} parent=47 // pred_region
          %s710 = scalar_lea.vmem %s3, 8
          %v711 = vld [vmem:[%s710] sm:$0xf]
          %v712 = vld [vmem:[%s710 + $0x4] sm:$0xf]
          %v713 = vld [vmem:[%s4] sm:$0xff]
          %v714 = vld [vmem:[%s4 + $0x8] sm:$0xff]
          %716 = vset.pattern.permute.xlu0 1
          %717 = vperm.xlu0 %716, %v713
          %v718 = vpop.permute.xlu0 %717
          %721 = vset.pattern.permute.xlu0 1
          %722 = vperm.xlu0 %721, %v714
          %v723 = vpop.permute.xlu0 %722
          %v727 = vunpack.c.l.b16 %v711
          %v728 = vunpack.c.l.b16 %v712
          %v729 = vpack.c.b16 %v728, %v727
          %v731 = vsel %vm377, %v729, 0
          %vm733 = vcmask 1041408
          %v735 = vsel %vm733, %v500, 0
          %v738 = vsel %vm733, %v501, 0
          %740 = vmatprep.subr.bf16.mxu0 0
          %741 = vmatpush1.bf16.msra.mxu0 0
          %742 = vmatprep.subr.bf16.mxu0 0
          %743 = vmatpush1.bf16.msra.mxu0 0
          %744 = vmatprep.subr.bf16.mxu0 0
          %745 = vmatpush1.bf16.msra.mxu0 0
          %746 = vmatprep.subr.bf16.mxu0 0
          %747 = vmatpush1.bf16.msra.mxu0 0
          %748 = vmatprep.subr.bf16.mxu0 0
          %749 = vmatpush1.bf16.msra.mxu0 0
          %750 = vmatprep.subr.bf16.mxu0 0
          %751 = vmatpush1.bf16.msra.mxu0 0
          %752 = vmatprep.subr.bf16.mxu0 0
          %753 = vmatpush1.bf16.msra.mxu0 0
          %754 = vmatprep.subr.bf16.mxu0 %v738
          %755 = vmatpush1.bf16.msra.mxu0 %v735
          %756 = vmatprep.subr.bf16.mxu0 0
          %757 = vmatpush2.bf16.msra.mxu0 0
          %758 = vmatprep.subr.bf16.mxu0 0
          %759 = vmatpush2.bf16.msra.mxu0 0
          %760 = vmatprep.subr.bf16.mxu0 0
          %761 = vmatpush2.bf16.msra.mxu0 0
          %762 = vmatprep.subr.bf16.mxu0 0
          %763 = vmatpush2.bf16.msra.mxu0 0
          %764 = vmatprep.subr.bf16.mxu0 0
          %765 = vmatpush2.bf16.msra.mxu0 0
          %766 = vmatprep.subr.bf16.mxu0 0
          %767 = vmatpush2.bf16.msra.mxu0 0
          %768 = vmatprep.subr.bf16.mxu0 0
          %769 = vmatpush2.bf16.msra.mxu0 0
          %770 = vmatprep.subr.bf16.mxu0 0
          %771 = vmatpush2.bf16.msra.mxu0 0
          %772 = vmatprep.mubr.bf16.mxu0 0
          %773 = vmatmul.mubr.bf16.gmra.mxu0 %v731
          %v774 = vpop.f32.mrf.mxu0
          %v775 = vadd.f32 %v718, %v774
          %v776 = vpop.f32.mrf.mxu0
          %v777 = vadd.f32 %v718, %v776
          %v778 = vpop.f32.mrf.mxu0
          %v779 = vadd.f32 %v723, %v778
          %v780 = vpop.f32.mrf.mxu0
          %v781 = vadd.f32 %v723, %v780
          %782 = vdwg.mxu0
          %v783 = vmul.f32 %v775, 0.5
          %v784 = vmul.f32 %v777, 0.5
          %v785 = vmul.f32 %v779, 0.5
          %v786 = vmul.f32 %v781, 0.5
          %v787 = vmul.f32 %v775, 0.044715
          %v788 = vmul.f32 %v777, 0.044715
          %v789 = vmul.f32 %v779, 0.044715
          %v790 = vmul.f32 %v781, 0.044715
          %v791 = vmul.f32 %v787, %v775
          %v792 = vmul.f32 %v788, %v777
          %v793 = vmul.f32 %v789, %v779
          %v794 = vmul.f32 %v790, %v781
          %v795 = vmul.f32 %v791, %v775
          %v796 = vmul.f32 %v792, %v777
          %v797 = vmul.f32 %v793, %v779
          %v798 = vmul.f32 %v794, %v781
          %v799 = vadd.f32 %v775, %v795
          %v800 = vadd.f32 %v777, %v796
          %v801 = vadd.f32 %v779, %v797
          %v802 = vadd.f32 %v781, %v798
          %v803 = vmul.f32 %v799, 0.7978846
          %v804 = vmul.f32 %v800, 0.7978846
          %v805 = vmul.f32 %v801, 0.7978846
          %v806 = vmul.f32 %v802, 0.7978846
          %v807 = vtanh.pop %v803
          %v808 = vtanh.pop %v804
          %v809 = vtanh.pop %v805
          %v810 = vtanh.pop %v806
          %v811 = vadd.f32 %v807, 1.0
          %v812 = vadd.f32 %v808, 1.0
          %v813 = vadd.f32 %v809, 1.0
          %v814 = vadd.f32 %v810, 1.0
          %v815 = vmul.f32 %v783, %v811
          %v816 = vmul.f32 %v784, %v812
          %v817 = vmul.f32 %v785, %v813
          %v818 = vmul.f32 %v786, %v814
          %s819 = scalar_lea.vmem %s5, 2
          %v820 = vld [vmem:[%s819] sm:$0x3]
          %v821 = vpack.c.bf16 %v817, %v815
          %v822 = vpack.c.bf16 %v818, %v816
          %vm823 = vcmask 130048
          %v825 = vsel %vm823, %v820, 0
          %827 = vmatprep.subr.bf16.mxu0 0
          %828 = vmatpush1.bf16.msra.mxu0 0
          %829 = vmatprep.subr.bf16.mxu0 0
          %830 = vmatpush1.bf16.msra.mxu0 0
          %831 = vmatprep.subr.bf16.mxu0 0
          %832 = vmatpush1.bf16.msra.mxu0 0
          %833 = vmatprep.subr.bf16.mxu0 0
          %834 = vmatpush1.bf16.msra.mxu0 0
          %835 = vmatprep.subr.bf16.mxu0 0
          %836 = vmatpush1.bf16.msra.mxu0 0
          %837 = vmatprep.subr.bf16.mxu0 0
          %838 = vmatpush1.bf16.msra.mxu0 0
          %839 = vmatprep.subr.bf16.mxu0 0
          %840 = vmatpush1.bf16.msra.mxu0 0
          %841 = vmatprep.subr.bf16.mxu0 %v822
          %842 = vmatpush1.bf16.msra.mxu0 %v821
          %843 = vmatprep.subr.bf16.mxu0 0
          %844 = vmatpush2.bf16.msra.mxu0 0
          %845 = vmatprep.subr.bf16.mxu0 0
          %846 = vmatpush2.bf16.msra.mxu0 0
          %847 = vmatprep.subr.bf16.mxu0 0
          %848 = vmatpush2.bf16.msra.mxu0 0
          %849 = vmatprep.subr.bf16.mxu0 0
          %850 = vmatpush2.bf16.msra.mxu0 0
          %851 = vmatprep.subr.bf16.mxu0 0
          %852 = vmatpush2.bf16.msra.mxu0 0
          %853 = vmatprep.subr.bf16.mxu0 0
          %854 = vmatpush2.bf16.msra.mxu0 0
          %855 = vmatprep.subr.bf16.mxu0 0
          %856 = vmatpush2.bf16.msra.mxu0 0
          %857 = vmatprep.subr.bf16.mxu0 0
          %858 = vmatpush2.bf16.msra.mxu0 0
          %859 = vmatprep.mubr.bf16.mxu0 0
          %860 = vmatmul.mubr.bf16.gmra.mxu0 %v825
          %v861 = vpop.f32.mrf.mxu0
          %v862 = vadd.f32 0.0, %v861
          %v863 = vpop.f32.mrf.mxu0
          %v864 = vadd.f32 0.0, %v863
          %v865 = vpop.f32.mrf.mxu0
          %v866 = vpop.f32.mrf.mxu0
          %867 = vdwg.mxu0
          %v868 = vld [vmem:[#allocation2] sm:$0xff]
          %v869 = vlaneseq
          %v870 = vshrl.u32 %v869, 7
          %v871 = vsub.s32 1, %v870
          %v872 = vrot.slane %v497, %v871
          %v873 = vlaneseq
          %v874 = vshrl.u32 %v873, 7
          %v875 = vsub.s32 1, %v874
          %v876 = vrot.slane %v498, %v875
          %v877 = vmul.f32 %v872, %v862
          %v878 = vmul.f32 %v876, %v864
          %v881 = vcombine.low %v877, %v878
          %v883 = vadd.f32 %v868, %v881
          %884 = vst [vmem:[#allocation2] sm:$0xff] %v883
        $region56: #{tpu_custom_call.1} parent=47 // pred_fallthru
          _
        %vm885 = vcmask 1042434
        %v886 = vsel %vm885, %v497, -inf
        %v887 = vsel %vm885, %v498, -inf
        %v888 = vmax.f32 %v886, %v887
        %889 = vmax.xlane.f32.xlu0 %v888
        %v890 = vpop.xlane.xlu0 %889
        %v891 = vrot.slane %v890, 4
        %v892 = vmax.f32 %v890, %v891
        %v893 = vrot.slane %v892, 2
        %v894 = vmax.f32 %v892, %v893
        %v895 = vrot.slane %v894, 1
        %v896 = vmax.f32 %v894, %v895
        %s897 = vtos %v896
        %p898 = scmp.gt.f32.partialorder %s897, 0.0
        // Predicated region
        $region57: #{tpu_custom_call.1} parent=47 // pred_check
          %p899 = pneg %p898
        $region58: #{tpu_custom_call.1} parent=47 // pred_check_branch
          %901 = sbr.rel (%p899) target = $region60
        $region59: #{tpu_custom_call.1} parent=47 // pred_region
          %s902 = scalar_lea.vmem %s3, 16
          %v903 = vld [vmem:[%s902] sm:$0xf]
          %v904 = vld [vmem:[%s902 + $0x4] sm:$0xf]
          %v905 = vld [vmem:[%s4] sm:$0xff]
          %v906 = vld [vmem:[%s4 + $0x8] sm:$0xff]
          %908 = vset.pattern.permute.xlu0 2
          %909 = vperm.xlu0 %908, %v905
          %v910 = vpop.permute.xlu0 %909
          %913 = vset.pattern.permute.xlu0 2
          %914 = vperm.xlu0 %913, %v906
          %v915 = vpop.permute.xlu0 %914
          %v919 = vunpack.c.l.b16 %v903
          %v920 = vunpack.c.l.b16 %v904
          %v921 = vpack.c.b16 %v920, %v919
          %v923 = vsel %vm377, %v921, 0
          %vm925 = vcmask 1041408
          %v927 = vsel %vm925, %v500, 0
          %v930 = vsel %vm925, %v501, 0
          %932 = vmatprep.subr.bf16.mxu0 0
          %933 = vmatpush1.bf16.msra.mxu0 0
          %934 = vmatprep.subr.bf16.mxu0 0
          %935 = vmatpush1.bf16.msra.mxu0 0
          %936 = vmatprep.subr.bf16.mxu0 0
          %937 = vmatpush1.bf16.msra.mxu0 0
          %938 = vmatprep.subr.bf16.mxu0 0
          %939 = vmatpush1.bf16.msra.mxu0 0
          %940 = vmatprep.subr.bf16.mxu0 0
          %941 = vmatpush1.bf16.msra.mxu0 0
          %942 = vmatprep.subr.bf16.mxu0 0
          %943 = vmatpush1.bf16.msra.mxu0 0
          %944 = vmatprep.subr.bf16.mxu0 0
          %945 = vmatpush1.bf16.msra.mxu0 0
          %946 = vmatprep.subr.bf16.mxu0 %v930
          %947 = vmatpush1.bf16.msra.mxu0 %v927
          %948 = vmatprep.subr.bf16.mxu0 0
          %949 = vmatpush2.bf16.msra.mxu0 0
          %950 = vmatprep.subr.bf16.mxu0 0
          %951 = vmatpush2.bf16.msra.mxu0 0
          %952 = vmatprep.subr.bf16.mxu0 0
          %953 = vmatpush2.bf16.msra.mxu0 0
          %954 = vmatprep.subr.bf16.mxu0 0
          %955 = vmatpush2.bf16.msra.mxu0 0
          %956 = vmatprep.subr.bf16.mxu0 0
          %957 = vmatpush2.bf16.msra.mxu0 0
          %958 = vmatprep.subr.bf16.mxu0 0
          %959 = vmatpush2.bf16.msra.mxu0 0
          %960 = vmatprep.subr.bf16.mxu0 0
          %961 = vmatpush2.bf16.msra.mxu0 0
          %962 = vmatprep.subr.bf16.mxu0 0
          %963 = vmatpush2.bf16.msra.mxu0 0
          %964 = vmatprep.mubr.bf16.mxu0 0
          %965 = vmatmul.mubr.bf16.gmra.mxu0 %v923
          %v966 = vpop.f32.mrf.mxu0
          %v967 = vadd.f32 %v910, %v966
          %v968 = vpop.f32.mrf.mxu0
          %v969 = vadd.f32 %v910, %v968
          %v970 = vpop.f32.mrf.mxu0
          %v971 = vadd.f32 %v915, %v970
          %v972 = vpop.f32.mrf.mxu0
          %v973 = vadd.f32 %v915, %v972
          %974 = vdwg.mxu0
          %v975 = vmul.f32 %v967, 0.5
          %v976 = vmul.f32 %v969, 0.5
          %v977 = vmul.f32 %v971, 0.5
          %v978 = vmul.f32 %v973, 0.5
          %v979 = vmul.f32 %v967, 0.044715
          %v980 = vmul.f32 %v969, 0.044715
          %v981 = vmul.f32 %v971, 0.044715
          %v982 = vmul.f32 %v973, 0.044715
          %v983 = vmul.f32 %v979, %v967
          %v984 = vmul.f32 %v980, %v969
          %v985 = vmul.f32 %v981, %v971
          %v986 = vmul.f32 %v982, %v973
          %v987 = vmul.f32 %v983, %v967
          %v988 = vmul.f32 %v984, %v969
          %v989 = vmul.f32 %v985, %v971
          %v990 = vmul.f32 %v986, %v973
          %v991 = vadd.f32 %v967, %v987
          %v992 = vadd.f32 %v969, %v988
          %v993 = vadd.f32 %v971, %v989
          %v994 = vadd.f32 %v973, %v990
          %v995 = vmul.f32 %v991, 0.7978846
          %v996 = vmul.f32 %v992, 0.7978846
          %v997 = vmul.f32 %v993, 0.7978846
          %v998 = vmul.f32 %v994, 0.7978846
          %v999 = vtanh.pop %v995
          %v1000 = vtanh.pop %v996
          %v1001 = vtanh.pop %v997
          %v1002 = vtanh.pop %v998
          %v1003 = vadd.f32 %v999, 1.0
          %v1004 = vadd.f32 %v1000, 1.0
          %v1005 = vadd.f32 %v1001, 1.0
          %v1006 = vadd.f32 %v1002, 1.0
          %v1007 = vmul.f32 %v975, %v1003
          %v1008 = vmul.f32 %v976, %v1004
          %v1009 = vmul.f32 %v977, %v1005
          %v1010 = vmul.f32 %v978, %v1006
          %s1011 = scalar_lea.vmem %s5, 4
          %v1012 = vld [vmem:[%s1011] sm:$0x3]
          %v1013 = vpack.c.bf16 %v1009, %v1007
          %v1014 = vpack.c.bf16 %v1010, %v1008
          %vm1015 = vcmask 130048
          %v1017 = vsel %vm1015, %v1012, 0
          %1019 = vmatprep.subr.bf16.mxu0 0
          %1020 = vmatpush1.bf16.msra.mxu0 0
          %1021 = vmatprep.subr.bf16.mxu0 0
          %1022 = vmatpush1.bf16.msra.mxu0 0
          %1023 = vmatprep.subr.bf16.mxu0 0
          %1024 = vmatpush1.bf16.msra.mxu0 0
          %1025 = vmatprep.subr.bf16.mxu0 0
          %1026 = vmatpush1.bf16.msra.mxu0 0
          %1027 = vmatprep.subr.bf16.mxu0 0
          %1028 = vmatpush1.bf16.msra.mxu0 0
          %1029 = vmatprep.subr.bf16.mxu0 0
          %1030 = vmatpush1.bf16.msra.mxu0 0
          %1031 = vmatprep.subr.bf16.mxu0 0
          %1032 = vmatpush1.bf16.msra.mxu0 0
          %1033 = vmatprep.subr.bf16.mxu0 %v1014
          %1034 = vmatpush1.bf16.msra.mxu0 %v1013
          %1035 = vmatprep.subr.bf16.mxu0 0
          %1036 = vmatpush2.bf16.msra.mxu0 0
          %1037 = vmatprep.subr.bf16.mxu0 0
          %1038 = vmatpush2.bf16.msra.mxu0 0
          %1039 = vmatprep.subr.bf16.mxu0 0
          %1040 = vmatpush2.bf16.msra.mxu0 0
          %1041 = vmatprep.subr.bf16.mxu0 0
          %1042 = vmatpush2.bf16.msra.mxu0 0
          %1043 = vmatprep.subr.bf16.mxu0 0
          %1044 = vmatpush2.bf16.msra.mxu0 0
          %1045 = vmatprep.subr.bf16.mxu0 0
          %1046 = vmatpush2.bf16.msra.mxu0 0
          %1047 = vmatprep.subr.bf16.mxu0 0
          %1048 = vmatpush2.bf16.msra.mxu0 0
          %1049 = vmatprep.subr.bf16.mxu0 0
          %1050 = vmatpush2.bf16.msra.mxu0 0
          %1051 = vmatprep.mubr.bf16.mxu0 0
          %1052 = vmatmul.mubr.bf16.gmra.mxu0 %v1017
          %v1053 = vpop.f32.mrf.mxu0
          %v1054 = vadd.f32 0.0, %v1053
          %v1055 = vpop.f32.mrf.mxu0
          %v1056 = vadd.f32 0.0, %v1055
          %v1057 = vpop.f32.mrf.mxu0
          %v1058 = vpop.f32.mrf.mxu0
          %1059 = vdwg.mxu0
          %v1060 = vld [vmem:[#allocation2] sm:$0xff]
          %v1061 = vlaneseq
          %v1062 = vshrl.u32 %v1061, 7
          %v1063 = vsub.s32 2, %v1062
          %v1064 = vrot.slane %v497, %v1063
          %v1065 = vlaneseq
          %v1066 = vshrl.u32 %v1065, 7
          %v1067 = vsub.s32 2, %v1066
          %v1068 = vrot.slane %v498, %v1067
          %v1069 = vmul.f32 %v1064, %v1054
          %v1070 = vmul.f32 %v1068, %v1056
          %v1073 = vcombine.low %v1069, %v1070
          %v1075 = vadd.f32 %v1060, %v1073
          %1076 = vst [vmem:[#allocation2] sm:$0xff] %v1075
        $region60: #{tpu_custom_call.1} parent=47 // pred_fallthru
          _
        %vm1077 = vcmask 1043459
        %v1078 = vsel %vm1077, %v497, -inf
        %v1079 = vsel %vm1077, %v498, -inf
        %v1080 = vmax.f32 %v1078, %v1079
        %1081 = vmax.xlane.f32.xlu0 %v1080
        %v1082 = vpop.xlane.xlu0 %1081
        %v1083 = vrot.slane %v1082, 4
        %v1084 = vmax.f32 %v1082, %v1083
        %v1085 = vrot.slane %v1084, 2
        %v1086 = vmax.f32 %v1084, %v1085
        %v1087 = vrot.slane %v1086, 1
        %v1088 = vmax.f32 %v1086, %v1087
        %s1089 = vtos %v1088
        %p1090 = scmp.gt.f32.partialorder %s1089, 0.0
        // Predicated region
        $region61: #{tpu_custom_call.1} parent=47 // pred_check
          %p1091 = pneg %p1090
        $region62: #{tpu_custom_call.1} parent=47 // pred_check_branch
          %1093 = sbr.rel (%p1091) target = $region64
        $region63: #{tpu_custom_call.1} parent=47 // pred_region
          %s1094 = scalar_lea.vmem %s3, 24
          %v1095 = vld [vmem:[%s1094] sm:$0xf]
          %v1096 = vld [vmem:[%s1094 + $0x4] sm:$0xf]
          %v1097 = vld [vmem:[%s4] sm:$0xff]
          %v1098 = vld [vmem:[%s4 + $0x8] sm:$0xff]
          %1100 = vset.pattern.permute.xlu0 3
          %1101 = vperm.xlu0 %1100, %v1097
          %v1102 = vpop.permute.xlu0 %1101
          %1105 = vset.pattern.permute.xlu0 3
          %1106 = vperm.xlu0 %1105, %v1098
          %v1107 = vpop.permute.xlu0 %1106
          %v1111 = vunpack.c.l.b16 %v1095
          %v1112 = vunpack.c.l.b16 %v1096
          %v1113 = vpack.c.b16 %v1112, %v1111
          %v1115 = vsel %vm377, %v1113, 0
          %vm1117 = vcmask 1041408
          %v1119 = vsel %vm1117, %v500, 0
          %v1122 = vsel %vm1117, %v501, 0
          %1124 = vmatprep.subr.bf16.mxu0 0
          %1125 = vmatpush1.bf16.msra.mxu0 0
          %1126 = vmatprep.subr.bf16.mxu0 0
          %1127 = vmatpush1.bf16.msra.mxu0 0
          %1128 = vmatprep.subr.bf16.mxu0 0
          %1129 = vmatpush1.bf16.msra.mxu0 0
          %1130 = vmatprep.subr.bf16.mxu0 0
          %1131 = vmatpush1.bf16.msra.mxu0 0
          %1132 = vmatprep.subr.bf16.mxu0 0
          %1133 = vmatpush1.bf16.msra.mxu0 0
          %1134 = vmatprep.subr.bf16.mxu0 0
          %1135 = vmatpush1.bf16.msra.mxu0 0
          %1136 = vmatprep.subr.bf16.mxu0 0
          %1137 = vmatpush1.bf16.msra.mxu0 0
          %1138 = vmatprep.subr.bf16.mxu0 %v1122
          %1139 = vmatpush1.bf16.msra.mxu0 %v1119
          %1140 = vmatprep.subr.bf16.mxu0 0
          %1141 = vmatpush2.bf16.msra.mxu0 0
          %1142 = vmatprep.subr.bf16.mxu0 0
          %1143 = vmatpush2.bf16.msra.mxu0 0
          %1144 = vmatprep.subr.bf16.mxu0 0
          %1145 = vmatpush2.bf16.msra.mxu0 0
          %1146 = vmatprep.subr.bf16.mxu0 0
          %1147 = vmatpush2.bf16.msra.mxu0 0
          %1148 = vmatprep.subr.bf16.mxu0 0
          %1149 = vmatpush2.bf16.msra.mxu0 0
          %1150 = vmatprep.subr.bf16.mxu0 0
          %1151 = vmatpush2.bf16.msra.mxu0 0
          %1152 = vmatprep.subr.bf16.mxu0 0
          %1153 = vmatpush2.bf16.msra.mxu0 0
          %1154 = vmatprep.subr.bf16.mxu0 0
          %1155 = vmatpush2.bf16.msra.mxu0 0
          %1156 = vmatprep.mubr.bf16.mxu0 0
          %1157 = vmatmul.mubr.bf16.gmra.mxu0 %v1115
          %v1158 = vpop.f32.mrf.mxu0
          %v1159 = vadd.f32 %v1102, %v1158
          %v1160 = vpop.f32.mrf.mxu0
          %v1161 = vadd.f32 %v1102, %v1160
          %v1162 = vpop.f32.mrf.mxu0
          %v1163 = vadd.f32 %v1107, %v1162
          %v1164 = vpop.f32.mrf.mxu0
          %v1165 = vadd.f32 %v1107, %v1164
          %1166 = vdwg.mxu0
          %v1167 = vmul.f32 %v1159, 0.5
          %v1168 = vmul.f32 %v1161, 0.5
          %v1169 = vmul.f32 %v1163, 0.5
          %v1170 = vmul.f32 %v1165, 0.5
          %v1171 = vmul.f32 %v1159, 0.044715
          %v1172 = vmul.f32 %v1161, 0.044715
          %v1173 = vmul.f32 %v1163, 0.044715
          %v1174 = vmul.f32 %v1165, 0.044715
          %v1175 = vmul.f32 %v1171, %v1159
          %v1176 = vmul.f32 %v1172, %v1161
          %v1177 = vmul.f32 %v1173, %v1163
          %v1178 = vmul.f32 %v1174, %v1165
          %v1179 = vmul.f32 %v1175, %v1159
          %v1180 = vmul.f32 %v1176, %v1161
          %v1181 = vmul.f32 %v1177, %v1163
          %v1182 = vmul.f32 %v1178, %v1165
          %v1183 = vadd.f32 %v1159, %v1179
          %v1184 = vadd.f32 %v1161, %v1180
          %v1185 = vadd.f32 %v1163, %v1181
          %v1186 = vadd.f32 %v1165, %v1182
          %v1187 = vmul.f32 %v1183, 0.7978846
          %v1188 = vmul.f32 %v1184, 0.7978846
          %v1189 = vmul.f32 %v1185, 0.7978846
          %v1190 = vmul.f32 %v1186, 0.7978846
          %v1191 = vtanh.pop %v1187
          %v1192 = vtanh.pop %v1188
          %v1193 = vtanh.pop %v1189
          %v1194 = vtanh.pop %v1190
          %v1195 = vadd.f32 %v1191, 1.0
          %v1196 = vadd.f32 %v1192, 1.0
          %v1197 = vadd.f32 %v1193, 1.0
          %v1198 = vadd.f32 %v1194, 1.0
          %v1199 = vmul.f32 %v1167, %v1195
          %v1200 = vmul.f32 %v1168, %v1196
          %v1201 = vmul.f32 %v1169, %v1197
          %v1202 = vmul.f32 %v1170, %v1198
          %s1203 = scalar_lea.vmem %s5, 6
          %v1204 = vld [vmem:[%s1203] sm:$0x3]
          %v1205 = vpack.c.bf16 %v1201, %v1199
          %v1206 = vpack.c.bf16 %v1202, %v1200
          %vm1207 = vcmask 130048
          %v1209 = vsel %vm1207, %v1204, 0
          %1211 = vmatprep.subr.bf16.mxu0 0
          %1212 = vmatpush1.bf16.msra.mxu0 0
          %1213 = vmatprep.subr.bf16.mxu0 0
          %1214 = vmatpush1.bf16.msra.mxu0 0
          %1215 = vmatprep.subr.bf16.mxu0 0
          %1216 = vmatpush1.bf16.msra.mxu0 0
          %1217 = vmatprep.subr.bf16.mxu0 0
          %1218 = vmatpush1.bf16.msra.mxu0 0
          %1219 = vmatprep.subr.bf16.mxu0 0
          %1220 = vmatpush1.bf16.msra.mxu0 0
          %1221 = vmatprep.subr.bf16.mxu0 0
          %1222 = vmatpush1.bf16.msra.mxu0 0
          %1223 = vmatprep.subr.bf16.mxu0 0
          %1224 = vmatpush1.bf16.msra.mxu0 0
          %1225 = vmatprep.subr.bf16.mxu0 %v1206
          %1226 = vmatpush1.bf16.msra.mxu0 %v1205
          %1227 = vmatprep.subr.bf16.mxu0 0
          %1228 = vmatpush2.bf16.msra.mxu0 0
          %1229 = vmatprep.subr.bf16.mxu0 0
          %1230 = vmatpush2.bf16.msra.mxu0 0
          %1231 = vmatprep.subr.bf16.mxu0 0
          %1232 = vmatpush2.bf16.msra.mxu0 0
          %1233 = vmatprep.subr.bf16.mxu0 0
          %1234 = vmatpush2.bf16.msra.mxu0 0
          %1235 = vmatprep.subr.bf16.mxu0 0
          %1236 = vmatpush2.bf16.msra.mxu0 0
          %1237 = vmatprep.subr.bf16.mxu0 0
          %1238 = vmatpush2.bf16.msra.mxu0 0
          %1239 = vmatprep.subr.bf16.mxu0 0
          %1240 = vmatpush2.bf16.msra.mxu0 0
          %1241 = vmatprep.subr.bf16.mxu0 0
          %1242 = vmatpush2.bf16.msra.mxu0 0
          %1243 = vmatprep.mubr.bf16.mxu0 0
          %1244 = vmatmul.mubr.bf16.gmra.mxu0 %v1209
          %v1245 = vpop.f32.mrf.mxu0
          %v1246 = vadd.f32 0.0, %v1245
          %v1247 = vpop.f32.mrf.mxu0
          %v1248 = vadd.f32 0.0, %v1247
          %v1249 = vpop.f32.mrf.mxu0
          %v1250 = vpop.f32.mrf.mxu0
          %1251 = vdwg.mxu0
          %v1252 = vld [vmem:[#allocation2] sm:$0xff]
          %v1253 = vlaneseq
          %v1254 = vshrl.u32 %v1253, 7
          %v1255 = vsub.s32 3, %v1254
          %v1256 = vrot.slane %v497, %v1255
          %v1257 = vlaneseq
          %v1258 = vshrl.u32 %v1257, 7
          %v1259 = vsub.s32 3, %v1258
          %v1260 = vrot.slane %v498, %v1259
          %v1261 = vmul.f32 %v1256, %v1246
          %v1262 = vmul.f32 %v1260, %v1248
          %v1265 = vcombine.low %v1261, %v1262
          %v1267 = vadd.f32 %v1252, %v1265
          %1268 = vst [vmem:[#allocation2] sm:$0xff] %v1267
        $region64: #{tpu_custom_call.1} parent=47 // pred_fallthru
          _
        %vm1269 = vcmask 1044484
        %v1270 = vsel %vm1269, %v497, -inf
        %v1271 = vsel %vm1269, %v498, -inf
        %v1272 = vmax.f32 %v1270, %v1271
        %1273 = vmax.xlane.f32.xlu0 %v1272
        %v1274 = vpop.xlane.xlu0 %1273
        %v1275 = vrot.slane %v1274, 4
        %v1276 = vmax.f32 %v1274, %v1275
        %v1277 = vrot.slane %v1276, 2
        %v1278 = vmax.f32 %v1276, %v1277
        %v1279 = vrot.slane %v1278, 1
        %v1280 = vmax.f32 %v1278, %v1279
        %s1281 = vtos %v1280
        %p1282 = scmp.gt.f32.partialorder %s1281, 0.0
        // Predicated region
        $region65: #{tpu_custom_call.1} parent=47 // pred_check
          %p1283 = pneg %p1282
        $region66: #{tpu_custom_call.1} parent=47 // pred_check_branch
          %1285 = sbr.rel (%p1283) target = $region68
        $region67: #{tpu_custom_call.1} parent=47 // pred_region
          %s1286 = scalar_lea.vmem %s3, 32
          %v1287 = vld [vmem:[%s1286] sm:$0xf]
          %v1288 = vld [vmem:[%s1286 + $0x4] sm:$0xf]
          %v1289 = vld [vmem:[%s4] sm:$0xff]
          %v1290 = vld [vmem:[%s4 + $0x8] sm:$0xff]
          %1292 = vset.pattern.permute.xlu0 4
          %1293 = vperm.xlu0 %1292, %v1289
          %v1294 = vpop.permute.xlu0 %1293
          %1297 = vset.pattern.permute.xlu0 4
          %1298 = vperm.xlu0 %1297, %v1290
          %v1299 = vpop.permute.xlu0 %1298
          %v1303 = vunpack.c.l.b16 %v1287
          %v1304 = vunpack.c.l.b16 %v1288
          %v1305 = vpack.c.b16 %v1304, %v1303
          %v1307 = vsel %vm377, %v1305, 0
          %vm1309 = vcmask 1041408
          %v1311 = vsel %vm1309, %v500, 0
          %v1314 = vsel %vm1309, %v501, 0
          %1316 = vmatprep.subr.bf16.mxu0 0
          %1317 = vmatpush1.bf16.msra.mxu0 0
          %1318 = vmatprep.subr.bf16.mxu0 0
          %1319 = vmatpush1.bf16.msra.mxu0 0
          %1320 = vmatprep.subr.bf16.mxu0 0
          %1321 = vmatpush1.bf16.msra.mxu0 0
          %1322 = vmatprep.subr.bf16.mxu0 0
          %1323 = vmatpush1.bf16.msra.mxu0 0
          %1324 = vmatprep.subr.bf16.mxu0 0
          %1325 = vmatpush1.bf16.msra.mxu0 0
          %1326 = vmatprep.subr.bf16.mxu0 0
          %1327 = vmatpush1.bf16.msra.mxu0 0
          %1328 = vmatprep.subr.bf16.mxu0 0
          %1329 = vmatpush1.bf16.msra.mxu0 0
          %1330 = vmatprep.subr.bf16.mxu0 %v1314
          %1331 = vmatpush1.bf16.msra.mxu0 %v1311
          %1332 = vmatprep.subr.bf16.mxu0 0
          %1333 = vmatpush2.bf16.msra.mxu0 0
          %1334 = vmatprep.subr.bf16.mxu0 0
          %1335 = vmatpush2.bf16.msra.mxu0 0
          %1336 = vmatprep.subr.bf16.mxu0 0
          %1337 = vmatpush2.bf16.msra.mxu0 0
          %1338 = vmatprep.subr.bf16.mxu0 0
          %1339 = vmatpush2.bf16.msra.mxu0 0
          %1340 = vmatprep.subr.bf16.mxu0 0
          %1341 = vmatpush2.bf16.msra.mxu0 0
          %1342 = vmatprep.subr.bf16.mxu0 0
          %1343 = vmatpush2.bf16.msra.mxu0 0
          %1344 = vmatprep.subr.bf16.mxu0 0
          %1345 = vmatpush2.bf16.msra.mxu0 0
          %1346 = vmatprep.subr.bf16.mxu0 0
          %1347 = vmatpush2.bf16.msra.mxu0 0
          %1348 = vmatprep.mubr.bf16.mxu0 0
          %1349 = vmatmul.mubr.bf16.gmra.mxu0 %v1307
          %v1350 = vpop.f32.mrf.mxu0
          %v1351 = vadd.f32 %v1294, %v1350
          %v1352 = vpop.f32.mrf.mxu0
          %v1353 = vadd.f32 %v1294, %v1352
          %v1354 = vpop.f32.mrf.mxu0
          %v1355 = vadd.f32 %v1299, %v1354
          %v1356 = vpop.f32.mrf.mxu0
          %v1357 = vadd.f32 %v1299, %v1356
          %1358 = vdwg.mxu0
          %v1359 = vmul.f32 %v1351, 0.5
          %v1360 = vmul.f32 %v1353, 0.5
          %v1361 = vmul.f32 %v1355, 0.5
          %v1362 = vmul.f32 %v1357, 0.5
          %v1363 = vmul.f32 %v1351, 0.044715
          %v1364 = vmul.f32 %v1353, 0.044715
          %v1365 = vmul.f32 %v1355, 0.044715
          %v1366 = vmul.f32 %v1357, 0.044715
          %v1367 = vmul.f32 %v1363, %v1351
          %v1368 = vmul.f32 %v1364, %v1353
          %v1369 = vmul.f32 %v1365, %v1355
          %v1370 = vmul.f32 %v1366, %v1357
          %v1371 = vmul.f32 %v1367, %v1351
          %v1372 = vmul.f32 %v1368, %v1353
          %v1373 = vmul.f32 %v1369, %v1355
          %v1374 = vmul.f32 %v1370, %v1357
          %v1375 = vadd.f32 %v1351, %v1371
          %v1376 = vadd.f32 %v1353, %v1372
          %v1377 = vadd.f32 %v1355, %v1373
          %v1378 = vadd.f32 %v1357, %v1374
          %v1379 = vmul.f32 %v1375, 0.7978846
          %v1380 = vmul.f32 %v1376, 0.7978846
          %v1381 = vmul.f32 %v1377, 0.7978846
          %v1382 = vmul.f32 %v1378, 0.7978846
          %v1383 = vtanh.pop %v1379
          %v1384 = vtanh.pop %v1380
          %v1385 = vtanh.pop %v1381
          %v1386 = vtanh.pop %v1382
          %v1387 = vadd.f32 %v1383, 1.0
          %v1388 = vadd.f32 %v1384, 1.0
          %v1389 = vadd.f32 %v1385, 1.0
          %v1390 = vadd.f32 %v1386, 1.0
          %v1391 = vmul.f32 %v1359, %v1387
          %v1392 = vmul.f32 %v1360, %v1388
          %v1393 = vmul.f32 %v1361, %v1389
          %v1394 = vmul.f32 %v1362, %v1390
          %s1395 = scalar_lea.vmem %s5, 8
          %v1396 = vld [vmem:[%s1395] sm:$0x3]
          %v1397 = vpack.c.bf16 %v1393, %v1391
          %v1398 = vpack.c.bf16 %v1394, %v1392
          %vm1399 = vcmask 130048
          %v1401 = vsel %vm1399, %v1396, 0
          %1403 = vmatprep.subr.bf16.mxu0 0
          %1404 = vmatpush1.bf16.msra.mxu0 0
          %1405 = vmatprep.subr.bf16.mxu0 0
          %1406 = vmatpush1.bf16.msra.mxu0 0
          %1407 = vmatprep.subr.bf16.mxu0 0
          %1408 = vmatpush1.bf16.msra.mxu0 0
          %1409 = vmatprep.subr.bf16.mxu0 0
          %1410 = vmatpush1.bf16.msra.mxu0 0
          %1411 = vmatprep.subr.bf16.mxu0 0
          %1412 = vmatpush1.bf16.msra.mxu0 0
          %1413 = vmatprep.subr.bf16.mxu0 0
          %1414 = vmatpush1.bf16.msra.mxu0 0
          %1415 = vmatprep.subr.bf16.mxu0 0
          %1416 = vmatpush1.bf16.msra.mxu0 0
          %1417 = vmatprep.subr.bf16.mxu0 %v1398
          %1418 = vmatpush1.bf16.msra.mxu0 %v1397
          %1419 = vmatprep.subr.bf16.mxu0 0
          %1420 = vmatpush2.bf16.msra.mxu0 0
          %1421 = vmatprep.subr.bf16.mxu0 0
          %1422 = vmatpush2.bf16.msra.mxu0 0
          %1423 = vmatprep.subr.bf16.mxu0 0
          %1424 = vmatpush2.bf16.msra.mxu0 0
          %1425 = vmatprep.subr.bf16.mxu0 0
          %1426 = vmatpush2.bf16.msra.mxu0 0
          %1427 = vmatprep.subr.bf16.mxu0 0
          %1428 = vmatpush2.bf16.msra.mxu0 0
          %1429 = vmatprep.subr.bf16.mxu0 0
          %1430 = vmatpush2.bf16.msra.mxu0 0
          %1431 = vmatprep.subr.bf16.mxu0 0
          %1432 = vmatpush2.bf16.msra.mxu0 0
          %1433 = vmatprep.subr.bf16.mxu0 0
          %1434 = vmatpush2.bf16.msra.mxu0 0
          %1435 = vmatprep.mubr.bf16.mxu0 0
          %1436 = vmatmul.mubr.bf16.gmra.mxu0 %v1401
          %v1437 = vpop.f32.mrf.mxu0
          %v1438 = vadd.f32 0.0, %v1437
          %v1439 = vpop.f32.mrf.mxu0
          %v1440 = vadd.f32 0.0, %v1439
          %v1441 = vpop.f32.mrf.mxu0
          %v1442 = vpop.f32.mrf.mxu0
          %1443 = vdwg.mxu0
          %v1444 = vld [vmem:[#allocation2] sm:$0xff]
          %v1445 = vlaneseq
          %v1446 = vshrl.u32 %v1445, 7
          %v1447 = vsub.s32 4, %v1446
          %v1448 = vrot.slane %v497, %v1447
          %v1449 = vlaneseq
          %v1450 = vshrl.u32 %v1449, 7
          %v1451 = vsub.s32 4, %v1450
          %v1452 = vrot.slane %v498, %v1451
          %v1453 = vmul.f32 %v1448, %v1438
          %v1454 = vmul.f32 %v1452, %v1440
          %v1457 = vcombine.low %v1453, %v1454
          %v1459 = vadd.f32 %v1444, %v1457
          %1460 = vst [vmem:[#allocation2] sm:$0xff] %v1459
        $region68: #{tpu_custom_call.1} parent=47 // pred_fallthru
          _
        %vm1461 = vcmask 1045509
        %v1462 = vsel %vm1461, %v497, -inf
        %v1463 = vsel %vm1461, %v498, -inf
        %v1464 = vmax.f32 %v1462, %v1463
        %1465 = vmax.xlane.f32.xlu0 %v1464
        %v1466 = vpop.xlane.xlu0 %1465
        %v1467 = vrot.slane %v1466, 4
        %v1468 = vmax.f32 %v1466, %v1467
        %v1469 = vrot.slane %v1468, 2
        %v1470 = vmax.f32 %v1468, %v1469
        %v1471 = vrot.slane %v1470, 1
        %v1472 = vmax.f32 %v1470, %v1471
        %s1473 = vtos %v1472
        %p1474 = scmp.gt.f32.partialorder %s1473, 0.0
        // Predicated region
        $region69: #{tpu_custom_call.1} parent=47 // pred_check
          %p1475 = pneg %p1474
        $region70: #{tpu_custom_call.1} parent=47 // pred_check_branch
          %1477 = sbr.rel (%p1475) target = $region72
        $region71: #{tpu_custom_call.1} parent=47 // pred_region
          %s1478 = scalar_lea.vmem %s3, 40
          %v1479 = vld [vmem:[%s1478] sm:$0xf]
          %v1480 = vld [vmem:[%s1478 + $0x4] sm:$0xf]
          %v1481 = vld [vmem:[%s4] sm:$0xff]
          %v1482 = vld [vmem:[%s4 + $0x8] sm:$0xff]
          %1484 = vset.pattern.permute.xlu0 5
          %1485 = vperm.xlu0 %1484, %v1481
          %v1486 = vpop.permute.xlu0 %1485
          %1489 = vset.pattern.permute.xlu0 5
          %1490 = vperm.xlu0 %1489, %v1482
          %v1491 = vpop.permute.xlu0 %1490
          %v1495 = vunpack.c.l.b16 %v1479
          %v1496 = vunpack.c.l.b16 %v1480
          %v1497 = vpack.c.b16 %v1496, %v1495
          %v1499 = vsel %vm377, %v1497, 0
          %vm1501 = vcmask 1041408
          %v1503 = vsel %vm1501, %v500, 0
          %v1506 = vsel %vm1501, %v501, 0
          %1508 = vmatprep.subr.bf16.mxu0 0
          %1509 = vmatpush1.bf16.msra.mxu0 0
          %1510 = vmatprep.subr.bf16.mxu0 0
          %1511 = vmatpush1.bf16.msra.mxu0 0
          %1512 = vmatprep.subr.bf16.mxu0 0
          %1513 = vmatpush1.bf16.msra.mxu0 0
          %1514 = vmatprep.subr.bf16.mxu0 0
          %1515 = vmatpush1.bf16.msra.mxu0 0
          %1516 = vmatprep.subr.bf16.mxu0 0
          %1517 = vmatpush1.bf16.msra.mxu0 0
          %1518 = vmatprep.subr.bf16.mxu0 0
          %1519 = vmatpush1.bf16.msra.mxu0 0
          %1520 = vmatprep.subr.bf16.mxu0 0
          %1521 = vmatpush1.bf16.msra.mxu0 0
          %1522 = vmatprep.subr.bf16.mxu0 %v1506
          %1523 = vmatpush1.bf16.msra.mxu0 %v1503
          %1524 = vmatprep.subr.bf16.mxu0 0
          %1525 = vmatpush2.bf16.msra.mxu0 0
          %1526 = vmatprep.subr.bf16.mxu0 0
          %1527 = vmatpush2.bf16.msra.mxu0 0
          %1528 = vmatprep.subr.bf16.mxu0 0
          %1529 = vmatpush2.bf16.msra.mxu0 0
          %1530 = vmatprep.subr.bf16.mxu0 0
          %1531 = vmatpush2.bf16.msra.mxu0 0
          %1532 = vmatprep.subr.bf16.mxu0 0
          %1533 = vmatpush2.bf16.msra.mxu0 0
          %1534 = vmatprep.subr.bf16.mxu0 0
          %1535 = vmatpush2.bf16.msra.mxu0 0
          %1536 = vmatprep.subr.bf16.mxu0 0
          %1537 = vmatpush2.bf16.msra.mxu0 0
          %1538 = vmatprep.subr.bf16.mxu0 0
          %1539 = vmatpush2.bf16.msra.mxu0 0
          %1540 = vmatprep.mubr.bf16.mxu0 0
          %1541 = vmatmul.mubr.bf16.gmra.mxu0 %v1499
          %v1542 = vpop.f32.mrf.mxu0
          %v1543 = vadd.f32 %v1486, %v1542
          %v1544 = vpop.f32.mrf.mxu0
          %v1545 = vadd.f32 %v1486, %v1544
          %v1546 = vpop.f32.mrf.mxu0
          %v1547 = vadd.f32 %v1491, %v1546
          %v1548 = vpop.f32.mrf.mxu0
          %v1549 = vadd.f32 %v1491, %v1548
          %1550 = vdwg.mxu0
          %v1551 = vmul.f32 %v1543, 0.5
          %v1552 = vmul.f32 %v1545, 0.5
          %v1553 = vmul.f32 %v1547, 0.5
          %v1554 = vmul.f32 %v1549, 0.5
          %v1555 = vmul.f32 %v1543, 0.044715
          %v1556 = vmul.f32 %v1545, 0.044715
          %v1557 = vmul.f32 %v1547, 0.044715
          %v1558 = vmul.f32 %v1549, 0.044715
          %v1559 = vmul.f32 %v1555, %v1543
          %v1560 = vmul.f32 %v1556, %v1545
          %v1561 = vmul.f32 %v1557, %v1547
          %v1562 = vmul.f32 %v1558, %v1549
          %v1563 = vmul.f32 %v1559, %v1543
          %v1564 = vmul.f32 %v1560, %v1545
          %v1565 = vmul.f32 %v1561, %v1547
          %v1566 = vmul.f32 %v1562, %v1549
          %v1567 = vadd.f32 %v1543, %v1563
          %v1568 = vadd.f32 %v1545, %v1564
          %v1569 = vadd.f32 %v1547, %v1565
          %v1570 = vadd.f32 %v1549, %v1566
          %v1571 = vmul.f32 %v1567, 0.7978846
          %v1572 = vmul.f32 %v1568, 0.7978846
          %v1573 = vmul.f32 %v1569, 0.7978846
          %v1574 = vmul.f32 %v1570, 0.7978846
          %v1575 = vtanh.pop %v1571
          %v1576 = vtanh.pop %v1572
          %v1577 = vtanh.pop %v1573
          %v1578 = vtanh.pop %v1574
          %v1579 = vadd.f32 %v1575, 1.0
          %v1580 = vadd.f32 %v1576, 1.0
          %v1581 = vadd.f32 %v1577, 1.0
          %v1582 = vadd.f32 %v1578, 1.0
          %v1583 = vmul.f32 %v1551, %v1579
          %v1584 = vmul.f32 %v1552, %v1580
          %v1585 = vmul.f32 %v1553, %v1581
          %v1586 = vmul.f32 %v1554, %v1582
          %s1587 = scalar_lea.vmem %s5, 10
          %v1588 = vld [vmem:[%s1587] sm:$0x3]
          %v1589 = vpack.c.bf16 %v1585, %v1583
          %v1590 = vpack.c.bf16 %v1586, %v1584
          %vm1591 = vcmask 130048
          %v1593 = vsel %vm1591, %v1588, 0
          %1595 = vmatprep.subr.bf16.mxu0 0
          %1596 = vmatpush1.bf16.msra.mxu0 0
          %1597 = vmatprep.subr.bf16.mxu0 0
          %1598 = vmatpush1.bf16.msra.mxu0 0
          %1599 = vmatprep.subr.bf16.mxu0 0
          %1600 = vmatpush1.bf16.msra.mxu0 0
          %1601 = vmatprep.subr.bf16.mxu0 0
          %1602 = vmatpush1.bf16.msra.mxu0 0
          %1603 = vmatprep.subr.bf16.mxu0 0
          %1604 = vmatpush1.bf16.msra.mxu0 0
          %1605 = vmatprep.subr.bf16.mxu0 0
          %1606 = vmatpush1.bf16.msra.mxu0 0
          %1607 = vmatprep.subr.bf16.mxu0 0
          %1608 = vmatpush1.bf16.msra.mxu0 0
          %1609 = vmatprep.subr.bf16.mxu0 %v1590
          %1610 = vmatpush1.bf16.msra.mxu0 %v1589
          %1611 = vmatprep.subr.bf16.mxu0 0
          %1612 = vmatpush2.bf16.msra.mxu0 0
          %1613 = vmatprep.subr.bf16.mxu0 0
          %1614 = vmatpush2.bf16.msra.mxu0 0
          %1615 = vmatprep.subr.bf16.mxu0 0
          %1616 = vmatpush2.bf16.msra.mxu0 0
          %1617 = vmatprep.subr.bf16.mxu0 0
          %1618 = vmatpush2.bf16.msra.mxu0 0
          %1619 = vmatprep.subr.bf16.mxu0 0
          %1620 = vmatpush2.bf16.msra.mxu0 0
          %1621 = vmatprep.subr.bf16.mxu0 0
          %1622 = vmatpush2.bf16.msra.mxu0 0
          %1623 = vmatprep.subr.bf16.mxu0 0
          %1624 = vmatpush2.bf16.msra.mxu0 0
          %1625 = vmatprep.subr.bf16.mxu0 0
          %1626 = vmatpush2.bf16.msra.mxu0 0
          %1627 = vmatprep.mubr.bf16.mxu0 0
          %1628 = vmatmul.mubr.bf16.gmra.mxu0 %v1593
          %v1629 = vpop.f32.mrf.mxu0
          %v1630 = vadd.f32 0.0, %v1629
          %v1631 = vpop.f32.mrf.mxu0
          %v1632 = vadd.f32 0.0, %v1631
          %v1633 = vpop.f32.mrf.mxu0
          %v1634 = vpop.f32.mrf.mxu0
          %1635 = vdwg.mxu0
          %v1636 = vld [vmem:[#allocation2] sm:$0xff]
          %v1637 = vlaneseq
          %v1638 = vshrl.u32 %v1637, 7
          %v1639 = vsub.s32 5, %v1638
          %v1640 = vrot.slane %v497, %v1639
          %v1641 = vlaneseq
          %v1642 = vshrl.u32 %v1641, 7
          %v1643 = vsub.s32 5, %v1642
          %v1644 = vrot.slane %v498, %v1643
          %v1645 = vmul.f32 %v1640, %v1630
          %v1646 = vmul.f32 %v1644, %v1632
          %v1649 = vcombine.low %v1645, %v1646
          %v1651 = vadd.f32 %v1636, %v1649
          %1652 = vst [vmem:[#allocation2] sm:$0xff] %v1651
        $region72: #{tpu_custom_call.1} parent=47 // pred_fallthru
          _
        %vm1653 = vcmask 1046534
        %v1654 = vsel %vm1653, %v497, -inf
        %v1655 = vsel %vm1653, %v498, -inf
        %v1656 = vmax.f32 %v1654, %v1655
        %1657 = vmax.xlane.f32.xlu0 %v1656
        %v1658 = vpop.xlane.xlu0 %1657
        %v1659 = vrot.slane %v1658, 4
        %v1660 = vmax.f32 %v1658, %v1659
        %v1661 = vrot.slane %v1660, 2
        %v1662 = vmax.f32 %v1660, %v1661
        %v1663 = vrot.slane %v1662, 1
        %v1664 = vmax.f32 %v1662, %v1663
        %s1665 = vtos %v1664
        %p1666 = scmp.gt.f32.partialorder %s1665, 0.0
        // Predicated region
        $region73: #{tpu_custom_call.1} parent=47 // pred_check
          %p1667 = pneg %p1666
        $region74: #{tpu_custom_call.1} parent=47 // pred_check_branch
          %1669 = sbr.rel (%p1667) target = $region76
        $region75: #{tpu_custom_call.1} parent=47 // pred_region
          %s1670 = scalar_lea.vmem %s3, 48
          %v1671 = vld [vmem:[%s1670] sm:$0xf]
          %v1672 = vld [vmem:[%s1670 + $0x4] sm:$0xf]
          %v1673 = vld [vmem:[%s4] sm:$0xff]
          %v1674 = vld [vmem:[%s4 + $0x8] sm:$0xff]
          %1676 = vset.pattern.permute.xlu0 6
          %1677 = vperm.xlu0 %1676, %v1673
          %v1678 = vpop.permute.xlu0 %1677
          %1681 = vset.pattern.permute.xlu0 6
          %1682 = vperm.xlu0 %1681, %v1674
          %v1683 = vpop.permute.xlu0 %1682
          %v1687 = vunpack.c.l.b16 %v1671
          %v1688 = vunpack.c.l.b16 %v1672
          %v1689 = vpack.c.b16 %v1688, %v1687
          %v1691 = vsel %vm377, %v1689, 0
          %vm1693 = vcmask 1041408
          %v1695 = vsel %vm1693, %v500, 0
          %v1698 = vsel %vm1693, %v501, 0
          %1700 = vmatprep.subr.bf16.mxu0 0
          %1701 = vmatpush1.bf16.msra.mxu0 0
          %1702 = vmatprep.subr.bf16.mxu0 0
          %1703 = vmatpush1.bf16.msra.mxu0 0
          %1704 = vmatprep.subr.bf16.mxu0 0
          %1705 = vmatpush1.bf16.msra.mxu0 0
          %1706 = vmatprep.subr.bf16.mxu0 0
          %1707 = vmatpush1.bf16.msra.mxu0 0
          %1708 = vmatprep.subr.bf16.mxu0 0
          %1709 = vmatpush1.bf16.msra.mxu0 0
          %1710 = vmatprep.subr.bf16.mxu0 0
          %1711 = vmatpush1.bf16.msra.mxu0 0
          %1712 = vmatprep.subr.bf16.mxu0 0
          %1713 = vmatpush1.bf16.msra.mxu0 0
          %1714 = vmatprep.subr.bf16.mxu0 %v1698
          %1715 = vmatpush1.bf16.msra.mxu0 %v1695
          %1716 = vmatprep.subr.bf16.mxu0 0
          %1717 = vmatpush2.bf16.msra.mxu0 0
          %1718 = vmatprep.subr.bf16.mxu0 0
          %1719 = vmatpush2.bf16.msra.mxu0 0
          %1720 = vmatprep.subr.bf16.mxu0 0
          %1721 = vmatpush2.bf16.msra.mxu0 0
          %1722 = vmatprep.subr.bf16.mxu0 0
          %1723 = vmatpush2.bf16.msra.mxu0 0
          %1724 = vmatprep.subr.bf16.mxu0 0
          %1725 = vmatpush2.bf16.msra.mxu0 0
          %1726 = vmatprep.subr.bf16.mxu0 0
          %1727 = vmatpush2.bf16.msra.mxu0 0
          %1728 = vmatprep.subr.bf16.mxu0 0
          %1729 = vmatpush2.bf16.msra.mxu0 0
          %1730 = vmatprep.subr.bf16.mxu0 0
          %1731 = vmatpush2.bf16.msra.mxu0 0
          %1732 = vmatprep.mubr.bf16.mxu0 0
          %1733 = vmatmul.mubr.bf16.gmra.mxu0 %v1691
          %v1734 = vpop.f32.mrf.mxu0
          %v1735 = vadd.f32 %v1678, %v1734
          %v1736 = vpop.f32.mrf.mxu0
          %v1737 = vadd.f32 %v1678, %v1736
          %v1738 = vpop.f32.mrf.mxu0
          %v1739 = vadd.f32 %v1683, %v1738
          %v1740 = vpop.f32.mrf.mxu0
          %v1741 = vadd.f32 %v1683, %v1740
          %1742 = vdwg.mxu0
          %v1743 = vmul.f32 %v1735, 0.5
          %v1744 = vmul.f32 %v1737, 0.5
          %v1745 = vmul.f32 %v1739, 0.5
          %v1746 = vmul.f32 %v1741, 0.5
          %v1747 = vmul.f32 %v1735, 0.044715
          %v1748 = vmul.f32 %v1737, 0.044715
          %v1749 = vmul.f32 %v1739, 0.044715
          %v1750 = vmul.f32 %v1741, 0.044715
          %v1751 = vmul.f32 %v1747, %v1735
          %v1752 = vmul.f32 %v1748, %v1737
          %v1753 = vmul.f32 %v1749, %v1739
          %v1754 = vmul.f32 %v1750, %v1741
          %v1755 = vmul.f32 %v1751, %v1735
          %v1756 = vmul.f32 %v1752, %v1737
          %v1757 = vmul.f32 %v1753, %v1739
          %v1758 = vmul.f32 %v1754, %v1741
          %v1759 = vadd.f32 %v1735, %v1755
          %v1760 = vadd.f32 %v1737, %v1756
          %v1761 = vadd.f32 %v1739, %v1757
          %v1762 = vadd.f32 %v1741, %v1758
          %v1763 = vmul.f32 %v1759, 0.7978846
          %v1764 = vmul.f32 %v1760, 0.7978846
          %v1765 = vmul.f32 %v1761, 0.7978846
          %v1766 = vmul.f32 %v1762, 0.7978846
          %v1767 = vtanh.pop %v1763
          %v1768 = vtanh.pop %v1764
          %v1769 = vtanh.pop %v1765
          %v1770 = vtanh.pop %v1766
          %v1771 = vadd.f32 %v1767, 1.0
          %v1772 = vadd.f32 %v1768, 1.0
          %v1773 = vadd.f32 %v1769, 1.0
          %v1774 = vadd.f32 %v1770, 1.0
          %v1775 = vmul.f32 %v1743, %v1771
          %v1776 = vmul.f32 %v1744, %v1772
          %v1777 = vmul.f32 %v1745, %v1773
          %v1778 = vmul.f32 %v1746, %v1774
          %s1779 = scalar_lea.vmem %s5, 12
          %v1780 = vld [vmem:[%s1779] sm:$0x3]
          %v1781 = vpack.c.bf16 %v1777, %v1775
          %v1782 = vpack.c.bf16 %v1778, %v1776
          %vm1783 = vcmask 130048
          %v1785 = vsel %vm1783, %v1780, 0
          %1787 = vmatprep.subr.bf16.mxu0 0
          %1788 = vmatpush1.bf16.msra.mxu0 0
          %1789 = vmatprep.subr.bf16.mxu0 0
          %1790 = vmatpush1.bf16.msra.mxu0 0
          %1791 = vmatprep.subr.bf16.mxu0 0
          %1792 = vmatpush1.bf16.msra.mxu0 0
          %1793 = vmatprep.subr.bf16.mxu0 0
          %1794 = vmatpush1.bf16.msra.mxu0 0
          %1795 = vmatprep.subr.bf16.mxu0 0
          %1796 = vmatpush1.bf16.msra.mxu0 0
          %1797 = vmatprep.subr.bf16.mxu0 0
          %1798 = vmatpush1.bf16.msra.mxu0 0
          %1799 = vmatprep.subr.bf16.mxu0 0
          %1800 = vmatpush1.bf16.msra.mxu0 0
          %1801 = vmatprep.subr.bf16.mxu0 %v1782
          %1802 = vmatpush1.bf16.msra.mxu0 %v1781
          %1803 = vmatprep.subr.bf16.mxu0 0
          %1804 = vmatpush2.bf16.msra.mxu0 0
          %1805 = vmatprep.subr.bf16.mxu0 0
          %1806 = vmatpush2.bf16.msra.mxu0 0
          %1807 = vmatprep.subr.bf16.mxu0 0
          %1808 = vmatpush2.bf16.msra.mxu0 0
          %1809 = vmatprep.subr.bf16.mxu0 0
          %1810 = vmatpush2.bf16.msra.mxu0 0
          %1811 = vmatprep.subr.bf16.mxu0 0
          %1812 = vmatpush2.bf16.msra.mxu0 0
          %1813 = vmatprep.subr.bf16.mxu0 0
          %1814 = vmatpush2.bf16.msra.mxu0 0
          %1815 = vmatprep.subr.bf16.mxu0 0
          %1816 = vmatpush2.bf16.msra.mxu0 0
          %1817 = vmatprep.subr.bf16.mxu0 0
          %1818 = vmatpush2.bf16.msra.mxu0 0
          %1819 = vmatprep.mubr.bf16.mxu0 0
          %1820 = vmatmul.mubr.bf16.gmra.mxu0 %v1785
          %v1821 = vpop.f32.mrf.mxu0
          %v1822 = vadd.f32 0.0, %v1821
          %v1823 = vpop.f32.mrf.mxu0
          %v1824 = vadd.f32 0.0, %v1823
          %v1825 = vpop.f32.mrf.mxu0
          %v1826 = vpop.f32.mrf.mxu0
          %1827 = vdwg.mxu0
          %v1828 = vld [vmem:[#allocation2] sm:$0xff]
          %v1829 = vlaneseq
          %v1830 = vshrl.u32 %v1829, 7
          %v1831 = vsub.s32 6, %v1830
          %v1832 = vrot.slane %v497, %v1831
          %v1833 = vlaneseq
          %v1834 = vshrl.u32 %v1833, 7
          %v1835 = vsub.s32 6, %v1834
          %v1836 = vrot.slane %v498, %v1835
          %v1837 = vmul.f32 %v1832, %v1822
          %v1838 = vmul.f32 %v1836, %v1824
          %v1841 = vcombine.low %v1837, %v1838
          %v1843 = vadd.f32 %v1828, %v1841
          %1844 = vst [vmem:[#allocation2] sm:$0xff] %v1843
        $region76: #{tpu_custom_call.1} parent=47 // pred_fallthru
          _
        %vm1845 = vcmask 1047559
        %v1846 = vsel %vm1845, %v497, -inf
        %v1847 = vsel %vm1845, %v498, -inf
        %v1848 = vmax.f32 %v1846, %v1847
        %1849 = vmax.xlane.f32.xlu0 %v1848
        %v1850 = vpop.xlane.xlu0 %1849
        %v1851 = vrot.slane %v1850, 4
        %v1852 = vmax.f32 %v1850, %v1851
        %v1853 = vrot.slane %v1852, 2
        %v1854 = vmax.f32 %v1852, %v1853
        %v1855 = vrot.slane %v1854, 1
        %v1856 = vmax.f32 %v1854, %v1855
        %s1857 = vtos %v1856
        %p1858 = scmp.gt.f32.partialorder %s1857, 0.0
        // Predicated region
        $region77: #{tpu_custom_call.1} parent=47 // pred_check
          %p1859 = pneg %p1858
        $region78: #{tpu_custom_call.1} parent=47 // pred_check_branch
          %1861 = sbr.rel (%p1859) target = $region80
        $region79: #{tpu_custom_call.1} parent=47 // pred_region
          %s1862 = scalar_lea.vmem %s3, 56
          %v1863 = vld [vmem:[%s1862] sm:$0xf]
          %v1864 = vld [vmem:[%s1862 + $0x4] sm:$0xf]
          %v1865 = vld [vmem:[%s4] sm:$0xff]
          %v1866 = vld [vmem:[%s4 + $0x8] sm:$0xff]
          %1868 = vset.pattern.permute.xlu0 7
          %1869 = vperm.xlu0 %1868, %v1865
          %v1870 = vpop.permute.xlu0 %1869
          %1873 = vset.pattern.permute.xlu0 7
          %1874 = vperm.xlu0 %1873, %v1866
          %v1875 = vpop.permute.xlu0 %1874
          %v1879 = vunpack.c.l.b16 %v1863
          %v1880 = vunpack.c.l.b16 %v1864
          %v1881 = vpack.c.b16 %v1880, %v1879
          %v1883 = vsel %vm377, %v1881, 0
          %vm1885 = vcmask 1041408
          %v1887 = vsel %vm1885, %v500, 0
          %v1890 = vsel %vm1885, %v501, 0
          %1892 = vmatprep.subr.bf16.mxu0 0
          %1893 = vmatpush1.bf16.msra.mxu0 0
          %1894 = vmatprep.subr.bf16.mxu0 0
          %1895 = vmatpush1.bf16.msra.mxu0 0
          %1896 = vmatprep.subr.bf16.mxu0 0
          %1897 = vmatpush1.bf16.msra.mxu0 0
          %1898 = vmatprep.subr.bf16.mxu0 0
          %1899 = vmatpush1.bf16.msra.mxu0 0
          %1900 = vmatprep.subr.bf16.mxu0 0
          %1901 = vmatpush1.bf16.msra.mxu0 0
          %1902 = vmatprep.subr.bf16.mxu0 0
          %1903 = vmatpush1.bf16.msra.mxu0 0
          %1904 = vmatprep.subr.bf16.mxu0 0
          %1905 = vmatpush1.bf16.msra.mxu0 0
          %1906 = vmatprep.subr.bf16.mxu0 %v1890
          %1907 = vmatpush1.bf16.msra.mxu0 %v1887
          %1908 = vmatprep.subr.bf16.mxu0 0
          %1909 = vmatpush2.bf16.msra.mxu0 0
          %1910 = vmatprep.subr.bf16.mxu0 0
          %1911 = vmatpush2.bf16.msra.mxu0 0
          %1912 = vmatprep.subr.bf16.mxu0 0
          %1913 = vmatpush2.bf16.msra.mxu0 0
          %1914 = vmatprep.subr.bf16.mxu0 0
          %1915 = vmatpush2.bf16.msra.mxu0 0
          %1916 = vmatprep.subr.bf16.mxu0 0
          %1917 = vmatpush2.bf16.msra.mxu0 0
          %1918 = vmatprep.subr.bf16.mxu0 0
          %1919 = vmatpush2.bf16.msra.mxu0 0
          %1920 = vmatprep.subr.bf16.mxu0 0
          %1921 = vmatpush2.bf16.msra.mxu0 0
          %1922 = vmatprep.subr.bf16.mxu0 0
          %1923 = vmatpush2.bf16.msra.mxu0 0
          %1924 = vmatprep.mubr.bf16.mxu0 0
          %1925 = vmatmul.mubr.bf16.gmra.mxu0 %v1883
          %v1926 = vpop.f32.mrf.mxu0
          %v1927 = vadd.f32 %v1870, %v1926
          %v1928 = vpop.f32.mrf.mxu0
          %v1929 = vadd.f32 %v1870, %v1928
          %v1930 = vpop.f32.mrf.mxu0
          %v1931 = vadd.f32 %v1875, %v1930
          %v1932 = vpop.f32.mrf.mxu0
          %v1933 = vadd.f32 %v1875, %v1932
          %1934 = vdwg.mxu0
          %v1935 = vmul.f32 %v1927, 0.5
          %v1936 = vmul.f32 %v1929, 0.5
          %v1937 = vmul.f32 %v1931, 0.5
          %v1938 = vmul.f32 %v1933, 0.5
          %v1939 = vmul.f32 %v1927, 0.044715
          %v1940 = vmul.f32 %v1929, 0.044715
          %v1941 = vmul.f32 %v1931, 0.044715
          %v1942 = vmul.f32 %v1933, 0.044715
          %v1943 = vmul.f32 %v1939, %v1927
          %v1944 = vmul.f32 %v1940, %v1929
          %v1945 = vmul.f32 %v1941, %v1931
          %v1946 = vmul.f32 %v1942, %v1933
          %v1947 = vmul.f32 %v1943, %v1927
          %v1948 = vmul.f32 %v1944, %v1929
          %v1949 = vmul.f32 %v1945, %v1931
          %v1950 = vmul.f32 %v1946, %v1933
          %v1951 = vadd.f32 %v1927, %v1947
          %v1952 = vadd.f32 %v1929, %v1948
          %v1953 = vadd.f32 %v1931, %v1949
          %v1954 = vadd.f32 %v1933, %v1950
          %v1955 = vmul.f32 %v1951, 0.7978846
          %v1956 = vmul.f32 %v1952, 0.7978846
          %v1957 = vmul.f32 %v1953, 0.7978846
          %v1958 = vmul.f32 %v1954, 0.7978846
          %v1959 = vtanh.pop %v1955
          %v1960 = vtanh.pop %v1956
          %v1961 = vtanh.pop %v1957
          %v1962 = vtanh.pop %v1958
          %v1963 = vadd.f32 %v1959, 1.0
          %v1964 = vadd.f32 %v1960, 1.0
          %v1965 = vadd.f32 %v1961, 1.0
          %v1966 = vadd.f32 %v1962, 1.0
          %v1967 = vmul.f32 %v1935, %v1963
          %v1968 = vmul.f32 %v1936, %v1964
          %v1969 = vmul.f32 %v1937, %v1965
          %v1970 = vmul.f32 %v1938, %v1966
          %s1971 = scalar_lea.vmem %s5, 14
          %v1972 = vld [vmem:[%s1971] sm:$0x3]
          %v1973 = vpack.c.bf16 %v1969, %v1967
          %v1974 = vpack.c.bf16 %v1970, %v1968
          %vm1975 = vcmask 130048
          %v1977 = vsel %vm1975, %v1972, 0
          %1979 = vmatprep.subr.bf16.mxu0 0
          %1980 = vmatpush1.bf16.msra.mxu0 0
          %1981 = vmatprep.subr.bf16.mxu0 0
          %1982 = vmatpush1.bf16.msra.mxu0 0
          %1983 = vmatprep.subr.bf16.mxu0 0
          %1984 = vmatpush1.bf16.msra.mxu0 0
          %1985 = vmatprep.subr.bf16.mxu0 0
          %1986 = vmatpush1.bf16.msra.mxu0 0
          %1987 = vmatprep.subr.bf16.mxu0 0
          %1988 = vmatpush1.bf16.msra.mxu0 0
          %1989 = vmatprep.subr.bf16.mxu0 0
          %1990 = vmatpush1.bf16.msra.mxu0 0
          %1991 = vmatprep.subr.bf16.mxu0 0
          %1992 = vmatpush1.bf16.msra.mxu0 0
          %1993 = vmatprep.subr.bf16.mxu0 %v1974
          %1994 = vmatpush1.bf16.msra.mxu0 %v1973
          %1995 = vmatprep.subr.bf16.mxu0 0
          %1996 = vmatpush2.bf16.msra.mxu0 0
          %1997 = vmatprep.subr.bf16.mxu0 0
          %1998 = vmatpush2.bf16.msra.mxu0 0
          %1999 = vmatprep.subr.bf16.mxu0 0
          %2000 = vmatpush2.bf16.msra.mxu0 0
          %2001 = vmatprep.subr.bf16.mxu0 0
          %2002 = vmatpush2.bf16.msra.mxu0 0
          %2003 = vmatprep.subr.bf16.mxu0 0
          %2004 = vmatpush2.bf16.msra.mxu0 0
          %2005 = vmatprep.subr.bf16.mxu0 0
          %2006 = vmatpush2.bf16.msra.mxu0 0
          %2007 = vmatprep.subr.bf16.mxu0 0
          %2008 = vmatpush2.bf16.msra.mxu0 0
          %2009 = vmatprep.subr.bf16.mxu0 0
          %2010 = vmatpush2.bf16.msra.mxu0 0
          %2011 = vmatprep.mubr.bf16.mxu0 0
          %2012 = vmatmul.mubr.bf16.gmra.mxu0 %v1977
          %v2013 = vpop.f32.mrf.mxu0
          %v2014 = vadd.f32 0.0, %v2013
          %v2015 = vpop.f32.mrf.mxu0
          %v2016 = vadd.f32 0.0, %v2015
          %v2017 = vpop.f32.mrf.mxu0
          %v2018 = vpop.f32.mrf.mxu0
          %2019 = vdwg.mxu0
          %v2020 = vld [vmem:[#allocation2] sm:$0xff]
          %v2021 = vlaneseq
          %v2022 = vshrl.u32 %v2021, 7
          %v2023 = vsub.s32 7, %v2022
          %v2024 = vrot.slane %v497, %v2023
          %v2025 = vlaneseq
          %v2026 = vshrl.u32 %v2025, 7
          %v2027 = vsub.s32 7, %v2026
          %v2028 = vrot.slane %v498, %v2027
          %v2029 = vmul.f32 %v2024, %v2014
          %v2030 = vmul.f32 %v2028, %v2016
          %v2033 = vcombine.low %v2029, %v2030
          %v2035 = vadd.f32 %v2020, %v2033
          %2036 = vst [vmem:[#allocation2] sm:$0xff] %v2035
        $region80: #{tpu_custom_call.1} parent=47 // pred_fallthru
          _
        %v2037 = vld [vmem:[#allocation2] sm:$0xff]
        %v2038 = vld [vmem:[%s6] sm:$0xf]
        %vm2039 = vcmask 64512
        %v2041 = vsel %vm2039, %v2038, 0
        %2043 = vmatprep.subr.mxu0 0.0
        %2044 = vmatpush1.msra.mxu0 0.0
        %2045 = vmatprep.subr.mxu0 0.0
        %2046 = vmatpush1.msra.mxu0 0.0
        %2047 = vmatprep.subr.mxu0 0.0
        %2048 = vmatpush1.msra.mxu0 0.0
        %2049 = vmatprep.subr.mxu0 0.0
        %2050 = vmatpush1.msra.mxu0 0.0
        %2051 = vmatprep.subr.mxu0 0.0
        %2052 = vmatpush1.msra.mxu0 0.0
        %2053 = vmatprep.subr.mxu0 0.0
        %2054 = vmatpush1.msra.mxu0 0.0
        %2055 = vmatprep.subr.mxu0 0.0
        %2056 = vmatpush1.msra.mxu0 0.0
        %2057 = vmatprep.subr.mxu0 0.0
        %2058 = vmatpush1.msra.mxu0 0.0
        %2059 = vmatprep.subr.mxu0 0.0
        %2060 = vmatpush1.msra.mxu0 0.0
        %2061 = vmatprep.subr.mxu0 0.0
        %2062 = vmatpush1.msra.mxu0 0.0
        %2063 = vmatprep.subr.mxu0 0.0
        %2064 = vmatpush1.msra.mxu0 0.0
        %2065 = vmatprep.subr.mxu0 0.0
        %2066 = vmatpush1.msra.mxu0 0.0
        %2067 = vmatprep.subr.mxu0 0.0
        %2068 = vmatpush1.msra.mxu0 0.0
        %2069 = vmatprep.subr.mxu0 0.0
        %2070 = vmatpush1.msra.mxu0 0.0
        %2071 = vmatprep.subr.mxu0 0.0
        %2072 = vmatpush1.msra.mxu0 0.0
        %2073 = vmatprep.subr.mxu0 %v498
        %2074 = vmatpush1.msra.mxu0 %v497
        %2075 = vmatprep.subr.mxu0 0.0
        %2076 = vmatpush2.msra.mxu0 0.0
        %2077 = vmatprep.subr.mxu0 0.0
        %2078 = vmatpush2.msra.mxu0 0.0
        %2079 = vmatprep.subr.mxu0 0.0
        %2080 = vmatpush2.msra.mxu0 0.0
        %2081 = vmatprep.subr.mxu0 0.0
        %2082 = vmatpush2.msra.mxu0 0.0
        %2083 = vmatprep.subr.mxu0 0.0
        %2084 = vmatpush2.msra.mxu0 0.0
        %2085 = vmatprep.subr.mxu0 0.0
        %2086 = vmatpush2.msra.mxu0 0.0
        %2087 = vmatprep.subr.mxu0 0.0
        %2088 = vmatpush2.msra.mxu0 0.0
        %2089 = vmatprep.subr.mxu0 0.0
        %2090 = vmatpush2.msra.mxu0 0.0
        %2091 = vmatprep.subr.mxu0 0.0
        %2092 = vmatpush2.msra.mxu0 0.0
        %2093 = vmatprep.subr.mxu0 0.0
        %2094 = vmatpush2.msra.mxu0 0.0
        %2095 = vmatprep.subr.mxu0 0.0
        %2096 = vmatpush2.msra.mxu0 0.0
        %2097 = vmatprep.subr.mxu0 0.0
        %2098 = vmatpush2.msra.mxu0 0.0
        %2099 = vmatprep.subr.mxu0 0.0
        %2100 = vmatpush2.msra.mxu0 0.0
        %2101 = vmatprep.subr.mxu0 0.0
        %2102 = vmatpush2.msra.mxu0 0.0
        %2103 = vmatprep.subr.mxu0 0.0
        %2104 = vmatpush2.msra.mxu0 0.0
        %2105 = vmatprep.subr.mxu0 0.0
        %2106 = vmatpush2.msra.mxu0 0.0
        %2107 = vmatprep.mubr.f32.mxu0 0.0
        %2108 = vmatmul.mubr.f32.gmra.mxu0 %v2041
        %v2109 = vpop.f32.mrf.mxu0
        %v2110 = vadd.f32 0.0, %v2109
        %v2111 = vpop.f32.mrf.mxu0
        %v2112 = vadd.f32 0.0, %v2111
        %2113 = vdwg.mxu0
        %v2116 = vcombine.low %v2110, %v2112
        %v2118 = vadd.f32 %v2037, %v2116
        %2119 = vst [vmem:[%s342] sm:$0xff] %v2118
        %2120 = vst [vmem:[%s349] sm:$0xff] %v497
        %2121 = vst [vmem:[%s349 + $0x8] sm:$0xff] %v498
        %s2122 = sand.u32 %s207, 1
        %s2123 = scalar_lea.sflag [#allocation4], %s2122
        %s2124 = sand.u32 %s207, 1
        %s2125 = smul.addr %s2124, 8
        %s2126 = scalar_lea.vmem [#allocation3], %s2125
        %s2127 = sand.u32 %s235, 1
        %s2128 = scalar_lea.sflag [#allocation6], %s2127
        %s2129 = sand.u32 %s235, 1
        %s2130 = smul.addr %s2129, 16
        %s2131 = scalar_lea.vmem [#allocation5], %s2130
        // Predicated region
        $region81: #{tpu_custom_call.1} parent=47 // pred_check
          %p2132 = pneg %p217
        $region82: #{tpu_custom_call.1} parent=47 // pred_check_branch
          %2134 = sbr.rel (%p2132) target = $region84
        $region83: #{tpu_custom_call.1} parent=47 // pred_region
          %s2135 = smul.u32 2, %s31
          %s2137 = ssub.s32 128, 128
          %2138 = vsyncadd %s2123, %s2137
          %s2139 = smul.addr %s30, 2
          %s2140 = sadd.s32 %s2135, %s2139
          %s2141 = smul.addr %s2140, 64
          %s2142 = scalar_lea.hbm %s7, %s2141
          %s2144 = sshll.u32 %s2126, 4
          %s2145 = int_to_ptr.vmem [resolvable:$true] %s2144
          %2147 = dma.vmem_to_hbm [thread:$0]  %s2145, 128, %s2142, %s2123
        $region84: #{tpu_custom_call.1} parent=47 // pred_fallthru
          _
        // Predicated region
        $region85: #{tpu_custom_call.1} parent=47 // pred_check
          %p2148 = pneg %p245
        $region86: #{tpu_custom_call.1} parent=47 // pred_check_branch
          %2150 = sbr.rel (%p2148) target = $region88
        $region87: #{tpu_custom_call.1} parent=47 // pred_region
          %s2151 = smul.u32 2, %s31
          %s2153 = ssub.s32 256, 256
          %2154 = vsyncadd %s2128, %s2153
          %s2155 = smul.addr %s30, 2
          %s2156 = sadd.s32 %s2151, %s2155
          %s2157 = smul.addr %s2156, 128
          %s2158 = scalar_lea.hbm %s8, %s2157
          %s2160 = sshll.u32 %s2131, 4
          %s2161 = int_to_ptr.vmem [resolvable:$true] %s2160
          %2163 = dma.vmem_to_hbm [thread:$0]  %s2161, 256, %s2158, %s2128
        $region88: #{tpu_custom_call.1} parent=47 // pred_fallthru
          _
      $region48: #{tpu_custom_call.1} parent=5 // pred_fallthru
        _
      %p2164 = scmp.le.s32.totalorder 2, %s21
      // Predicated region
      $region89: #{tpu_custom_call.1} parent=5 // pred_check
        %p2165 = pneg %p2164
      $region90: #{tpu_custom_call.1} parent=5 // pred_check_branch
        %2167 = sbr.rel (%p2165) target = $region92
      $region91: #{tpu_custom_call.1} parent=5 // pred_region
        %s2168 = ssub.s32 %s21, 2
        // Predicated region
        $region93: #{tpu_custom_call.1} parent=91 // pred_check
          %p2169 = pneg %p223
        $region94: #{tpu_custom_call.1} parent=91 // pred_check_branch
          %2171 = sbr.rel (%p2169) target = $region96
        $region95: #{tpu_custom_call.1} parent=91 // pred_region
          %s2172 = sand.u32 %s208, 1
          %s2173 = scalar_lea.sflag [#allocation4], %s2172
          %s2174 = sand.u32 %s208, 1
          %s2175 = smul.addr %s2174, 8
          %s2176 = scalar_lea.vmem [#allocation3], %s2175
          %2177 = dma.done %s2173, 128
        $region96: #{tpu_custom_call.1} parent=91 // pred_fallthru
          _
        // Predicated region
        $region97: #{tpu_custom_call.1} parent=91 // pred_check
          %p2178 = pneg %p251
        $region98: #{tpu_custom_call.1} parent=91 // pred_check_branch
          %2180 = sbr.rel (%p2178) target = $region100
        $region99: #{tpu_custom_call.1} parent=91 // pred_region
          %s2181 = sand.u32 %s236, 1
          %s2182 = scalar_lea.sflag [#allocation6], %s2181
          %s2183 = sand.u32 %s236, 1
          %s2184 = smul.addr %s2183, 16
          %s2185 = scalar_lea.vmem [#allocation5], %s2184
          %2186 = dma.done %s2182, 256
        $region100: #{tpu_custom_call.1} parent=91 // pred_fallthru
          _
      $region92: #{tpu_custom_call.1} parent=5 // pred_fallthru
        _
    $region6: #{tpu_custom_call.1} parent=1 // loop_footer
      %s25 = sadd.s32 1, %s21
    $region7: #{tpu_custom_call.1} parent=1 // loop_footer_branch
      %20 = sbr.rel target = $region3
    $region8: #{tpu_custom_call.1} parent=1 // loop_exit
      _
    %2187 = vsyncpa [#allocation4], 1
    %s2188 = scalar_lea.sflag [#allocation4], 1
    %2189 = vsyncpa %s2188, 1
    %2190 = vsyncpa [#allocation6], 1
    %s2191 = scalar_lea.sflag [#allocation6], 1
    %2192 = vsyncpa %s2191, 1

// kernel: tpu_custom_call.1
$region0: #{tpu_custom_call.1}
  #allocation0 [shape = 'u32[]', space=smem, size = 0x4, offset = 0x4, fixed_abs, tag = 'smem constant byte address 0x4 - core index']
  #allocation1 [shape = 'u32[144,128]{1,0:T(1,128)}', space=vmem, size = 0x12000, scoped, tag = 'internal scratch']
  #allocation2 [shape = 'f32[4,256]{1,0:T(4,128)}', space=vmem, size = 0x1000, scoped, tag = 'scratch operand']
  %s0 = inlined_call_operand.vmem [shape: f32[2,4,256], index: 0, kind: input, shape index: {}]
  %s1 = inlined_call_operand.vmem [shape: f32[8,4], index: 1, kind: input, shape index: {}]
  %s2 = inlined_call_operand.vmem [shape: f32[2,8,1], index: 2, kind: input, shape index: {}]
  %s3 = inlined_call_operand.vmem [shape: bf16[8,16,4], index: 3, kind: input, shape index: {}]
  %s4 = inlined_call_operand.vmem [shape: f32[16,8], index: 4, kind: input, shape index: {}]
  %s5 = inlined_call_operand.vmem [shape: bf16[8,4,16], index: 5, kind: input, shape index: {}]
  %s6 = inlined_call_operand.vmem [shape: f32[4,8], index: 6, kind: input, shape index: {}]
  %s7 = inlined_call_operand.hbm [shape: f32[2,4,256], index: 7, kind: output, shape index: {0}]
  %s8 = inlined_call_operand.hbm [shape: f32[2,8,256], index: 8, kind: output, shape index: {1}]
  %9 = xla_tuple %s7, %s8
  %s10 = sld [smem:[#allocation0]]
  $region69: #{tpu_custom_call.1} parent=0
    _
  %s12 = ssub.s32 1, %s10
  %s13 = scalar_select 0, %s12, %s10
  $region1: #{tpu_custom_call.1} parent=0
    #allocation3 [shape = 'u8[8192]{0}', space=vmem, size = 0x2000, scoped, tag = 'output window, operand 0']
    #allocation4 [shape = 's32[2]{0}', space=sflag, size = 0x8, scoped, tag = 'scoped memory for tpu_custom_call.1']
    #allocation5 [shape = 'u8[16384]{0}', space=vmem, size = 0x4000, scoped, tag = 'output window, operand 1']
    #allocation6 [shape = 's32[2]{0}', space=sflag, size = 0x8, scoped, tag = 'scoped memory for tpu_custom_call.1']
    %14 = vsyncpa [#allocation4], 0
    %s15 = scalar_lea.sflag [#allocation4], 1
    %16 = vsyncpa %s15, 0
    %17 = vsyncpa [#allocation6], 0
    %s18 = scalar_lea.sflag [#allocation6], 1
    %19 = vsyncpa %s18, 0
    loop: start=0, step=1, limit=4
    $region2: #{tpu_custom_call.1} parent=1 // loop_pre_header
      _
    $region3: #{tpu_custom_call.1} parent=1 // loop_header
      %s21 = sphi 0, %s25
      %p22 = scmp.ge.s32.totalorder %s21, 4
      %s28 = sphi 0, %s40
      %s29 = sphi 0, %s36
      %s30 = sphi 0, %s28
      %s31 = sphi 0, %s29
      %s32 = sphi 0, %s30
      %s33 = sphi 0, %s31
      %s45 = sphi 0, %s47
      %s48 = sphi 0, %s45
      %s49 = sphi 0, %s48
      %s65 = sphi 0, %s49
      %s69 = sphi 0, %s69
      %s71 = sphi 0, %s69
      %s72 = sphi 0, %s71
      %s86 = sphi 0, %s72
      %s92 = sphi 0, %s94
      %s95 = sphi 0, %s92
      %s96 = sphi 0, %s95
      %s112 = sphi 0, %s96
      %s116 = sphi 0, %s116
      %s118 = sphi 0, %s116
      %s119 = sphi 0, %s118
      %s133 = sphi 0, %s119
      %s137 = sphi 0, %s137
      %s139 = sphi 0, %s137
      %s140 = sphi 0, %s139
      %s154 = sphi 0, %s140
      %s158 = sphi 0, %s158
      %s160 = sphi 0, %s158
      %s161 = sphi 0, %s160
      %s175 = sphi 0, %s161
      %s179 = sphi 0, %s179
      %s181 = sphi 0, %s179
      %s182 = sphi 0, %s181
      %s196 = sphi 0, %s182
      %s204 = sphi 0, %s206
      %s207 = sphi 0, %s204
      %s208 = sphi 0, %s207
      %s224 = sphi 0, %s208
      %s232 = sphi 0, %s234
      %s235 = sphi 0, %s232
      %s236 = sphi 0, %s235
      %s252 = sphi 0, %s236
    $region4: #{tpu_custom_call.1} parent=1 // loop_header_branch
      %24 = sbr.rel (%p22) target = $region8
    $region5: #{tpu_custom_call.1} parent=1 // loop_body
      %s26 = ssub.s32 %s21, 1
      %s27 = ssub.s32 %s21, 2
      %s34 = sadd.s32 1, %s29
      %p35 = scmp.ge.s32.totalorder %s34, 1
      %s36 = scalar_select %p35, 0, %s34
      %s37 = sadd.s32 1, %s28
      %s38 = scalar_select %p35, %s37, %s28
      %p39 = scmp.ge.s32.totalorder %s38, 2
      %s40 = scalar_select %p39, 0, %s38
      %s41 = ssub.s32 %s28, %s40
      %s42 = ssub.s32 %s29, %s36
      %s43 = sor.u32 %s41, %s42
      %p44 = scmp.eq.s32.totalorder %s43, 0
      %s46 = sadd.s32 %s45, 1
      %s47 = scalar_select %p44, %s45, %s46
      %p50 = pneg %p44
      %p51 = scmp.eq.s32.totalorder %s21, 1
      %p52 = por %p50, %p51
      %p53 = scmp.ne.s32.totalorder %s45, %s48
      %p54 = scmp.eq.s32.totalorder %s21, 0
      %p55 = por %p53, %p54
      %p56 = scmp.ne.s32.totalorder %s45, %s48
      %p57 = scmp.eq.s32.totalorder %s26, 1
      %p58 = por %p56, %p57
      %p59 = scmp.ne.s32.totalorder %s48, %s49
      %p60 = scmp.eq.s32.totalorder %s26, 0
      %p61 = por %p59, %p60
      %p62 = scmp.ne.s32.totalorder %s48, %s49
      %p63 = scmp.eq.s32.totalorder %s27, 1
      %p64 = por %p62, %p63
      %p66 = scmp.ne.s32.totalorder %s49, %s65
      %p67 = scmp.eq.s32.totalorder %s27, 0
      %p68 = por %p66, %p67
      %s70 = sadd.s32 %s69, 1
      %p73 = scmp.eq.s32.totalorder %s21, 1
      %p74 = scmp.ne.s32.totalorder %s69, %s71
      %p75 = scmp.eq.s32.totalorder %s21, 0
      %p76 = por %p74, %p75
      %p77 = scmp.ne.s32.totalorder %s69, %s71
      %p78 = scmp.eq.s32.totalorder %s26, 1
      %p79 = por %p77, %p78
      %p80 = scmp.ne.s32.totalorder %s71, %s72
      %p81 = scmp.eq.s32.totalorder %s26, 0
      %p82 = por %p80, %p81
      %p83 = scmp.ne.s32.totalorder %s71, %s72
      %p84 = scmp.eq.s32.totalorder %s27, 1
      %p85 = por %p83, %p84
      %p87 = scmp.ne.s32.totalorder %s72, %s86
      %p88 = scmp.eq.s32.totalorder %s27, 0
      %p89 = por %p87, %p88
      %s90 = ssub.s32 %s28, %s40
      %p91 = scmp.eq.s32.totalorder %s90, 0
      %s93 = sadd.s32 %s92, 1
      %s94 = scalar_select %p91, %s92, %s93
      %p97 = pneg %p91
      %p98 = scmp.eq.s32.totalorder %s21, 1
      %p99 = por %p97, %p98
      %p100 = scmp.ne.s32.totalorder %s92, %s95
      %p101 = scmp.eq.s32.totalorder %s21, 0
      %p102 = por %p100, %p101
      %p103 = scmp.ne.s32.totalorder %s92, %s95
      %p104 = scmp.eq.s32.totalorder %s26, 1
      %p105 = por %p103, %p104
      %p106 = scmp.ne.s32.totalorder %s95, %s96
      %p107 = scmp.eq.s32.totalorder %s26, 0
      %p108 = por %p106, %p107
      %p109 = scmp.ne.s32.totalorder %s95, %s96
      %p110 = scmp.eq.s32.totalorder %s27, 1
      %p111 = por %p109, %p110
      %p113 = scmp.ne.s32.totalorder %s96, %s112
      %p114 = scmp.eq.s32.totalorder %s27, 0
      %p115 = por %p113, %p114
      %s117 = sadd.s32 %s116, 1
      %p120 = scmp.eq.s32.totalorder %s21, 1
      %p121 = scmp.ne.s32.totalorder %s116, %s118
      %p122 = scmp.eq.s32.totalorder %s21, 0
      %p123 = por %p121, %p122
      %p124 = scmp.ne.s32.totalorder %s116, %s118
      %p125 = scmp.eq.s32.totalorder %s26, 1
      %p126 = por %p124, %p125
      %p127 = scmp.ne.s32.totalorder %s118, %s119
      %p128 = scmp.eq.s32.totalorder %s26, 0
      %p129 = por %p127, %p128
      %p130 = scmp.ne.s32.totalorder %s118, %s119
      %p131 = scmp.eq.s32.totalorder %s27, 1
      %p132 = por %p130, %p131
      %p134 = scmp.ne.s32.totalorder %s119, %s133
      %p135 = scmp.eq.s32.totalorder %s27, 0
      %p136 = por %p134, %p135
      %s138 = sadd.s32 %s137, 1
      %p141 = scmp.eq.s32.totalorder %s21, 1
      %p142 = scmp.ne.s32.totalorder %s137, %s139
      %p143 = scmp.eq.s32.totalorder %s21, 0
      %p144 = por %p142, %p143
      %p145 = scmp.ne.s32.totalorder %s137, %s139
      %p146 = scmp.eq.s32.totalorder %s26, 1
      %p147 = por %p145, %p146
      %p148 = scmp.ne.s32.totalorder %s139, %s140
      %p149 = scmp.eq.s32.totalorder %s26, 0
      %p150 = por %p148, %p149
      %p151 = scmp.ne.s32.totalorder %s139, %s140
      %p152 = scmp.eq.s32.totalorder %s27, 1
      %p153 = por %p151, %p152
      %p155 = scmp.ne.s32.totalorder %s140, %s154
      %p156 = scmp.eq.s32.totalorder %s27, 0
      %p157 = por %p155, %p156
      %s159 = sadd.s32 %s158, 1
      %p162 = scmp.eq.s32.totalorder %s21, 1
      %p163 = scmp.ne.s32.totalorder %s158, %s160
      %p164 = scmp.eq.s32.totalorder %s21, 0
      %p165 = por %p163, %p164
      %p166 = scmp.ne.s32.totalorder %s158, %s160
      %p167 = scmp.eq.s32.totalorder %s26, 1
      %p168 = por %p166, %p167
      %p169 = scmp.ne.s32.totalorder %s160, %s161
      %p170 = scmp.eq.s32.totalorder %s26, 0
      %p171 = por %p169, %p170
      %p172 = scmp.ne.s32.totalorder %s160, %s161
      %p173 = scmp.eq.s32.totalorder %s27, 1
      %p174 = por %p172, %p173
      %p176 = scmp.ne.s32.totalorder %s161, %s175
      %p177 = scmp.eq.s32.totalorder %s27, 0
      %p178 = por %p176, %p177
      %s180 = sadd.s32 %s179, 1
      %p183 = scmp.eq.s32.totalorder %s21, 1
      %p184 = scmp.ne.s32.totalorder %s179, %s181
      %p185 = scmp.eq.s32.totalorder %s21, 0
      %p186 = por %p184, %p185
      %p187 = scmp.ne.s32.totalorder %s179, %s181
      %p188 = scmp.eq.s32.totalorder %s26, 1
      %p189 = por %p187, %p188
      %p190 = scmp.ne.s32.totalorder %s181, %s182
      %p191 = scmp.eq.s32.totalorder %s26, 0
      %p192 = por %p190, %p191
      %p193 = scmp.ne.s32.totalorder %s181, %s182
      %p194 = scmp.eq.s32.totalorder %s27, 1
      %p195 = por %p193, %p194
      %p197 = scmp.ne.s32.totalorder %s182, %s196
      %p198 = scmp.eq.s32.totalorder %s27, 0
      %p199 = por %p197, %p198
      %s200 = ssub.s32 %s28, %s40
      %s201 = ssub.s32 %s29, %s36
      %s202 = sor.u32 %s200, %s201
      %p203 = scmp.eq.s32.totalorder %s202, 0
      %s205 = sadd.s32 %s204, 1
      %s206 = scalar_select %p203, %s204, %s205
      %p209 = pneg %p203
      %p210 = scmp.eq.s32.totalorder %s21, 1
      %p211 = por %p209, %p210
      %p212 = scmp.ne.s32.totalorder %s204, %s207
      %p213 = scmp.eq.s32.totalorder %s21, 0
      %p214 = por %p212, %p213
      %p215 = scmp.ne.s32.totalorder %s204, %s207
      %p216 = scmp.eq.s32.totalorder %s26, 1
      %p217 = por %p215, %p216
      %p218 = scmp.ne.s32.totalorder %s207, %s208
      %p219 = scmp.eq.s32.totalorder %s26, 0
      %p220 = por %p218, %p219
      %p221 = scmp.ne.s32.totalorder %s207, %s208
      %p222 = scmp.eq.s32.totalorder %s27, 1
      %p223 = por %p221, %p222
      %p225 = scmp.ne.s32.totalorder %s208, %s224
      %p226 = scmp.eq.s32.totalorder %s27, 0
      %p227 = por %p225, %p226
      %s228 = ssub.s32 %s28, %s40
      %s229 = ssub.s32 %s29, %s36
      %s230 = sor.u32 %s228, %s229
      %p231 = scmp.eq.s32.totalorder %s230, 0
      %s233 = sadd.s32 %s232, 1
      %s234 = scalar_select %p231, %s232, %s233
      %p237 = pneg %p231
      %p238 = scmp.eq.s32.totalorder %s21, 1
      %p239 = por %p237, %p238
      %p240 = scmp.ne.s32.totalorder %s232, %s235
      %p241 = scmp.eq.s32.totalorder %s21, 0
      %p242 = por %p240, %p241
      %p243 = scmp.ne.s32.totalorder %s232, %s235
      %p244 = scmp.eq.s32.totalorder %s26, 1
      %p245 = por %p243, %p244
      %p246 = scmp.ne.s32.totalorder %s235, %s236
      %p247 = scmp.eq.s32.totalorder %s26, 0
      %p248 = por %p246, %p247
      %p249 = scmp.ne.s32.totalorder %s235, %s236
      %p250 = scmp.eq.s32.totalorder %s27, 1
      %p251 = por %p249, %p250
      %p253 = scmp.ne.s32.totalorder %s236, %s252
      %p254 = scmp.eq.s32.totalorder %s27, 0
      %p255 = por %p253, %p254
      %p256 = scmp.le.s32.totalorder 1, %s21
      %p257 = scmp.lt.s32.totalorder %s21, 3
      %p258 = pnand %p256, %p257
      %p259 = pneg %p258
      // Predicated region
      $region9: #{tpu_custom_call.1} parent=5 // pred_check
        _
      $region10: #{tpu_custom_call.1} parent=5 // pred_check_branch
        %261 = sbr.rel (%p258) target = $region12
      $region11: #{tpu_custom_call.1} parent=5 // pred_region
        %s262 = ssub.s32 %s21, 1
        // Predicated region
        $region13: #{tpu_custom_call.1} parent=11 // pred_check
          %p263 = pneg %p82
        $region14: #{tpu_custom_call.1} parent=11 // pred_check_branch
          %265 = sbr.rel (%p263) target = $region16
        $region15: #{tpu_custom_call.1} parent=11 // pred_region
          _
        $region16: #{tpu_custom_call.1} parent=11 // pred_fallthru
          _
        // Predicated region
        $region17: #{tpu_custom_call.1} parent=11 // pred_check
          %p266 = pneg %p129
        $region18: #{tpu_custom_call.1} parent=11 // pred_check_branch
          %268 = sbr.rel (%p266) target = $region20
        $region19: #{tpu_custom_call.1} parent=11 // pred_region
          _
        $region20: #{tpu_custom_call.1} parent=11 // pred_fallthru
          _
        // Predicated region
        $region21: #{tpu_custom_call.1} parent=11 // pred_check
          %p269 = pneg %p150
        $region22: #{tpu_custom_call.1} parent=11 // pred_check_branch
          %271 = sbr.rel (%p269) target = $region24
        $region23: #{tpu_custom_call.1} parent=11 // pred_region
          _
        $region24: #{tpu_custom_call.1} parent=11 // pred_fallthru
          _
        // Predicated region
        $region25: #{tpu_custom_call.1} parent=11 // pred_check
          %p272 = pneg %p171
        $region26: #{tpu_custom_call.1} parent=11 // pred_check_branch
          %274 = sbr.rel (%p272) target = $region28
        $region27: #{tpu_custom_call.1} parent=11 // pred_region
          _
        $region28: #{tpu_custom_call.1} parent=11 // pred_fallthru
          _
        // Predicated region
        $region29: #{tpu_custom_call.1} parent=11 // pred_check
          %p275 = pneg %p192
        $region30: #{tpu_custom_call.1} parent=11 // pred_check_branch
          %277 = sbr.rel (%p275) target = $region32
        $region31: #{tpu_custom_call.1} parent=11 // pred_region
          _
        $region32: #{tpu_custom_call.1} parent=11 // pred_fallthru
          _
      $region12: #{tpu_custom_call.1} parent=5 // pred_fallthru
        _
      %p278 = scmp.lt.s32.totalorder %s21, 2
      // Predicated region
      $region33: #{tpu_custom_call.1} parent=5 // pred_check
        %p279 = pneg %p278
      $region34: #{tpu_custom_call.1} parent=5 // pred_check_branch
        %281 = sbr.rel (%p279) target = $region36
      $region35: #{tpu_custom_call.1} parent=5 // pred_region
        // Predicated region
        $region37: #{tpu_custom_call.1} parent=35 // pred_check
          %p282 = pneg %p55
        $region38: #{tpu_custom_call.1} parent=35 // pred_check_branch
          %284 = sbr.rel (%p282) target = $region40
        $region39: #{tpu_custom_call.1} parent=35 // pred_region
          %s285 = smul.u32 2, %s29
          %p286 = scmp.lt.s32.totalorder %s28, 1
          %s287 = scalar_select %p286, %s28, 1
          %p288 = scmp.lt.s32.totalorder %s285, 1
          %s289 = scalar_select %p288, %s285, 1
          %s290 = smul.addr %s287, 2
          %s291 = sadd.s32 %s289, %s290
          %s292 = smul.addr %s291, 4
          %s293 = scalar_lea.vmem %s0, %s292
          %s294 = smul.u32 2, %s29
        $region40: #{tpu_custom_call.1} parent=35 // pred_fallthru
          _
        // Predicated region
        $region41: #{tpu_custom_call.1} parent=35 // pred_check
          %p295 = pneg %p102
        $region42: #{tpu_custom_call.1} parent=35 // pred_check_branch
          %297 = sbr.rel (%p295) target = $region44
        $region43: #{tpu_custom_call.1} parent=35 // pred_region
          %p298 = scmp.lt.s32.totalorder %s28, 1
          %s299 = scalar_select %p298, %s28, 1
          %s300 = smul.addr %s299, 8
          %s301 = scalar_lea.vmem %s2, %s300
        $region44: #{tpu_custom_call.1} parent=35 // pred_fallthru
          _
      $region36: #{tpu_custom_call.1} parent=5 // pred_fallthru
        _
      %p302 = scmp.le.s32.totalorder 1, %s21
      %p303 = scmp.lt.s32.totalorder %s21, 3
      %p304 = pnand %p302, %p303
      %p305 = pneg %p304
      // Predicated region
      $region45: #{tpu_custom_call.1} parent=5 // pred_check
        _
      $region46: #{tpu_custom_call.1} parent=5 // pred_check_branch
        %307 = sbr.rel (%p304) target = $region48
      $region47: #{tpu_custom_call.1} parent=5 // pred_region
        %s308 = ssub.s32 %s21, 1
        %s309 = smul.u32 2, %s31
        %p310 = scmp.lt.s32.totalorder %s30, 1
        %s311 = scalar_select %p310, %s30, 1
        %p312 = scmp.lt.s32.totalorder %s309, 1
        %s313 = scalar_select %p312, %s309, 1
        %s314 = smul.addr %s311, 2
        %s315 = sadd.s32 %s313, %s314
        %s316 = smul.addr %s315, 4
        %s317 = scalar_lea.vmem %s0, %s316
        %p318 = pneg %p61
        %p319 = pneg %p58
        %p320 = pneg %p82
        %p321 = pneg %p79
        %p322 = scmp.lt.s32.totalorder %s30, 1
        %s323 = scalar_select %p322, %s30, 1
        %s324 = smul.addr %s323, 8
        %s325 = scalar_lea.vmem %s2, %s324
        %p326 = pneg %p108
        %p327 = pneg %p105
        %p328 = pneg %p129
        %p329 = pneg %p126
        %p330 = pneg %p150
        %p331 = pneg %p147
        %p332 = pneg %p171
        %p333 = pneg %p168
        %p334 = pneg %p192
        %p335 = pneg %p189
        %p336 = pneg %p220
        %p337 = pneg %p217
        %s338 = sand.u32 %s207, 1
        %s339 = scalar_lea.sflag [#allocation4], %s338
        %s340 = sand.u32 %s207, 1
        %s341 = smul.addr %s340, 8
        %s342 = scalar_lea.vmem [#allocation3], %s341
        %p343 = pneg %p248
        %p344 = pneg %p245
        %s345 = sand.u32 %s235, 1
        %s346 = scalar_lea.sflag [#allocation6], %s345
        %s347 = sand.u32 %s235, 1
        %s348 = smul.addr %s347, 16
        %s349 = scalar_lea.vmem [#allocation5], %s348
        %s350 = smul.u32 2, %s31
        %p351 = scmp.lt.s32.totalorder %s30, 1
        %s352 = scalar_select %p351, %s30, 1
        %p353 = scmp.lt.s32.totalorder %s350, 1
        %s354 = scalar_select %p353, %s350, 1
        %s355 = smul.addr %s352, 2
        %s356 = sadd.s32 %s354, %s355
        %s357 = smul.addr %s356, 4
        %s358 = scalar_lea.vmem %s0, %s357
        %s359 = smul.u32 2, %s31
        %p360 = scmp.lt.s32.totalorder %s30, 1
        %s361 = scalar_select %p360, %s30, 1
        %s362 = smul.addr %s361, 8
        %s363 = scalar_lea.vmem %s2, %s362
        %s364 = smul.u32 2, %s31
        %s365 = smul.u32 2, %s31
        %v367 = vld [vmem:[%s358] sm:$0xff]
        %v368 = vld [vmem:[%s1] sm:$0xff]
        %v369 = vld [vmem:[%s363] sm:$0xff]
        %371 = vset.pattern.permute.xlu0 0
        %372 = vperm.xlu0 %371, %v369
        %v373 = vpop.permute.xlu0 %372
        %v376 = vcombine.high %v367, %v367
        %vm377 = vcmask 31744
        %v379 = vsel %vm377, %v368, 0
        %vm381 = vcmask 1043456
        %v382 = vsel %vm381, %v367, 0
        %v384 = vsel %vm381, %v376, 0
        %386 = vmatprep.subr.mxu0 0.0
        %387 = vmatpush1.msra.mxu0 0.0
        %388 = vmatprep.subr.mxu0 0.0
        %389 = vmatpush1.msra.mxu0 0.0
        %390 = vmatprep.subr.mxu0 0.0
        %391 = vmatpush1.msra.mxu0 0.0
        %392 = vmatprep.subr.mxu0 0.0
        %393 = vmatpush1.msra.mxu0 0.0
        %394 = vmatprep.subr.mxu0 0.0
        %395 = vmatpush1.msra.mxu0 0.0
        %396 = vmatprep.subr.mxu0 0.0
        %397 = vmatpush1.msra.mxu0 0.0
        %398 = vmatprep.subr.mxu0 0.0
        %399 = vmatpush1.msra.mxu0 0.0
        %400 = vmatprep.subr.mxu0 0.0
        %401 = vmatpush1.msra.mxu0 0.0
        %402 = vmatprep.subr.mxu0 0.0
        %403 = vmatpush1.msra.mxu0 0.0
        %404 = vmatprep.subr.mxu0 0.0
        %405 = vmatpush1.msra.mxu0 0.0
        %406 = vmatprep.subr.mxu0 0.0
        %407 = vmatpush1.msra.mxu0 0.0
        %408 = vmatprep.subr.mxu0 0.0
        %409 = vmatpush1.msra.mxu0 0.0
        %410 = vmatprep.subr.mxu0 0.0
        %411 = vmatpush1.msra.mxu0 0.0
        %412 = vmatprep.subr.mxu0 0.0
        %413 = vmatpush1.msra.mxu0 0.0
        %414 = vmatprep.subr.mxu0 0.0
        %415 = vmatpush1.msra.mxu0 0.0
        %416 = vmatprep.subr.mxu0 %v384
        %417 = vmatpush1.msra.mxu0 %v382
        %418 = vmatprep.subr.mxu0 0.0
        %419 = vmatpush2.msra.mxu0 0.0
        %420 = vmatprep.subr.mxu0 0.0
        %421 = vmatpush2.msra.mxu0 0.0
        %422 = vmatprep.subr.mxu0 0.0
        %423 = vmatpush2.msra.mxu0 0.0
        %424 = vmatprep.subr.mxu0 0.0
        %425 = vmatpush2.msra.mxu0 0.0
        %426 = vmatprep.subr.mxu0 0.0
        %427 = vmatpush2.msra.mxu0 0.0
        %428 = vmatprep.subr.mxu0 0.0
        %429 = vmatpush2.msra.mxu0 0.0
        %430 = vmatprep.subr.mxu0 0.0
        %431 = vmatpush2.msra.mxu0 0.0
        %432 = vmatprep.subr.mxu0 0.0
        %433 = vmatpush2.msra.mxu0 0.0
        %434 = vmatprep.subr.mxu0 0.0
        %435 = vmatpush2.msra.mxu0 0.0
        %436 = vmatprep.subr.mxu0 0.0
        %437 = vmatpush2.msra.mxu0 0.0
        %438 = vmatprep.subr.mxu0 0.0
        %439 = vmatpush2.msra.mxu0 0.0
        %440 = vmatprep.subr.mxu0 0.0
        %441 = vmatpush2.msra.mxu0 0.0
        %442 = vmatprep.subr.mxu0 0.0
        %443 = vmatpush2.msra.mxu0 0.0
        %444 = vmatprep.subr.mxu0 0.0
        %445 = vmatpush2.msra.mxu0 0.0
        %446 = vmatprep.subr.mxu0 0.0
        %447 = vmatpush2.msra.mxu0 0.0
        %448 = vmatprep.subr.mxu0 0.0
        %449 = vmatpush2.msra.mxu0 0.0
        %450 = vmatprep.mubr.f32.mxu0 0.0
        %451 = vmatmul.mubr.f32.gmra.mxu0 %v379
        %v452 = vpop.f32.mrf.mxu0
        %v453 = vadd.f32 %v373, %v452
        %v454 = vpop.f32.mrf.mxu0
        %v455 = vadd.f32 %v373, %v454
        %456 = vdwg.mxu0
        %v457 = vrot.slane %v453, 4
        %v458 = vmax.f32 %v453, %v457
        %v459 = vrot.slane %v458, 2
        %v460 = vmax.f32 %v458, %v459
        %v461 = vrot.slane %v460, 1
        %v462 = vmax.f32 %v460, %v461
        %v463 = vrot.slane %v455, 4
        %v464 = vmax.f32 %v455, %v463
        %v465 = vrot.slane %v464, 2
        %v466 = vmax.f32 %v464, %v465
        %v467 = vrot.slane %v466, 1
        %v468 = vmax.f32 %v466, %v467
        %v469 = vlaneseq
        %v470 = vshrl.u32 %v469, 7
        %vm471 = vcmp.ge.f32.partialorder %v453, %v462
        %vm472 = vcmp.ge.f32.partialorder %v455, %v468
        %v473 = vsel %vm471, %v470, 8
        %v474 = vsel %vm472, %v470, 8
        %v475 = vrot.slane %v473, 4
        %vm476 = vcmp.lt.s32.totalorder %v473, %v475
        %v477 = vsel %vm476, %v473, %v475
        %v478 = vrot.slane %v477, 2
        %vm479 = vcmp.lt.s32.totalorder %v477, %v478
        %v480 = vsel %vm479, %v477, %v478
        %v481 = vrot.slane %v480, 1
        %vm482 = vcmp.lt.s32.totalorder %v480, %v481
        %v483 = vsel %vm482, %v480, %v481
        %v484 = vrot.slane %v474, 4
        %vm485 = vcmp.lt.s32.totalorder %v474, %v484
        %v486 = vsel %vm485, %v474, %v484
        %v487 = vrot.slane %v486, 2
        %vm488 = vcmp.lt.s32.totalorder %v486, %v487
        %v489 = vsel %vm488, %v486, %v487
        %v490 = vrot.slane %v489, 1
        %vm491 = vcmp.lt.s32.totalorder %v489, %v490
        %v492 = vsel %vm491, %v489, %v490
        %vm493 = vcmp.eq.s32.totalorder %v470, %v483
        %vm494 = vcmp.eq.s32.totalorder %v470, %v492
        %v495 = vsel %vm493, 1, 0
        %v496 = vsel %vm494, 1, 0
        %v497 = vcvt.s32.f32 %v495
        %v498 = vcvt.s32.f32 %v496
        %v500 = vpack.c.bf16 %v367, %v367
        %v501 = vpack.c.bf16 %v376, %v376
        %502 = vst [vmem:[#allocation2] sm:$0xff] 0.0
        %v503 = vld [vmem:[%s3] sm:$0xf]
        %v504 = vld [vmem:[%s3 + $0x4] sm:$0xf]
        %v505 = vld [vmem:[%s4] sm:$0xff]
        %v506 = vld [vmem:[%s4 + $0x8] sm:$0xff]
        %508 = vset.pattern.permute.xlu0 0
        %509 = vperm.xlu0 %508, %v505
        %v510 = vpop.permute.xlu0 %509
        %513 = vset.pattern.permute.xlu0 0
        %514 = vperm.xlu0 %513, %v506
        %v515 = vpop.permute.xlu0 %514
        %v519 = vunpack.c.l.b16 %v503
        %v520 = vunpack.c.l.b16 %v504
        %v521 = vpack.c.b16 %v520, %v519
        %v523 = vsel %vm377, %v521, 0
        %vm525 = vcmask 1041408
        %v527 = vsel %vm525, %v500, 0
        %v530 = vsel %vm525, %v501, 0
        %532 = vmatprep.subr.bf16.mxu0 0
        %533 = vmatpush1.bf16.msra.mxu0 0
        %534 = vmatprep.subr.bf16.mxu0 0
        %535 = vmatpush1.bf16.msra.mxu0 0
        %536 = vmatprep.subr.bf16.mxu0 0
        %537 = vmatpush1.bf16.msra.mxu0 0
        %538 = vmatprep.subr.bf16.mxu0 0
        %539 = vmatpush1.bf16.msra.mxu0 0
        %540 = vmatprep.subr.bf16.mxu0 0
        %541 = vmatpush1.bf16.msra.mxu0 0
        %542 = vmatprep.subr.bf16.mxu0 0
        %543 = vmatpush1.bf16.msra.mxu0 0
        %544 = vmatprep.subr.bf16.mxu0 0
        %545 = vmatpush1.bf16.msra.mxu0 0
        %546 = vmatprep.subr.bf16.mxu0 %v530
        %547 = vmatpush1.bf16.msra.mxu0 %v527
        %548 = vmatprep.subr.bf16.mxu0 0
        %549 = vmatpush2.bf16.msra.mxu0 0
        %550 = vmatprep.subr.bf16.mxu0 0
        %551 = vmatpush2.bf16.msra.mxu0 0
        %552 = vmatprep.subr.bf16.mxu0 0
        %553 = vmatpush2.bf16.msra.mxu0 0
        %554 = vmatprep.subr.bf16.mxu0 0
        %555 = vmatpush2.bf16.msra.mxu0 0
        %556 = vmatprep.subr.bf16.mxu0 0
        %557 = vmatpush2.bf16.msra.mxu0 0
        %558 = vmatprep.subr.bf16.mxu0 0
        %559 = vmatpush2.bf16.msra.mxu0 0
        %560 = vmatprep.subr.bf16.mxu0 0
        %561 = vmatpush2.bf16.msra.mxu0 0
        %562 = vmatprep.subr.bf16.mxu0 0
        %563 = vmatpush2.bf16.msra.mxu0 0
        %564 = vmatprep.mubr.bf16.mxu0 0
        %565 = vmatmul.mubr.bf16.gmra.mxu0 %v523
        %v566 = vpop.f32.mrf.mxu0
        %v567 = vadd.f32 %v510, %v566
        %v568 = vpop.f32.mrf.mxu0
        %v569 = vadd.f32 %v510, %v568
        %v570 = vpop.f32.mrf.mxu0
        %v571 = vadd.f32 %v515, %v570
        %v572 = vpop.f32.mrf.mxu0
        %v573 = vadd.f32 %v515, %v572
        %574 = vdwg.mxu0
        %v575 = vmul.f32 %v567, 0.5
        %v576 = vmul.f32 %v569, 0.5
        %v577 = vmul.f32 %v571, 0.5
        %v578 = vmul.f32 %v573, 0.5
        %v579 = vmul.f32 %v567, 0.044715
        %v580 = vmul.f32 %v569, 0.044715
        %v581 = vmul.f32 %v571, 0.044715
        %v582 = vmul.f32 %v573, 0.044715
        %v583 = vmul.f32 %v579, %v567
        %v584 = vmul.f32 %v580, %v569
        %v585 = vmul.f32 %v581, %v571
        %v586 = vmul.f32 %v582, %v573
        %v587 = vmul.f32 %v583, %v567
        %v588 = vmul.f32 %v584, %v569
        %v589 = vmul.f32 %v585, %v571
        %v590 = vmul.f32 %v586, %v573
        %v591 = vadd.f32 %v567, %v587
        %v592 = vadd.f32 %v569, %v588
        %v593 = vadd.f32 %v571, %v589
        %v594 = vadd.f32 %v573, %v590
        %v595 = vmul.f32 %v591, 0.7978846
        %v596 = vmul.f32 %v592, 0.7978846
        %v597 = vmul.f32 %v593, 0.7978846
        %v598 = vmul.f32 %v594, 0.7978846
        %v599 = vtanh.pop %v595
        %v600 = vtanh.pop %v596
        %v601 = vtanh.pop %v597
        %v602 = vtanh.pop %v598
        %v603 = vadd.f32 %v599, 1.0
        %v604 = vadd.f32 %v600, 1.0
        %v605 = vadd.f32 %v601, 1.0
        %v606 = vadd.f32 %v602, 1.0
        %v607 = vmul.f32 %v575, %v603
        %v608 = vmul.f32 %v576, %v604
        %v609 = vmul.f32 %v577, %v605
        %v610 = vmul.f32 %v578, %v606
        %v611 = vld [vmem:[%s5] sm:$0x3]
        %v612 = vpack.c.bf16 %v609, %v607
        %v613 = vpack.c.bf16 %v610, %v608
        %vm614 = vcmask 130048
        %v616 = vsel %vm614, %v611, 0
        %618 = vmatprep.subr.bf16.mxu0 0
        %619 = vmatpush1.bf16.msra.mxu0 0
        %620 = vmatprep.subr.bf16.mxu0 0
        %621 = vmatpush1.bf16.msra.mxu0 0
        %622 = vmatprep.subr.bf16.mxu0 0
        %623 = vmatpush1.bf16.msra.mxu0 0
        %624 = vmatprep.subr.bf16.mxu0 0
        %625 = vmatpush1.bf16.msra.mxu0 0
        %626 = vmatprep.subr.bf16.mxu0 0
        %627 = vmatpush1.bf16.msra.mxu0 0
        %628 = vmatprep.subr.bf16.mxu0 0
        %629 = vmatpush1.bf16.msra.mxu0 0
        %630 = vmatprep.subr.bf16.mxu0 0
        %631 = vmatpush1.bf16.msra.mxu0 0
        %632 = vmatprep.subr.bf16.mxu0 %v613
        %633 = vmatpush1.bf16.msra.mxu0 %v612
        %634 = vmatprep.subr.bf16.mxu0 0
        %635 = vmatpush2.bf16.msra.mxu0 0
        %636 = vmatprep.subr.bf16.mxu0 0
        %637 = vmatpush2.bf16.msra.mxu0 0
        %638 = vmatprep.subr.bf16.mxu0 0
        %639 = vmatpush2.bf16.msra.mxu0 0
        %640 = vmatprep.subr.bf16.mxu0 0
        %641 = vmatpush2.bf16.msra.mxu0 0
        %642 = vmatprep.subr.bf16.mxu0 0
        %643 = vmatpush2.bf16.msra.mxu0 0
        %644 = vmatprep.subr.bf16.mxu0 0
        %645 = vmatpush2.bf16.msra.mxu0 0
        %646 = vmatprep.subr.bf16.mxu0 0
        %647 = vmatpush2.bf16.msra.mxu0 0
        %648 = vmatprep.subr.bf16.mxu0 0
        %649 = vmatpush2.bf16.msra.mxu0 0
        %650 = vmatprep.mubr.bf16.mxu0 0
        %651 = vmatmul.mubr.bf16.gmra.mxu0 %v616
        %v652 = vpop.f32.mrf.mxu0
        %v653 = vadd.f32 0.0, %v652
        %v654 = vpop.f32.mrf.mxu0
        %v655 = vadd.f32 0.0, %v654
        %v656 = vpop.f32.mrf.mxu0
        %v657 = vpop.f32.mrf.mxu0
        %658 = vdwg.mxu0
        %v659 = vld [vmem:[#allocation2] sm:$0xff]
        %v660 = vlaneseq
        %v661 = vshrl.u32 %v660, 7
        %v662 = vsub.s32 0, %v661
        %v663 = vrot.slane %v497, %v662
        %v664 = vlaneseq
        %v665 = vshrl.u32 %v664, 7
        %v666 = vsub.s32 0, %v665
        %v667 = vrot.slane %v498, %v666
        %v668 = vmul.f32 %v663, %v653
        %v669 = vmul.f32 %v667, %v655
        %v672 = vcombine.low %v668, %v669
        %v674 = vadd.f32 %v659, %v672
        %675 = vst [vmem:[#allocation2] sm:$0xff] %v674
        %s676 = scalar_lea.vmem %s3, 8
        %v677 = vld [vmem:[%s676] sm:$0xf]
        %v678 = vld [vmem:[%s676 + $0x4] sm:$0xf]
        %v679 = vld [vmem:[%s4] sm:$0xff]
        %v680 = vld [vmem:[%s4 + $0x8] sm:$0xff]
        %682 = vset.pattern.permute.xlu0 1
        %683 = vperm.xlu0 %682, %v679
        %v684 = vpop.permute.xlu0 %683
        %687 = vset.pattern.permute.xlu0 1
        %688 = vperm.xlu0 %687, %v680
        %v689 = vpop.permute.xlu0 %688
        %v693 = vunpack.c.l.b16 %v677
        %v694 = vunpack.c.l.b16 %v678
        %v695 = vpack.c.b16 %v694, %v693
        %v697 = vsel %vm377, %v695, 0
        %699 = vmatprep.subr.bf16.mxu0 0
        %700 = vmatpush1.bf16.msra.mxu0 0
        %701 = vmatprep.subr.bf16.mxu0 0
        %702 = vmatpush1.bf16.msra.mxu0 0
        %703 = vmatprep.subr.bf16.mxu0 0
        %704 = vmatpush1.bf16.msra.mxu0 0
        %705 = vmatprep.subr.bf16.mxu0 0
        %706 = vmatpush1.bf16.msra.mxu0 0
        %707 = vmatprep.subr.bf16.mxu0 0
        %708 = vmatpush1.bf16.msra.mxu0 0
        %709 = vmatprep.subr.bf16.mxu0 0
        %710 = vmatpush1.bf16.msra.mxu0 0
        %711 = vmatprep.subr.bf16.mxu0 0
        %712 = vmatpush1.bf16.msra.mxu0 0
        %713 = vmatprep.subr.bf16.mxu0 %v530
        %714 = vmatpush1.bf16.msra.mxu0 %v527
        %715 = vmatprep.subr.bf16.mxu0 0
        %716 = vmatpush2.bf16.msra.mxu0 0
        %717 = vmatprep.subr.bf16.mxu0 0
        %718 = vmatpush2.bf16.msra.mxu0 0
        %719 = vmatprep.subr.bf16.mxu0 0
        %720 = vmatpush2.bf16.msra.mxu0 0
        %721 = vmatprep.subr.bf16.mxu0 0
        %722 = vmatpush2.bf16.msra.mxu0 0
        %723 = vmatprep.subr.bf16.mxu0 0
        %724 = vmatpush2.bf16.msra.mxu0 0
        %725 = vmatprep.subr.bf16.mxu0 0
        %726 = vmatpush2.bf16.msra.mxu0 0
        %727 = vmatprep.subr.bf16.mxu0 0
        %728 = vmatpush2.bf16.msra.mxu0 0
        %729 = vmatprep.subr.bf16.mxu0 0
        %730 = vmatpush2.bf16.msra.mxu0 0
        %731 = vmatprep.mubr.bf16.mxu0 0
        %732 = vmatmul.mubr.bf16.gmra.mxu0 %v697
        %v733 = vpop.f32.mrf.mxu0
        %v734 = vadd.f32 %v684, %v733
        %v735 = vpop.f32.mrf.mxu0
        %v736 = vadd.f32 %v684, %v735
        %v737 = vpop.f32.mrf.mxu0
        %v738 = vadd.f32 %v689, %v737
        %v739 = vpop.f32.mrf.mxu0
        %v740 = vadd.f32 %v689, %v739
        %741 = vdwg.mxu0
        %v742 = vmul.f32 %v734, 0.5
        %v743 = vmul.f32 %v736, 0.5
        %v744 = vmul.f32 %v738, 0.5
        %v745 = vmul.f32 %v740, 0.5
        %v746 = vmul.f32 %v734, 0.044715
        %v747 = vmul.f32 %v736, 0.044715
        %v748 = vmul.f32 %v738, 0.044715
        %v749 = vmul.f32 %v740, 0.044715
        %v750 = vmul.f32 %v746, %v734
        %v751 = vmul.f32 %v747, %v736
        %v752 = vmul.f32 %v748, %v738
        %v753 = vmul.f32 %v749, %v740
        %v754 = vmul.f32 %v750, %v734
        %v755 = vmul.f32 %v751, %v736
        %v756 = vmul.f32 %v752, %v738
        %v757 = vmul.f32 %v753, %v740
        %v758 = vadd.f32 %v734, %v754
        %v759 = vadd.f32 %v736, %v755
        %v760 = vadd.f32 %v738, %v756
        %v761 = vadd.f32 %v740, %v757
        %v762 = vmul.f32 %v758, 0.7978846
        %v763 = vmul.f32 %v759, 0.7978846
        %v764 = vmul.f32 %v760, 0.7978846
        %v765 = vmul.f32 %v761, 0.7978846
        %v766 = vtanh.pop %v762
        %v767 = vtanh.pop %v763
        %v768 = vtanh.pop %v764
        %v769 = vtanh.pop %v765
        %v770 = vadd.f32 %v766, 1.0
        %v771 = vadd.f32 %v767, 1.0
        %v772 = vadd.f32 %v768, 1.0
        %v773 = vadd.f32 %v769, 1.0
        %v774 = vmul.f32 %v742, %v770
        %v775 = vmul.f32 %v743, %v771
        %v776 = vmul.f32 %v744, %v772
        %v777 = vmul.f32 %v745, %v773
        %s778 = scalar_lea.vmem %s5, 2
        %v779 = vld [vmem:[%s778] sm:$0x3]
        %v780 = vpack.c.bf16 %v776, %v774
        %v781 = vpack.c.bf16 %v777, %v775
        %v783 = vsel %vm614, %v779, 0
        %785 = vmatprep.subr.bf16.mxu0 0
        %786 = vmatpush1.bf16.msra.mxu0 0
        %787 = vmatprep.subr.bf16.mxu0 0
        %788 = vmatpush1.bf16.msra.mxu0 0
        %789 = vmatprep.subr.bf16.mxu0 0
        %790 = vmatpush1.bf16.msra.mxu0 0
        %791 = vmatprep.subr.bf16.mxu0 0
        %792 = vmatpush1.bf16.msra.mxu0 0
        %793 = vmatprep.subr.bf16.mxu0 0
        %794 = vmatpush1.bf16.msra.mxu0 0
        %795 = vmatprep.subr.bf16.mxu0 0
        %796 = vmatpush1.bf16.msra.mxu0 0
        %797 = vmatprep.subr.bf16.mxu0 0
        %798 = vmatpush1.bf16.msra.mxu0 0
        %799 = vmatprep.subr.bf16.mxu0 %v781
        %800 = vmatpush1.bf16.msra.mxu0 %v780
        %801 = vmatprep.subr.bf16.mxu0 0
        %802 = vmatpush2.bf16.msra.mxu0 0
        %803 = vmatprep.subr.bf16.mxu0 0
        %804 = vmatpush2.bf16.msra.mxu0 0
        %805 = vmatprep.subr.bf16.mxu0 0
        %806 = vmatpush2.bf16.msra.mxu0 0
        %807 = vmatprep.subr.bf16.mxu0 0
        %808 = vmatpush2.bf16.msra.mxu0 0
        %809 = vmatprep.subr.bf16.mxu0 0
        %810 = vmatpush2.bf16.msra.mxu0 0
        %811 = vmatprep.subr.bf16.mxu0 0
        %812 = vmatpush2.bf16.msra.mxu0 0
        %813 = vmatprep.subr.bf16.mxu0 0
        %814 = vmatpush2.bf16.msra.mxu0 0
        %815 = vmatprep.subr.bf16.mxu0 0
        %816 = vmatpush2.bf16.msra.mxu0 0
        %817 = vmatprep.mubr.bf16.mxu0 0
        %818 = vmatmul.mubr.bf16.gmra.mxu0 %v783
        %v819 = vpop.f32.mrf.mxu0
        %v820 = vadd.f32 0.0, %v819
        %v821 = vpop.f32.mrf.mxu0
        %v822 = vadd.f32 0.0, %v821
        %v823 = vpop.f32.mrf.mxu0
        %v824 = vpop.f32.mrf.mxu0
        %825 = vdwg.mxu0
        %v826 = vld [vmem:[#allocation2] sm:$0xff]
        %v827 = vlaneseq
        %v828 = vshrl.u32 %v827, 7
        %v829 = vsub.s32 1, %v828
        %v830 = vrot.slane %v497, %v829
        %v831 = vlaneseq
        %v832 = vshrl.u32 %v831, 7
        %v833 = vsub.s32 1, %v832
        %v834 = vrot.slane %v498, %v833
        %v835 = vmul.f32 %v830, %v820
        %v836 = vmul.f32 %v834, %v822
        %v839 = vcombine.low %v835, %v836
        %v841 = vadd.f32 %v826, %v839
        %842 = vst [vmem:[#allocation2] sm:$0xff] %v841
        %s843 = scalar_lea.vmem %s3, 16
        %v844 = vld [vmem:[%s843] sm:$0xf]
        %v845 = vld [vmem:[%s843 + $0x4] sm:$0xf]
        %v846 = vld [vmem:[%s4] sm:$0xff]
        %v847 = vld [vmem:[%s4 + $0x8] sm:$0xff]
        %849 = vset.pattern.permute.xlu0 2
        %850 = vperm.xlu0 %849, %v846
        %v851 = vpop.permute.xlu0 %850
        %854 = vset.pattern.permute.xlu0 2
        %855 = vperm.xlu0 %854, %v847
        %v856 = vpop.permute.xlu0 %855
        %v860 = vunpack.c.l.b16 %v844
        %v861 = vunpack.c.l.b16 %v845
        %v862 = vpack.c.b16 %v861, %v860
        %v864 = vsel %vm377, %v862, 0
        %866 = vmatprep.subr.bf16.mxu0 0
        %867 = vmatpush1.bf16.msra.mxu0 0
        %868 = vmatprep.subr.bf16.mxu0 0
        %869 = vmatpush1.bf16.msra.mxu0 0
        %870 = vmatprep.subr.bf16.mxu0 0
        %871 = vmatpush1.bf16.msra.mxu0 0
        %872 = vmatprep.subr.bf16.mxu0 0
        %873 = vmatpush1.bf16.msra.mxu0 0
        %874 = vmatprep.subr.bf16.mxu0 0
        %875 = vmatpush1.bf16.msra.mxu0 0
        %876 = vmatprep.subr.bf16.mxu0 0
        %877 = vmatpush1.bf16.msra.mxu0 0
        %878 = vmatprep.subr.bf16.mxu0 0
        %879 = vmatpush1.bf16.msra.mxu0 0
        %880 = vmatprep.subr.bf16.mxu0 %v530
        %881 = vmatpush1.bf16.msra.mxu0 %v527
        %882 = vmatprep.subr.bf16.mxu0 0
        %883 = vmatpush2.bf16.msra.mxu0 0
        %884 = vmatprep.subr.bf16.mxu0 0
        %885 = vmatpush2.bf16.msra.mxu0 0
        %886 = vmatprep.subr.bf16.mxu0 0
        %887 = vmatpush2.bf16.msra.mxu0 0
        %888 = vmatprep.subr.bf16.mxu0 0
        %889 = vmatpush2.bf16.msra.mxu0 0
        %890 = vmatprep.subr.bf16.mxu0 0
        %891 = vmatpush2.bf16.msra.mxu0 0
        %892 = vmatprep.subr.bf16.mxu0 0
        %893 = vmatpush2.bf16.msra.mxu0 0
        %894 = vmatprep.subr.bf16.mxu0 0
        %895 = vmatpush2.bf16.msra.mxu0 0
        %896 = vmatprep.subr.bf16.mxu0 0
        %897 = vmatpush2.bf16.msra.mxu0 0
        %898 = vmatprep.mubr.bf16.mxu0 0
        %899 = vmatmul.mubr.bf16.gmra.mxu0 %v864
        %v900 = vpop.f32.mrf.mxu0
        %v901 = vadd.f32 %v851, %v900
        %v902 = vpop.f32.mrf.mxu0
        %v903 = vadd.f32 %v851, %v902
        %v904 = vpop.f32.mrf.mxu0
        %v905 = vadd.f32 %v856, %v904
        %v906 = vpop.f32.mrf.mxu0
        %v907 = vadd.f32 %v856, %v906
        %908 = vdwg.mxu0
        %v909 = vmul.f32 %v901, 0.5
        %v910 = vmul.f32 %v903, 0.5
        %v911 = vmul.f32 %v905, 0.5
        %v912 = vmul.f32 %v907, 0.5
        %v913 = vmul.f32 %v901, 0.044715
        %v914 = vmul.f32 %v903, 0.044715
        %v915 = vmul.f32 %v905, 0.044715
        %v916 = vmul.f32 %v907, 0.044715
        %v917 = vmul.f32 %v913, %v901
        %v918 = vmul.f32 %v914, %v903
        %v919 = vmul.f32 %v915, %v905
        %v920 = vmul.f32 %v916, %v907
        %v921 = vmul.f32 %v917, %v901
        %v922 = vmul.f32 %v918, %v903
        %v923 = vmul.f32 %v919, %v905
        %v924 = vmul.f32 %v920, %v907
        %v925 = vadd.f32 %v901, %v921
        %v926 = vadd.f32 %v903, %v922
        %v927 = vadd.f32 %v905, %v923
        %v928 = vadd.f32 %v907, %v924
        %v929 = vmul.f32 %v925, 0.7978846
        %v930 = vmul.f32 %v926, 0.7978846
        %v931 = vmul.f32 %v927, 0.7978846
        %v932 = vmul.f32 %v928, 0.7978846
        %v933 = vtanh.pop %v929
        %v934 = vtanh.pop %v930
        %v935 = vtanh.pop %v931
        %v936 = vtanh.pop %v932
        %v937 = vadd.f32 %v933, 1.0
        %v938 = vadd.f32 %v934, 1.0
        %v939 = vadd.f32 %v935, 1.0
        %v940 = vadd.f32 %v936, 1.0
        %v941 = vmul.f32 %v909, %v937
        %v942 = vmul.f32 %v910, %v938
        %v943 = vmul.f32 %v911, %v939
        %v944 = vmul.f32 %v912, %v940
        %s945 = scalar_lea.vmem %s5, 4
        %v946 = vld [vmem:[%s945] sm:$0x3]
        %v947 = vpack.c.bf16 %v943, %v941
        %v948 = vpack.c.bf16 %v944, %v942
        %v950 = vsel %vm614, %v946, 0
        %952 = vmatprep.subr.bf16.mxu0 0
        %953 = vmatpush1.bf16.msra.mxu0 0
        %954 = vmatprep.subr.bf16.mxu0 0
        %955 = vmatpush1.bf16.msra.mxu0 0
        %956 = vmatprep.subr.bf16.mxu0 0
        %957 = vmatpush1.bf16.msra.mxu0 0
        %958 = vmatprep.subr.bf16.mxu0 0
        %959 = vmatpush1.bf16.msra.mxu0 0
        %960 = vmatprep.subr.bf16.mxu0 0
        %961 = vmatpush1.bf16.msra.mxu0 0
        %962 = vmatprep.subr.bf16.mxu0 0
        %963 = vmatpush1.bf16.msra.mxu0 0
        %964 = vmatprep.subr.bf16.mxu0 0
        %965 = vmatpush1.bf16.msra.mxu0 0
        %966 = vmatprep.subr.bf16.mxu0 %v948
        %967 = vmatpush1.bf16.msra.mxu0 %v947
        %968 = vmatprep.subr.bf16.mxu0 0
        %969 = vmatpush2.bf16.msra.mxu0 0
        %970 = vmatprep.subr.bf16.mxu0 0
        %971 = vmatpush2.bf16.msra.mxu0 0
        %972 = vmatprep.subr.bf16.mxu0 0
        %973 = vmatpush2.bf16.msra.mxu0 0
        %974 = vmatprep.subr.bf16.mxu0 0
        %975 = vmatpush2.bf16.msra.mxu0 0
        %976 = vmatprep.subr.bf16.mxu0 0
        %977 = vmatpush2.bf16.msra.mxu0 0
        %978 = vmatprep.subr.bf16.mxu0 0
        %979 = vmatpush2.bf16.msra.mxu0 0
        %980 = vmatprep.subr.bf16.mxu0 0
        %981 = vmatpush2.bf16.msra.mxu0 0
        %982 = vmatprep.subr.bf16.mxu0 0
        %983 = vmatpush2.bf16.msra.mxu0 0
        %984 = vmatprep.mubr.bf16.mxu0 0
        %985 = vmatmul.mubr.bf16.gmra.mxu0 %v950
        %v986 = vpop.f32.mrf.mxu0
        %v987 = vadd.f32 0.0, %v986
        %v988 = vpop.f32.mrf.mxu0
        %v989 = vadd.f32 0.0, %v988
        %v990 = vpop.f32.mrf.mxu0
        %v991 = vpop.f32.mrf.mxu0
        %992 = vdwg.mxu0
        %v993 = vld [vmem:[#allocation2] sm:$0xff]
        %v994 = vlaneseq
        %v995 = vshrl.u32 %v994, 7
        %v996 = vsub.s32 2, %v995
        %v997 = vrot.slane %v497, %v996
        %v998 = vlaneseq
        %v999 = vshrl.u32 %v998, 7
        %v1000 = vsub.s32 2, %v999
        %v1001 = vrot.slane %v498, %v1000
        %v1002 = vmul.f32 %v997, %v987
        %v1003 = vmul.f32 %v1001, %v989
        %v1006 = vcombine.low %v1002, %v1003
        %v1008 = vadd.f32 %v993, %v1006
        %1009 = vst [vmem:[#allocation2] sm:$0xff] %v1008
        %s1010 = scalar_lea.vmem %s3, 24
        %v1011 = vld [vmem:[%s1010] sm:$0xf]
        %v1012 = vld [vmem:[%s1010 + $0x4] sm:$0xf]
        %v1013 = vld [vmem:[%s4] sm:$0xff]
        %v1014 = vld [vmem:[%s4 + $0x8] sm:$0xff]
        %1016 = vset.pattern.permute.xlu0 3
        %1017 = vperm.xlu0 %1016, %v1013
        %v1018 = vpop.permute.xlu0 %1017
        %1021 = vset.pattern.permute.xlu0 3
        %1022 = vperm.xlu0 %1021, %v1014
        %v1023 = vpop.permute.xlu0 %1022
        %v1027 = vunpack.c.l.b16 %v1011
        %v1028 = vunpack.c.l.b16 %v1012
        %v1029 = vpack.c.b16 %v1028, %v1027
        %v1031 = vsel %vm377, %v1029, 0
        %1033 = vmatprep.subr.bf16.mxu0 0
        %1034 = vmatpush1.bf16.msra.mxu0 0
        %1035 = vmatprep.subr.bf16.mxu0 0
        %1036 = vmatpush1.bf16.msra.mxu0 0
        %1037 = vmatprep.subr.bf16.mxu0 0
        %1038 = vmatpush1.bf16.msra.mxu0 0
        %1039 = vmatprep.subr.bf16.mxu0 0
        %1040 = vmatpush1.bf16.msra.mxu0 0
        %1041 = vmatprep.subr.bf16.mxu0 0
        %1042 = vmatpush1.bf16.msra.mxu0 0
        %1043 = vmatprep.subr.bf16.mxu0 0
        %1044 = vmatpush1.bf16.msra.mxu0 0
        %1045 = vmatprep.subr.bf16.mxu0 0
        %1046 = vmatpush1.bf16.msra.mxu0 0
        %1047 = vmatprep.subr.bf16.mxu0 %v530
        %1048 = vmatpush1.bf16.msra.mxu0 %v527
        %1049 = vmatprep.subr.bf16.mxu0 0
        %1050 = vmatpush2.bf16.msra.mxu0 0
        %1051 = vmatprep.subr.bf16.mxu0 0
        %1052 = vmatpush2.bf16.msra.mxu0 0
        %1053 = vmatprep.subr.bf16.mxu0 0
        %1054 = vmatpush2.bf16.msra.mxu0 0
        %1055 = vmatprep.subr.bf16.mxu0 0
        %1056 = vmatpush2.bf16.msra.mxu0 0
        %1057 = vmatprep.subr.bf16.mxu0 0
        %1058 = vmatpush2.bf16.msra.mxu0 0
        %1059 = vmatprep.subr.bf16.mxu0 0
        %1060 = vmatpush2.bf16.msra.mxu0 0
        %1061 = vmatprep.subr.bf16.mxu0 0
        %1062 = vmatpush2.bf16.msra.mxu0 0
        %1063 = vmatprep.subr.bf16.mxu0 0
        %1064 = vmatpush2.bf16.msra.mxu0 0
        %1065 = vmatprep.mubr.bf16.mxu0 0
        %1066 = vmatmul.mubr.bf16.gmra.mxu0 %v1031
        %v1067 = vpop.f32.mrf.mxu0
        %v1068 = vadd.f32 %v1018, %v1067
        %v1069 = vpop.f32.mrf.mxu0
        %v1070 = vadd.f32 %v1018, %v1069
        %v1071 = vpop.f32.mrf.mxu0
        %v1072 = vadd.f32 %v1023, %v1071
        %v1073 = vpop.f32.mrf.mxu0
        %v1074 = vadd.f32 %v1023, %v1073
        %1075 = vdwg.mxu0
        %v1076 = vmul.f32 %v1068, 0.5
        %v1077 = vmul.f32 %v1070, 0.5
        %v1078 = vmul.f32 %v1072, 0.5
        %v1079 = vmul.f32 %v1074, 0.5
        %v1080 = vmul.f32 %v1068, 0.044715
        %v1081 = vmul.f32 %v1070, 0.044715
        %v1082 = vmul.f32 %v1072, 0.044715
        %v1083 = vmul.f32 %v1074, 0.044715
        %v1084 = vmul.f32 %v1080, %v1068
        %v1085 = vmul.f32 %v1081, %v1070
        %v1086 = vmul.f32 %v1082, %v1072
        %v1087 = vmul.f32 %v1083, %v1074
        %v1088 = vmul.f32 %v1084, %v1068
        %v1089 = vmul.f32 %v1085, %v1070
        %v1090 = vmul.f32 %v1086, %v1072
        %v1091 = vmul.f32 %v1087, %v1074
        %v1092 = vadd.f32 %v1068, %v1088
        %v1093 = vadd.f32 %v1070, %v1089
        %v1094 = vadd.f32 %v1072, %v1090
        %v1095 = vadd.f32 %v1074, %v1091
        %v1096 = vmul.f32 %v1092, 0.7978846
        %v1097 = vmul.f32 %v1093, 0.7978846
        %v1098 = vmul.f32 %v1094, 0.7978846
        %v1099 = vmul.f32 %v1095, 0.7978846
        %v1100 = vtanh.pop %v1096
        %v1101 = vtanh.pop %v1097
        %v1102 = vtanh.pop %v1098
        %v1103 = vtanh.pop %v1099
        %v1104 = vadd.f32 %v1100, 1.0
        %v1105 = vadd.f32 %v1101, 1.0
        %v1106 = vadd.f32 %v1102, 1.0
        %v1107 = vadd.f32 %v1103, 1.0
        %v1108 = vmul.f32 %v1076, %v1104
        %v1109 = vmul.f32 %v1077, %v1105
        %v1110 = vmul.f32 %v1078, %v1106
        %v1111 = vmul.f32 %v1079, %v1107
        %s1112 = scalar_lea.vmem %s5, 6
        %v1113 = vld [vmem:[%s1112] sm:$0x3]
        %v1114 = vpack.c.bf16 %v1110, %v1108
        %v1115 = vpack.c.bf16 %v1111, %v1109
        %v1117 = vsel %vm614, %v1113, 0
        %1119 = vmatprep.subr.bf16.mxu0 0
        %1120 = vmatpush1.bf16.msra.mxu0 0
        %1121 = vmatprep.subr.bf16.mxu0 0
        %1122 = vmatpush1.bf16.msra.mxu0 0
        %1123 = vmatprep.subr.bf16.mxu0 0
        %1124 = vmatpush1.bf16.msra.mxu0 0
        %1125 = vmatprep.subr.bf16.mxu0 0
        %1126 = vmatpush1.bf16.msra.mxu0 0
        %1127 = vmatprep.subr.bf16.mxu0 0
        %1128 = vmatpush1.bf16.msra.mxu0 0
        %1129 = vmatprep.subr.bf16.mxu0 0
        %1130 = vmatpush1.bf16.msra.mxu0 0
        %1131 = vmatprep.subr.bf16.mxu0 0
        %1132 = vmatpush1.bf16.msra.mxu0 0
        %1133 = vmatprep.subr.bf16.mxu0 %v1115
        %1134 = vmatpush1.bf16.msra.mxu0 %v1114
        %1135 = vmatprep.subr.bf16.mxu0 0
        %1136 = vmatpush2.bf16.msra.mxu0 0
        %1137 = vmatprep.subr.bf16.mxu0 0
        %1138 = vmatpush2.bf16.msra.mxu0 0
        %1139 = vmatprep.subr.bf16.mxu0 0
        %1140 = vmatpush2.bf16.msra.mxu0 0
        %1141 = vmatprep.subr.bf16.mxu0 0
        %1142 = vmatpush2.bf16.msra.mxu0 0
        %1143 = vmatprep.subr.bf16.mxu0 0
        %1144 = vmatpush2.bf16.msra.mxu0 0
        %1145 = vmatprep.subr.bf16.mxu0 0
        %1146 = vmatpush2.bf16.msra.mxu0 0
        %1147 = vmatprep.subr.bf16.mxu0 0
        %1148 = vmatpush2.bf16.msra.mxu0 0
        %1149 = vmatprep.subr.bf16.mxu0 0
        %1150 = vmatpush2.bf16.msra.mxu0 0
        %1151 = vmatprep.mubr.bf16.mxu0 0
        %1152 = vmatmul.mubr.bf16.gmra.mxu0 %v1117
        %v1153 = vpop.f32.mrf.mxu0
        %v1154 = vadd.f32 0.0, %v1153
        %v1155 = vpop.f32.mrf.mxu0
        %v1156 = vadd.f32 0.0, %v1155
        %v1157 = vpop.f32.mrf.mxu0
        %v1158 = vpop.f32.mrf.mxu0
        %1159 = vdwg.mxu0
        %v1160 = vld [vmem:[#allocation2] sm:$0xff]
        %v1161 = vlaneseq
        %v1162 = vshrl.u32 %v1161, 7
        %v1163 = vsub.s32 3, %v1162
        %v1164 = vrot.slane %v497, %v1163
        %v1165 = vlaneseq
        %v1166 = vshrl.u32 %v1165, 7
        %v1167 = vsub.s32 3, %v1166
        %v1168 = vrot.slane %v498, %v1167
        %v1169 = vmul.f32 %v1164, %v1154
        %v1170 = vmul.f32 %v1168, %v1156
        %v1173 = vcombine.low %v1169, %v1170
        %v1175 = vadd.f32 %v1160, %v1173
        %1176 = vst [vmem:[#allocation2] sm:$0xff] %v1175
        %s1177 = scalar_lea.vmem %s3, 32
        %v1178 = vld [vmem:[%s1177] sm:$0xf]
        %v1179 = vld [vmem:[%s1177 + $0x4] sm:$0xf]
        %v1180 = vld [vmem:[%s4] sm:$0xff]
        %v1181 = vld [vmem:[%s4 + $0x8] sm:$0xff]
        %1183 = vset.pattern.permute.xlu0 4
        %1184 = vperm.xlu0 %1183, %v1180
        %v1185 = vpop.permute.xlu0 %1184
        %1188 = vset.pattern.permute.xlu0 4
        %1189 = vperm.xlu0 %1188, %v1181
        %v1190 = vpop.permute.xlu0 %1189
        %v1194 = vunpack.c.l.b16 %v1178
        %v1195 = vunpack.c.l.b16 %v1179
        %v1196 = vpack.c.b16 %v1195, %v1194
        %v1198 = vsel %vm377, %v1196, 0
        %1200 = vmatprep.subr.bf16.mxu0 0
        %1201 = vmatpush1.bf16.msra.mxu0 0
        %1202 = vmatprep.subr.bf16.mxu0 0
        %1203 = vmatpush1.bf16.msra.mxu0 0
        %1204 = vmatprep.subr.bf16.mxu0 0
        %1205 = vmatpush1.bf16.msra.mxu0 0
        %1206 = vmatprep.subr.bf16.mxu0 0
        %1207 = vmatpush1.bf16.msra.mxu0 0
        %1208 = vmatprep.subr.bf16.mxu0 0
        %1209 = vmatpush1.bf16.msra.mxu0 0
        %1210 = vmatprep.subr.bf16.mxu0 0
        %1211 = vmatpush1.bf16.msra.mxu0 0
        %1212 = vmatprep.subr.bf16.mxu0 0
        %1213 = vmatpush1.bf16.msra.mxu0 0
        %1214 = vmatprep.subr.bf16.mxu0 %v530
        %1215 = vmatpush1.bf16.msra.mxu0 %v527
        %1216 = vmatprep.subr.bf16.mxu0 0
        %1217 = vmatpush2.bf16.msra.mxu0 0
        %1218 = vmatprep.subr.bf16.mxu0 0
        %1219 = vmatpush2.bf16.msra.mxu0 0
        %1220 = vmatprep.subr.bf16.mxu0 0
        %1221 = vmatpush2.bf16.msra.mxu0 0
        %1222 = vmatprep.subr.bf16.mxu0 0
        %1223 = vmatpush2.bf16.msra.mxu0 0
        %1224 = vmatprep.subr.bf16.mxu0 0
        %1225 = vmatpush2.bf16.msra.mxu0 0
        %1226 = vmatprep.subr.bf16.mxu0 0
        %1227 = vmatpush2.bf16.msra.mxu0 0
        %1228 = vmatprep.subr.bf16.mxu0 0
        %1229 = vmatpush2.bf16.msra.mxu0 0
        %1230 = vmatprep.subr.bf16.mxu0 0
        %1231 = vmatpush2.bf16.msra.mxu0 0
        %1232 = vmatprep.mubr.bf16.mxu0 0
        %1233 = vmatmul.mubr.bf16.gmra.mxu0 %v1198
        %v1234 = vpop.f32.mrf.mxu0
        %v1235 = vadd.f32 %v1185, %v1234
        %v1236 = vpop.f32.mrf.mxu0
        %v1237 = vadd.f32 %v1185, %v1236
        %v1238 = vpop.f32.mrf.mxu0
        %v1239 = vadd.f32 %v1190, %v1238
        %v1240 = vpop.f32.mrf.mxu0
        %v1241 = vadd.f32 %v1190, %v1240
        %1242 = vdwg.mxu0
        %v1243 = vmul.f32 %v1235, 0.5
        %v1244 = vmul.f32 %v1237, 0.5
        %v1245 = vmul.f32 %v1239, 0.5
        %v1246 = vmul.f32 %v1241, 0.5
        %v1247 = vmul.f32 %v1235, 0.044715
        %v1248 = vmul.f32 %v1237, 0.044715
        %v1249 = vmul.f32 %v1239, 0.044715
        %v1250 = vmul.f32 %v1241, 0.044715
        %v1251 = vmul.f32 %v1247, %v1235
        %v1252 = vmul.f32 %v1248, %v1237
        %v1253 = vmul.f32 %v1249, %v1239
        %v1254 = vmul.f32 %v1250, %v1241
        %v1255 = vmul.f32 %v1251, %v1235
        %v1256 = vmul.f32 %v1252, %v1237
        %v1257 = vmul.f32 %v1253, %v1239
        %v1258 = vmul.f32 %v1254, %v1241
        %v1259 = vadd.f32 %v1235, %v1255
        %v1260 = vadd.f32 %v1237, %v1256
        %v1261 = vadd.f32 %v1239, %v1257
        %v1262 = vadd.f32 %v1241, %v1258
        %v1263 = vmul.f32 %v1259, 0.7978846
        %v1264 = vmul.f32 %v1260, 0.7978846
        %v1265 = vmul.f32 %v1261, 0.7978846
        %v1266 = vmul.f32 %v1262, 0.7978846
        %v1267 = vtanh.pop %v1263
        %v1268 = vtanh.pop %v1264
        %v1269 = vtanh.pop %v1265
        %v1270 = vtanh.pop %v1266
        %v1271 = vadd.f32 %v1267, 1.0
        %v1272 = vadd.f32 %v1268, 1.0
        %v1273 = vadd.f32 %v1269, 1.0
        %v1274 = vadd.f32 %v1270, 1.0
        %v1275 = vmul.f32 %v1243, %v1271
        %v1276 = vmul.f32 %v1244, %v1272
        %v1277 = vmul.f32 %v1245, %v1273
        %v1278 = vmul.f32 %v1246, %v1274
        %s1279 = scalar_lea.vmem %s5, 8
        %v1280 = vld [vmem:[%s1279] sm:$0x3]
        %v1281 = vpack.c.bf16 %v1277, %v1275
        %v1282 = vpack.c.bf16 %v1278, %v1276
        %v1284 = vsel %vm614, %v1280, 0
        %1286 = vmatprep.subr.bf16.mxu0 0
        %1287 = vmatpush1.bf16.msra.mxu0 0
        %1288 = vmatprep.subr.bf16.mxu0 0
        %1289 = vmatpush1.bf16.msra.mxu0 0
        %1290 = vmatprep.subr.bf16.mxu0 0
        %1291 = vmatpush1.bf16.msra.mxu0 0
        %1292 = vmatprep.subr.bf16.mxu0 0
        %1293 = vmatpush1.bf16.msra.mxu0 0
        %1294 = vmatprep.subr.bf16.mxu0 0
        %1295 = vmatpush1.bf16.msra.mxu0 0
        %1296 = vmatprep.subr.bf16.mxu0 0
        %1297 = vmatpush1.bf16.msra.mxu0 0
        %1298 = vmatprep.subr.bf16.mxu0 0
        %1299 = vmatpush1.bf16.msra.mxu0 0
        %1300 = vmatprep.subr.bf16.mxu0 %v1282
        %1301 = vmatpush1.bf16.msra.mxu0 %v1281
        %1302 = vmatprep.subr.bf16.mxu0 0
        %1303 = vmatpush2.bf16.msra.mxu0 0
        %1304 = vmatprep.subr.bf16.mxu0 0
        %1305 = vmatpush2.bf16.msra.mxu0 0
        %1306 = vmatprep.subr.bf16.mxu0 0
        %1307 = vmatpush2.bf16.msra.mxu0 0
        %1308 = vmatprep.subr.bf16.mxu0 0
        %1309 = vmatpush2.bf16.msra.mxu0 0
        %1310 = vmatprep.subr.bf16.mxu0 0
        %1311 = vmatpush2.bf16.msra.mxu0 0
        %1312 = vmatprep.subr.bf16.mxu0 0
        %1313 = vmatpush2.bf16.msra.mxu0 0
        %1314 = vmatprep.subr.bf16.mxu0 0
        %1315 = vmatpush2.bf16.msra.mxu0 0
        %1316 = vmatprep.subr.bf16.mxu0 0
        %1317 = vmatpush2.bf16.msra.mxu0 0
        %1318 = vmatprep.mubr.bf16.mxu0 0
        %1319 = vmatmul.mubr.bf16.gmra.mxu0 %v1284
        %v1320 = vpop.f32.mrf.mxu0
        %v1321 = vadd.f32 0.0, %v1320
        %v1322 = vpop.f32.mrf.mxu0
        %v1323 = vadd.f32 0.0, %v1322
        %v1324 = vpop.f32.mrf.mxu0
        %v1325 = vpop.f32.mrf.mxu0
        %1326 = vdwg.mxu0
        %v1327 = vld [vmem:[#allocation2] sm:$0xff]
        %v1328 = vlaneseq
        %v1329 = vshrl.u32 %v1328, 7
        %v1330 = vsub.s32 4, %v1329
        %v1331 = vrot.slane %v497, %v1330
        %v1332 = vlaneseq
        %v1333 = vshrl.u32 %v1332, 7
        %v1334 = vsub.s32 4, %v1333
        %v1335 = vrot.slane %v498, %v1334
        %v1336 = vmul.f32 %v1331, %v1321
        %v1337 = vmul.f32 %v1335, %v1323
        %v1340 = vcombine.low %v1336, %v1337
        %v1342 = vadd.f32 %v1327, %v1340
        %1343 = vst [vmem:[#allocation2] sm:$0xff] %v1342
        %s1344 = scalar_lea.vmem %s3, 40
        %v1345 = vld [vmem:[%s1344] sm:$0xf]
        %v1346 = vld [vmem:[%s1344 + $0x4] sm:$0xf]
        %v1347 = vld [vmem:[%s4] sm:$0xff]
        %v1348 = vld [vmem:[%s4 + $0x8] sm:$0xff]
        %1350 = vset.pattern.permute.xlu0 5
        %1351 = vperm.xlu0 %1350, %v1347
        %v1352 = vpop.permute.xlu0 %1351
        %1355 = vset.pattern.permute.xlu0 5
        %1356 = vperm.xlu0 %1355, %v1348
        %v1357 = vpop.permute.xlu0 %1356
        %v1361 = vunpack.c.l.b16 %v1345
        %v1362 = vunpack.c.l.b16 %v1346
        %v1363 = vpack.c.b16 %v1362, %v1361
        %v1365 = vsel %vm377, %v1363, 0
        %1367 = vmatprep.subr.bf16.mxu0 0
        %1368 = vmatpush1.bf16.msra.mxu0 0
        %1369 = vmatprep.subr.bf16.mxu0 0
        %1370 = vmatpush1.bf16.msra.mxu0 0
        %1371 = vmatprep.subr.bf16.mxu0 0
        %1372 = vmatpush1.bf16.msra.mxu0 0
        %1373 = vmatprep.subr.bf16.mxu0 0
        %1374 = vmatpush1.bf16.msra.mxu0 0
        %1375 = vmatprep.subr.bf16.mxu0 0
        %1376 = vmatpush1.bf16.msra.mxu0 0
        %1377 = vmatprep.subr.bf16.mxu0 0
        %1378 = vmatpush1.bf16.msra.mxu0 0
        %1379 = vmatprep.subr.bf16.mxu0 0
        %1380 = vmatpush1.bf16.msra.mxu0 0
        %1381 = vmatprep.subr.bf16.mxu0 %v530
        %1382 = vmatpush1.bf16.msra.mxu0 %v527
        %1383 = vmatprep.subr.bf16.mxu0 0
        %1384 = vmatpush2.bf16.msra.mxu0 0
        %1385 = vmatprep.subr.bf16.mxu0 0
        %1386 = vmatpush2.bf16.msra.mxu0 0
        %1387 = vmatprep.subr.bf16.mxu0 0
        %1388 = vmatpush2.bf16.msra.mxu0 0
        %1389 = vmatprep.subr.bf16.mxu0 0
        %1390 = vmatpush2.bf16.msra.mxu0 0
        %1391 = vmatprep.subr.bf16.mxu0 0
        %1392 = vmatpush2.bf16.msra.mxu0 0
        %1393 = vmatprep.subr.bf16.mxu0 0
        %1394 = vmatpush2.bf16.msra.mxu0 0
        %1395 = vmatprep.subr.bf16.mxu0 0
        %1396 = vmatpush2.bf16.msra.mxu0 0
        %1397 = vmatprep.subr.bf16.mxu0 0
        %1398 = vmatpush2.bf16.msra.mxu0 0
        %1399 = vmatprep.mubr.bf16.mxu0 0
        %1400 = vmatmul.mubr.bf16.gmra.mxu0 %v1365
        %v1401 = vpop.f32.mrf.mxu0
        %v1402 = vadd.f32 %v1352, %v1401
        %v1403 = vpop.f32.mrf.mxu0
        %v1404 = vadd.f32 %v1352, %v1403
        %v1405 = vpop.f32.mrf.mxu0
        %v1406 = vadd.f32 %v1357, %v1405
        %v1407 = vpop.f32.mrf.mxu0
        %v1408 = vadd.f32 %v1357, %v1407
        %1409 = vdwg.mxu0
        %v1410 = vmul.f32 %v1402, 0.5
        %v1411 = vmul.f32 %v1404, 0.5
        %v1412 = vmul.f32 %v1406, 0.5
        %v1413 = vmul.f32 %v1408, 0.5
        %v1414 = vmul.f32 %v1402, 0.044715
        %v1415 = vmul.f32 %v1404, 0.044715
        %v1416 = vmul.f32 %v1406, 0.044715
        %v1417 = vmul.f32 %v1408, 0.044715
        %v1418 = vmul.f32 %v1414, %v1402
        %v1419 = vmul.f32 %v1415, %v1404
        %v1420 = vmul.f32 %v1416, %v1406
        %v1421 = vmul.f32 %v1417, %v1408
        %v1422 = vmul.f32 %v1418, %v1402
        %v1423 = vmul.f32 %v1419, %v1404
        %v1424 = vmul.f32 %v1420, %v1406
        %v1425 = vmul.f32 %v1421, %v1408
        %v1426 = vadd.f32 %v1402, %v1422
        %v1427 = vadd.f32 %v1404, %v1423
        %v1428 = vadd.f32 %v1406, %v1424
        %v1429 = vadd.f32 %v1408, %v1425
        %v1430 = vmul.f32 %v1426, 0.7978846
        %v1431 = vmul.f32 %v1427, 0.7978846
        %v1432 = vmul.f32 %v1428, 0.7978846
        %v1433 = vmul.f32 %v1429, 0.7978846
        %v1434 = vtanh.pop %v1430
        %v1435 = vtanh.pop %v1431
        %v1436 = vtanh.pop %v1432
        %v1437 = vtanh.pop %v1433
        %v1438 = vadd.f32 %v1434, 1.0
        %v1439 = vadd.f32 %v1435, 1.0
        %v1440 = vadd.f32 %v1436, 1.0
        %v1441 = vadd.f32 %v1437, 1.0
        %v1442 = vmul.f32 %v1410, %v1438
        %v1443 = vmul.f32 %v1411, %v1439
        %v1444 = vmul.f32 %v1412, %v1440
        %v1445 = vmul.f32 %v1413, %v1441
        %s1446 = scalar_lea.vmem %s5, 10
        %v1447 = vld [vmem:[%s1446] sm:$0x3]
        %v1448 = vpack.c.bf16 %v1444, %v1442
        %v1449 = vpack.c.bf16 %v1445, %v1443
        %v1451 = vsel %vm614, %v1447, 0
        %1453 = vmatprep.subr.bf16.mxu0 0
        %1454 = vmatpush1.bf16.msra.mxu0 0
        %1455 = vmatprep.subr.bf16.mxu0 0
        %1456 = vmatpush1.bf16.msra.mxu0 0
        %1457 = vmatprep.subr.bf16.mxu0 0
        %1458 = vmatpush1.bf16.msra.mxu0 0
        %1459 = vmatprep.subr.bf16.mxu0 0
        %1460 = vmatpush1.bf16.msra.mxu0 0
        %1461 = vmatprep.subr.bf16.mxu0 0
        %1462 = vmatpush1.bf16.msra.mxu0 0
        %1463 = vmatprep.subr.bf16.mxu0 0
        %1464 = vmatpush1.bf16.msra.mxu0 0
        %1465 = vmatprep.subr.bf16.mxu0 0
        %1466 = vmatpush1.bf16.msra.mxu0 0
        %1467 = vmatprep.subr.bf16.mxu0 %v1449
        %1468 = vmatpush1.bf16.msra.mxu0 %v1448
        %1469 = vmatprep.subr.bf16.mxu0 0
        %1470 = vmatpush2.bf16.msra.mxu0 0
        %1471 = vmatprep.subr.bf16.mxu0 0
        %1472 = vmatpush2.bf16.msra.mxu0 0
        %1473 = vmatprep.subr.bf16.mxu0 0
        %1474 = vmatpush2.bf16.msra.mxu0 0
        %1475 = vmatprep.subr.bf16.mxu0 0
        %1476 = vmatpush2.bf16.msra.mxu0 0
        %1477 = vmatprep.subr.bf16.mxu0 0
        %1478 = vmatpush2.bf16.msra.mxu0 0
        %1479 = vmatprep.subr.bf16.mxu0 0
        %1480 = vmatpush2.bf16.msra.mxu0 0
        %1481 = vmatprep.subr.bf16.mxu0 0
        %1482 = vmatpush2.bf16.msra.mxu0 0
        %1483 = vmatprep.subr.bf16.mxu0 0
        %1484 = vmatpush2.bf16.msra.mxu0 0
        %1485 = vmatprep.mubr.bf16.mxu0 0
        %1486 = vmatmul.mubr.bf16.gmra.mxu0 %v1451
        %v1487 = vpop.f32.mrf.mxu0
        %v1488 = vadd.f32 0.0, %v1487
        %v1489 = vpop.f32.mrf.mxu0
        %v1490 = vadd.f32 0.0, %v1489
        %v1491 = vpop.f32.mrf.mxu0
        %v1492 = vpop.f32.mrf.mxu0
        %1493 = vdwg.mxu0
        %v1494 = vld [vmem:[#allocation2] sm:$0xff]
        %v1495 = vlaneseq
        %v1496 = vshrl.u32 %v1495, 7
        %v1497 = vsub.s32 5, %v1496
        %v1498 = vrot.slane %v497, %v1497
        %v1499 = vlaneseq
        %v1500 = vshrl.u32 %v1499, 7
        %v1501 = vsub.s32 5, %v1500
        %v1502 = vrot.slane %v498, %v1501
        %v1503 = vmul.f32 %v1498, %v1488
        %v1504 = vmul.f32 %v1502, %v1490
        %v1507 = vcombine.low %v1503, %v1504
        %v1509 = vadd.f32 %v1494, %v1507
        %1510 = vst [vmem:[#allocation2] sm:$0xff] %v1509
        %s1511 = scalar_lea.vmem %s3, 48
        %v1512 = vld [vmem:[%s1511] sm:$0xf]
        %v1513 = vld [vmem:[%s1511 + $0x4] sm:$0xf]
        %v1514 = vld [vmem:[%s4] sm:$0xff]
        %v1515 = vld [vmem:[%s4 + $0x8] sm:$0xff]
        %1517 = vset.pattern.permute.xlu0 6
        %1518 = vperm.xlu0 %1517, %v1514
        %v1519 = vpop.permute.xlu0 %1518
        %1522 = vset.pattern.permute.xlu0 6
        %1523 = vperm.xlu0 %1522, %v1515
        %v1524 = vpop.permute.xlu0 %1523
        %v1528 = vunpack.c.l.b16 %v1512
        %v1529 = vunpack.c.l.b16 %v1513
        %v1530 = vpack.c.b16 %v1529, %v1528
        %v1532 = vsel %vm377, %v1530, 0
        %1534 = vmatprep.subr.bf16.mxu0 0
        %1535 = vmatpush1.bf16.msra.mxu0 0
        %1536 = vmatprep.subr.bf16.mxu0 0
        %1537 = vmatpush1.bf16.msra.mxu0 0
        %1538 = vmatprep.subr.bf16.mxu0 0
        %1539 = vmatpush1.bf16.msra.mxu0 0
        %1540 = vmatprep.subr.bf16.mxu0 0
        %1541 = vmatpush1.bf16.msra.mxu0 0
        %1542 = vmatprep.subr.bf16.mxu0 0
        %1543 = vmatpush1.bf16.msra.mxu0 0
        %1544 = vmatprep.subr.bf16.mxu0 0
        %1545 = vmatpush1.bf16.msra.mxu0 0
        %1546 = vmatprep.subr.bf16.mxu0 0
        %1547 = vmatpush1.bf16.msra.mxu0 0
        %1548 = vmatprep.subr.bf16.mxu0 %v530
        %1549 = vmatpush1.bf16.msra.mxu0 %v527
        %1550 = vmatprep.subr.bf16.mxu0 0
        %1551 = vmatpush2.bf16.msra.mxu0 0
        %1552 = vmatprep.subr.bf16.mxu0 0
        %1553 = vmatpush2.bf16.msra.mxu0 0
        %1554 = vmatprep.subr.bf16.mxu0 0
        %1555 = vmatpush2.bf16.msra.mxu0 0
        %1556 = vmatprep.subr.bf16.mxu0 0
        %1557 = vmatpush2.bf16.msra.mxu0 0
        %1558 = vmatprep.subr.bf16.mxu0 0
        %1559 = vmatpush2.bf16.msra.mxu0 0
        %1560 = vmatprep.subr.bf16.mxu0 0
        %1561 = vmatpush2.bf16.msra.mxu0 0
        %1562 = vmatprep.subr.bf16.mxu0 0
        %1563 = vmatpush2.bf16.msra.mxu0 0
        %1564 = vmatprep.subr.bf16.mxu0 0
        %1565 = vmatpush2.bf16.msra.mxu0 0
        %1566 = vmatprep.mubr.bf16.mxu0 0
        %1567 = vmatmul.mubr.bf16.gmra.mxu0 %v1532
        %v1568 = vpop.f32.mrf.mxu0
        %v1569 = vadd.f32 %v1519, %v1568
        %v1570 = vpop.f32.mrf.mxu0
        %v1571 = vadd.f32 %v1519, %v1570
        %v1572 = vpop.f32.mrf.mxu0
        %v1573 = vadd.f32 %v1524, %v1572
        %v1574 = vpop.f32.mrf.mxu0
        %v1575 = vadd.f32 %v1524, %v1574
        %1576 = vdwg.mxu0
        %v1577 = vmul.f32 %v1569, 0.5
        %v1578 = vmul.f32 %v1571, 0.5
        %v1579 = vmul.f32 %v1573, 0.5
        %v1580 = vmul.f32 %v1575, 0.5
        %v1581 = vmul.f32 %v1569, 0.044715
        %v1582 = vmul.f32 %v1571, 0.044715
        %v1583 = vmul.f32 %v1573, 0.044715
        %v1584 = vmul.f32 %v1575, 0.044715
        %v1585 = vmul.f32 %v1581, %v1569
        %v1586 = vmul.f32 %v1582, %v1571
        %v1587 = vmul.f32 %v1583, %v1573
        %v1588 = vmul.f32 %v1584, %v1575
        %v1589 = vmul.f32 %v1585, %v1569
        %v1590 = vmul.f32 %v1586, %v1571
        %v1591 = vmul.f32 %v1587, %v1573
        %v1592 = vmul.f32 %v1588, %v1575
        %v1593 = vadd.f32 %v1569, %v1589
        %v1594 = vadd.f32 %v1571, %v1590
        %v1595 = vadd.f32 %v1573, %v1591
        %v1596 = vadd.f32 %v1575, %v1592
        %v1597 = vmul.f32 %v1593, 0.7978846
        %v1598 = vmul.f32 %v1594, 0.7978846
        %v1599 = vmul.f32 %v1595, 0.7978846
        %v1600 = vmul.f32 %v1596, 0.7978846
        %v1601 = vtanh.pop %v1597
        %v1602 = vtanh.pop %v1598
        %v1603 = vtanh.pop %v1599
        %v1604 = vtanh.pop %v1600
        %v1605 = vadd.f32 %v1601, 1.0
        %v1606 = vadd.f32 %v1602, 1.0
        %v1607 = vadd.f32 %v1603, 1.0
        %v1608 = vadd.f32 %v1604, 1.0
        %v1609 = vmul.f32 %v1577, %v1605
        %v1610 = vmul.f32 %v1578, %v1606
        %v1611 = vmul.f32 %v1579, %v1607
        %v1612 = vmul.f32 %v1580, %v1608
        %s1613 = scalar_lea.vmem %s5, 12
        %v1614 = vld [vmem:[%s1613] sm:$0x3]
        %v1615 = vpack.c.bf16 %v1611, %v1609
        %v1616 = vpack.c.bf16 %v1612, %v1610
        %v1618 = vsel %vm614, %v1614, 0
        %1620 = vmatprep.subr.bf16.mxu0 0
        %1621 = vmatpush1.bf16.msra.mxu0 0
        %1622 = vmatprep.subr.bf16.mxu0 0
        %1623 = vmatpush1.bf16.msra.mxu0 0
        %1624 = vmatprep.subr.bf16.mxu0 0
        %1625 = vmatpush1.bf16.msra.mxu0 0
        %1626 = vmatprep.subr.bf16.mxu0 0
        %1627 = vmatpush1.bf16.msra.mxu0 0
        %1628 = vmatprep.subr.bf16.mxu0 0
        %1629 = vmatpush1.bf16.msra.mxu0 0
        %1630 = vmatprep.subr.bf16.mxu0 0
        %1631 = vmatpush1.bf16.msra.mxu0 0
        %1632 = vmatprep.subr.bf16.mxu0 0
        %1633 = vmatpush1.bf16.msra.mxu0 0
        %1634 = vmatprep.subr.bf16.mxu0 %v1616
        %1635 = vmatpush1.bf16.msra.mxu0 %v1615
        %1636 = vmatprep.subr.bf16.mxu0 0
        %1637 = vmatpush2.bf16.msra.mxu0 0
        %1638 = vmatprep.subr.bf16.mxu0 0
        %1639 = vmatpush2.bf16.msra.mxu0 0
        %1640 = vmatprep.subr.bf16.mxu0 0
        %1641 = vmatpush2.bf16.msra.mxu0 0
        %1642 = vmatprep.subr.bf16.mxu0 0
        %1643 = vmatpush2.bf16.msra.mxu0 0
        %1644 = vmatprep.subr.bf16.mxu0 0
        %1645 = vmatpush2.bf16.msra.mxu0 0
        %1646 = vmatprep.subr.bf16.mxu0 0
        %1647 = vmatpush2.bf16.msra.mxu0 0
        %1648 = vmatprep.subr.bf16.mxu0 0
        %1649 = vmatpush2.bf16.msra.mxu0 0
        %1650 = vmatprep.subr.bf16.mxu0 0
        %1651 = vmatpush2.bf16.msra.mxu0 0
        %1652 = vmatprep.mubr.bf16.mxu0 0
        %1653 = vmatmul.mubr.bf16.gmra.mxu0 %v1618
        %v1654 = vpop.f32.mrf.mxu0
        %v1655 = vadd.f32 0.0, %v1654
        %v1656 = vpop.f32.mrf.mxu0
        %v1657 = vadd.f32 0.0, %v1656
        %v1658 = vpop.f32.mrf.mxu0
        %v1659 = vpop.f32.mrf.mxu0
        %1660 = vdwg.mxu0
        %v1661 = vld [vmem:[#allocation2] sm:$0xff]
        %v1662 = vlaneseq
        %v1663 = vshrl.u32 %v1662, 7
        %v1664 = vsub.s32 6, %v1663
        %v1665 = vrot.slane %v497, %v1664
        %v1666 = vlaneseq
        %v1667 = vshrl.u32 %v1666, 7
        %v1668 = vsub.s32 6, %v1667
        %v1669 = vrot.slane %v498, %v1668
        %v1670 = vmul.f32 %v1665, %v1655
        %v1671 = vmul.f32 %v1669, %v1657
        %v1674 = vcombine.low %v1670, %v1671
        %v1676 = vadd.f32 %v1661, %v1674
        %1677 = vst [vmem:[#allocation2] sm:$0xff] %v1676
        %s1678 = scalar_lea.vmem %s3, 56
        %v1679 = vld [vmem:[%s1678] sm:$0xf]
        %v1680 = vld [vmem:[%s1678 + $0x4] sm:$0xf]
        %v1681 = vld [vmem:[%s4] sm:$0xff]
        %v1682 = vld [vmem:[%s4 + $0x8] sm:$0xff]
        %1684 = vset.pattern.permute.xlu0 7
        %1685 = vperm.xlu0 %1684, %v1681
        %v1686 = vpop.permute.xlu0 %1685
        %1689 = vset.pattern.permute.xlu0 7
        %1690 = vperm.xlu0 %1689, %v1682
        %v1691 = vpop.permute.xlu0 %1690
        %v1695 = vunpack.c.l.b16 %v1679
        %v1696 = vunpack.c.l.b16 %v1680
        %v1697 = vpack.c.b16 %v1696, %v1695
        %v1699 = vsel %vm377, %v1697, 0
        %1701 = vmatprep.subr.bf16.mxu0 0
        %1702 = vmatpush1.bf16.msra.mxu0 0
        %1703 = vmatprep.subr.bf16.mxu0 0
        %1704 = vmatpush1.bf16.msra.mxu0 0
        %1705 = vmatprep.subr.bf16.mxu0 0
        %1706 = vmatpush1.bf16.msra.mxu0 0
        %1707 = vmatprep.subr.bf16.mxu0 0
        %1708 = vmatpush1.bf16.msra.mxu0 0
        %1709 = vmatprep.subr.bf16.mxu0 0
        %1710 = vmatpush1.bf16.msra.mxu0 0
        %1711 = vmatprep.subr.bf16.mxu0 0
        %1712 = vmatpush1.bf16.msra.mxu0 0
        %1713 = vmatprep.subr.bf16.mxu0 0
        %1714 = vmatpush1.bf16.msra.mxu0 0
        %1715 = vmatprep.subr.bf16.mxu0 %v530
        %1716 = vmatpush1.bf16.msra.mxu0 %v527
        %1717 = vmatprep.subr.bf16.mxu0 0
        %1718 = vmatpush2.bf16.msra.mxu0 0
        %1719 = vmatprep.subr.bf16.mxu0 0
        %1720 = vmatpush2.bf16.msra.mxu0 0
        %1721 = vmatprep.subr.bf16.mxu0 0
        %1722 = vmatpush2.bf16.msra.mxu0 0
        %1723 = vmatprep.subr.bf16.mxu0 0
        %1724 = vmatpush2.bf16.msra.mxu0 0
        %1725 = vmatprep.subr.bf16.mxu0 0
        %1726 = vmatpush2.bf16.msra.mxu0 0
        %1727 = vmatprep.subr.bf16.mxu0 0
        %1728 = vmatpush2.bf16.msra.mxu0 0
        %1729 = vmatprep.subr.bf16.mxu0 0
        %1730 = vmatpush2.bf16.msra.mxu0 0
        %1731 = vmatprep.subr.bf16.mxu0 0
        %1732 = vmatpush2.bf16.msra.mxu0 0
        %1733 = vmatprep.mubr.bf16.mxu0 0
        %1734 = vmatmul.mubr.bf16.gmra.mxu0 %v1699
        %v1735 = vpop.f32.mrf.mxu0
        %v1736 = vadd.f32 %v1686, %v1735
        %v1737 = vpop.f32.mrf.mxu0
        %v1738 = vadd.f32 %v1686, %v1737
        %v1739 = vpop.f32.mrf.mxu0
        %v1740 = vadd.f32 %v1691, %v1739
        %v1741 = vpop.f32.mrf.mxu0
        %v1742 = vadd.f32 %v1691, %v1741
        %1743 = vdwg.mxu0
        %v1744 = vmul.f32 %v1736, 0.5
        %v1745 = vmul.f32 %v1738, 0.5
        %v1746 = vmul.f32 %v1740, 0.5
        %v1747 = vmul.f32 %v1742, 0.5
        %v1748 = vmul.f32 %v1736, 0.044715
        %v1749 = vmul.f32 %v1738, 0.044715
        %v1750 = vmul.f32 %v1740, 0.044715
        %v1751 = vmul.f32 %v1742, 0.044715
        %v1752 = vmul.f32 %v1748, %v1736
        %v1753 = vmul.f32 %v1749, %v1738
        %v1754 = vmul.f32 %v1750, %v1740
        %v1755 = vmul.f32 %v1751, %v1742
        %v1756 = vmul.f32 %v1752, %v1736
        %v1757 = vmul.f32 %v1753, %v1738
        %v1758 = vmul.f32 %v1754, %v1740
        %v1759 = vmul.f32 %v1755, %v1742
        %v1760 = vadd.f32 %v1736, %v1756
        %v1761 = vadd.f32 %v1738, %v1757
        %v1762 = vadd.f32 %v1740, %v1758
        %v1763 = vadd.f32 %v1742, %v1759
        %v1764 = vmul.f32 %v1760, 0.7978846
        %v1765 = vmul.f32 %v1761, 0.7978846
        %v1766 = vmul.f32 %v1762, 0.7978846
        %v1767 = vmul.f32 %v1763, 0.7978846
        %v1768 = vtanh.pop %v1764
        %v1769 = vtanh.pop %v1765
        %v1770 = vtanh.pop %v1766
        %v1771 = vtanh.pop %v1767
        %v1772 = vadd.f32 %v1768, 1.0
        %v1773 = vadd.f32 %v1769, 1.0
        %v1774 = vadd.f32 %v1770, 1.0
        %v1775 = vadd.f32 %v1771, 1.0
        %v1776 = vmul.f32 %v1744, %v1772
        %v1777 = vmul.f32 %v1745, %v1773
        %v1778 = vmul.f32 %v1746, %v1774
        %v1779 = vmul.f32 %v1747, %v1775
        %s1780 = scalar_lea.vmem %s5, 14
        %v1781 = vld [vmem:[%s1780] sm:$0x3]
        %v1782 = vpack.c.bf16 %v1778, %v1776
        %v1783 = vpack.c.bf16 %v1779, %v1777
        %v1785 = vsel %vm614, %v1781, 0
        %1787 = vmatprep.subr.bf16.mxu0 0
        %1788 = vmatpush1.bf16.msra.mxu0 0
        %1789 = vmatprep.subr.bf16.mxu0 0
        %1790 = vmatpush1.bf16.msra.mxu0 0
        %1791 = vmatprep.subr.bf16.mxu0 0
        %1792 = vmatpush1.bf16.msra.mxu0 0
        %1793 = vmatprep.subr.bf16.mxu0 0
        %1794 = vmatpush1.bf16.msra.mxu0 0
        %1795 = vmatprep.subr.bf16.mxu0 0
        %1796 = vmatpush1.bf16.msra.mxu0 0
        %1797 = vmatprep.subr.bf16.mxu0 0
        %1798 = vmatpush1.bf16.msra.mxu0 0
        %1799 = vmatprep.subr.bf16.mxu0 0
        %1800 = vmatpush1.bf16.msra.mxu0 0
        %1801 = vmatprep.subr.bf16.mxu0 %v1783
        %1802 = vmatpush1.bf16.msra.mxu0 %v1782
        %1803 = vmatprep.subr.bf16.mxu0 0
        %1804 = vmatpush2.bf16.msra.mxu0 0
        %1805 = vmatprep.subr.bf16.mxu0 0
        %1806 = vmatpush2.bf16.msra.mxu0 0
        %1807 = vmatprep.subr.bf16.mxu0 0
        %1808 = vmatpush2.bf16.msra.mxu0 0
        %1809 = vmatprep.subr.bf16.mxu0 0
        %1810 = vmatpush2.bf16.msra.mxu0 0
        %1811 = vmatprep.subr.bf16.mxu0 0
        %1812 = vmatpush2.bf16.msra.mxu0 0
        %1813 = vmatprep.subr.bf16.mxu0 0
        %1814 = vmatpush2.bf16.msra.mxu0 0
        %1815 = vmatprep.subr.bf16.mxu0 0
        %1816 = vmatpush2.bf16.msra.mxu0 0
        %1817 = vmatprep.subr.bf16.mxu0 0
        %1818 = vmatpush2.bf16.msra.mxu0 0
        %1819 = vmatprep.mubr.bf16.mxu0 0
        %1820 = vmatmul.mubr.bf16.gmra.mxu0 %v1785
        %v1821 = vpop.f32.mrf.mxu0
        %v1822 = vadd.f32 0.0, %v1821
        %v1823 = vpop.f32.mrf.mxu0
        %v1824 = vadd.f32 0.0, %v1823
        %v1825 = vpop.f32.mrf.mxu0
        %v1826 = vpop.f32.mrf.mxu0
        %1827 = vdwg.mxu0
        %v1828 = vld [vmem:[#allocation2] sm:$0xff]
        %v1829 = vlaneseq
        %v1830 = vshrl.u32 %v1829, 7
        %v1831 = vsub.s32 7, %v1830
        %v1832 = vrot.slane %v497, %v1831
        %v1833 = vlaneseq
        %v1834 = vshrl.u32 %v1833, 7
        %v1835 = vsub.s32 7, %v1834
        %v1836 = vrot.slane %v498, %v1835
        %v1837 = vmul.f32 %v1832, %v1822
        %v1838 = vmul.f32 %v1836, %v1824
        %v1841 = vcombine.low %v1837, %v1838
        %v1843 = vadd.f32 %v1828, %v1841
        %1844 = vst [vmem:[#allocation2] sm:$0xff] %v1843
        %v1845 = vld [vmem:[#allocation2] sm:$0xff]
        %v1846 = vld [vmem:[%s6] sm:$0xf]
        %vm1847 = vcmask 64512
        %v1849 = vsel %vm1847, %v1846, 0
        %1851 = vmatprep.subr.mxu0 0.0
        %1852 = vmatpush1.msra.mxu0 0.0
        %1853 = vmatprep.subr.mxu0 0.0
        %1854 = vmatpush1.msra.mxu0 0.0
        %1855 = vmatprep.subr.mxu0 0.0
        %1856 = vmatpush1.msra.mxu0 0.0
        %1857 = vmatprep.subr.mxu0 0.0
        %1858 = vmatpush1.msra.mxu0 0.0
        %1859 = vmatprep.subr.mxu0 0.0
        %1860 = vmatpush1.msra.mxu0 0.0
        %1861 = vmatprep.subr.mxu0 0.0
        %1862 = vmatpush1.msra.mxu0 0.0
        %1863 = vmatprep.subr.mxu0 0.0
        %1864 = vmatpush1.msra.mxu0 0.0
        %1865 = vmatprep.subr.mxu0 0.0
        %1866 = vmatpush1.msra.mxu0 0.0
        %1867 = vmatprep.subr.mxu0 0.0
        %1868 = vmatpush1.msra.mxu0 0.0
        %1869 = vmatprep.subr.mxu0 0.0
        %1870 = vmatpush1.msra.mxu0 0.0
        %1871 = vmatprep.subr.mxu0 0.0
        %1872 = vmatpush1.msra.mxu0 0.0
        %1873 = vmatprep.subr.mxu0 0.0
        %1874 = vmatpush1.msra.mxu0 0.0
        %1875 = vmatprep.subr.mxu0 0.0
        %1876 = vmatpush1.msra.mxu0 0.0
        %1877 = vmatprep.subr.mxu0 0.0
        %1878 = vmatpush1.msra.mxu0 0.0
        %1879 = vmatprep.subr.mxu0 0.0
        %1880 = vmatpush1.msra.mxu0 0.0
        %1881 = vmatprep.subr.mxu0 %v498
        %1882 = vmatpush1.msra.mxu0 %v497
        %1883 = vmatprep.subr.mxu0 0.0
        %1884 = vmatpush2.msra.mxu0 0.0
        %1885 = vmatprep.subr.mxu0 0.0
        %1886 = vmatpush2.msra.mxu0 0.0
        %1887 = vmatprep.subr.mxu0 0.0
        %1888 = vmatpush2.msra.mxu0 0.0
        %1889 = vmatprep.subr.mxu0 0.0
        %1890 = vmatpush2.msra.mxu0 0.0
        %1891 = vmatprep.subr.mxu0 0.0
        %1892 = vmatpush2.msra.mxu0 0.0
        %1893 = vmatprep.subr.mxu0 0.0
        %1894 = vmatpush2.msra.mxu0 0.0
        %1895 = vmatprep.subr.mxu0 0.0
        %1896 = vmatpush2.msra.mxu0 0.0
        %1897 = vmatprep.subr.mxu0 0.0
        %1898 = vmatpush2.msra.mxu0 0.0
        %1899 = vmatprep.subr.mxu0 0.0
        %1900 = vmatpush2.msra.mxu0 0.0
        %1901 = vmatprep.subr.mxu0 0.0
        %1902 = vmatpush2.msra.mxu0 0.0
        %1903 = vmatprep.subr.mxu0 0.0
        %1904 = vmatpush2.msra.mxu0 0.0
        %1905 = vmatprep.subr.mxu0 0.0
        %1906 = vmatpush2.msra.mxu0 0.0
        %1907 = vmatprep.subr.mxu0 0.0
        %1908 = vmatpush2.msra.mxu0 0.0
        %1909 = vmatprep.subr.mxu0 0.0
        %1910 = vmatpush2.msra.mxu0 0.0
        %1911 = vmatprep.subr.mxu0 0.0
        %1912 = vmatpush2.msra.mxu0 0.0
        %1913 = vmatprep.subr.mxu0 0.0
        %1914 = vmatpush2.msra.mxu0 0.0
        %1915 = vmatprep.mubr.f32.mxu0 0.0
        %1916 = vmatmul.mubr.f32.gmra.mxu0 %v1849
        %v1917 = vpop.f32.mrf.mxu0
        %v1918 = vadd.f32 0.0, %v1917
        %v1919 = vpop.f32.mrf.mxu0
        %v1920 = vadd.f32 0.0, %v1919
        %1921 = vdwg.mxu0
        %v1924 = vcombine.low %v1918, %v1920
        %v1926 = vadd.f32 %v1845, %v1924
        %1927 = vst [vmem:[%s342] sm:$0xff] %v1926
        %1928 = vst [vmem:[%s349] sm:$0xff] %v497
        %1929 = vst [vmem:[%s349 + $0x8] sm:$0xff] %v498
        %s1930 = sand.u32 %s207, 1
        %s1931 = scalar_lea.sflag [#allocation4], %s1930
        %s1932 = sand.u32 %s207, 1
        %s1933 = smul.addr %s1932, 8
        %s1934 = scalar_lea.vmem [#allocation3], %s1933
        %s1935 = sand.u32 %s235, 1
        %s1936 = scalar_lea.sflag [#allocation6], %s1935
        %s1937 = sand.u32 %s235, 1
        %s1938 = smul.addr %s1937, 16
        %s1939 = scalar_lea.vmem [#allocation5], %s1938
        // Predicated region
        $region49: #{tpu_custom_call.1} parent=47 // pred_check
          %p1940 = pneg %p217
        $region50: #{tpu_custom_call.1} parent=47 // pred_check_branch
          %1942 = sbr.rel (%p1940) target = $region52
        $region51: #{tpu_custom_call.1} parent=47 // pred_region
          %s1943 = smul.u32 2, %s31
          %s1945 = ssub.s32 128, 128
          %1946 = vsyncadd %s1931, %s1945
          %s1947 = smul.addr %s30, 2
          %s1948 = sadd.s32 %s1943, %s1947
          %s1949 = smul.addr %s1948, 64
          %s1950 = scalar_lea.hbm %s7, %s1949
          %s1952 = sshll.u32 %s1934, 4
          %s1953 = int_to_ptr.vmem [resolvable:$true] %s1952
          %1955 = dma.vmem_to_hbm [thread:$0]  %s1953, 128, %s1950, %s1931
        $region52: #{tpu_custom_call.1} parent=47 // pred_fallthru
          _
        // Predicated region
        $region53: #{tpu_custom_call.1} parent=47 // pred_check
          %p1956 = pneg %p245
        $region54: #{tpu_custom_call.1} parent=47 // pred_check_branch
          %1958 = sbr.rel (%p1956) target = $region56
        $region55: #{tpu_custom_call.1} parent=47 // pred_region
          %s1959 = smul.u32 2, %s31
          %s1961 = ssub.s32 256, 256
          %1962 = vsyncadd %s1936, %s1961
          %s1963 = smul.addr %s30, 2
          %s1964 = sadd.s32 %s1959, %s1963
          %s1965 = smul.addr %s1964, 128
          %s1966 = scalar_lea.hbm %s8, %s1965
          %s1968 = sshll.u32 %s1939, 4
          %s1969 = int_to_ptr.vmem [resolvable:$true] %s1968
          %1971 = dma.vmem_to_hbm [thread:$0]  %s1969, 256, %s1966, %s1936
        $region56: #{tpu_custom_call.1} parent=47 // pred_fallthru
          _
      $region48: #{tpu_custom_call.1} parent=5 // pred_fallthru
        _
      %p1972 = scmp.le.s32.totalorder 2, %s21
      // Predicated region
      $region57: #{tpu_custom_call.1} parent=5 // pred_check
        %p1973 = pneg %p1972
      $region58: #{tpu_custom_call.1} parent=5 // pred_check_branch
        %1975 = sbr.rel (%p1973) target = $region60
      $region59: #{tpu_custom_call.1} parent=5 // pred_region
        %s1976 = ssub.s32 %s21, 2
        // Predicated region
        $region61: #{tpu_custom_call.1} parent=59 // pred_check
          %p1977 = pneg %p223
        $region62: #{tpu_custom_call.1} parent=59 // pred_check_branch
          %1979 = sbr.rel (%p1977) target = $region64
        $region63: #{tpu_custom_call.1} parent=59 // pred_region
          %s1980 = sand.u32 %s208, 1
          %s1981 = scalar_lea.sflag [#allocation4], %s1980
          %s1982 = sand.u32 %s208, 1
          %s1983 = smul.addr %s1982, 8
          %s1984 = scalar_lea.vmem [#allocation3], %s1983
          %1985 = dma.done %s1981, 128
        $region64: #{tpu_custom_call.1} parent=59 // pred_fallthru
          _
        // Predicated region
        $region65: #{tpu_custom_call.1} parent=59 // pred_check
          %p1986 = pneg %p251
        $region66: #{tpu_custom_call.1} parent=59 // pred_check_branch
          %1988 = sbr.rel (%p1986) target = $region68
        $region67: #{tpu_custom_call.1} parent=59 // pred_region
          %s1989 = sand.u32 %s236, 1
          %s1990 = scalar_lea.sflag [#allocation6], %s1989
          %s1991 = sand.u32 %s236, 1
          %s1992 = smul.addr %s1991, 16
          %s1993 = scalar_lea.vmem [#allocation5], %s1992
          %1994 = dma.done %s1990, 256
        $region68: #{tpu_custom_call.1} parent=59 // pred_fallthru
          _
      $region60: #{tpu_custom_call.1} parent=5 // pred_fallthru
        _
    $region6: #{tpu_custom_call.1} parent=1 // loop_footer
      %s25 = sadd.s32 1, %s21
    $region7: #{tpu_custom_call.1} parent=1 // loop_footer_branch
      %20 = sbr.rel target = $region3
    $region8: #{tpu_custom_call.1} parent=1 // loop_exit
      _
    %1995 = vsyncpa [#allocation4], 1
    %s1996 = scalar_lea.sflag [#allocation4], 1
    %1997 = vsyncpa %s1996, 1
    %1998 = vsyncpa [#allocation6], 1
    %s1999 = scalar_lea.sflag [#allocation6], 1
    %2000 = vsyncpa %s1999, 1

</llo_original>
